<compile_context>
chip_gen: v7x
topology: tpu7x:2x2x1
jax: 0.10.0
libtpu: 0.0.40
codegen_flags: <defaults>
</compile_context>

<pallas_src>
import functools

import numpy as np

import jax
import jax.numpy as jnp
from jax.experimental import pallas as pl
from jax.experimental.pallas import tpu as pltpu


# ---------------------------------------------------------------------------
# Parameter preparation (one-time, init-style re-layout; NOT per forward call)
# ---------------------------------------------------------------------------
def prepare_resblock_params(torch_params):
    """Re-lay out PyTorch-convention parameters once, at init time.

    conv weights (Cout, Cin, 3, 3) -> (9, Cin, Cout): one MXU-ready (Cin, Cout)
    matrix per tap.  FC weights (out, in) -> (in, out).  BN stats and FC biases
    become (1, N) rows.  Doing this once here removes the per-call `weight.T`
    HBM round trip flagged in the review.
    """
    p = {}
    for name in ("conv1_w", "conv2_w"):
        w = torch_params[name]                       # (Cout, Cin, 3, 3)
        cout, cin = w.shape[0], w.shape[1]
        p[name] = jnp.transpose(w, (2, 3, 1, 0)).reshape(9, cin, cout)
    for name in ("bn1_mean", "bn1_var", "bn2_mean", "bn2_var"):
        p[name] = torch_params[name].reshape(1, -1)
    if "ext_w" in torch_params:
        p["ext_w"] = jnp.transpose(torch_params["ext_w"])   # (C, se)
        p["ext_b"] = torch_params["ext_b"].reshape(1, -1)   # (1, se)
        p["sq_w"] = jnp.transpose(torch_params["sq_w"])     # (se, 2C)
        p["sq_b"] = torch_params["sq_b"].reshape(1, -1)     # (1, 2C)
    return p


@functools.lru_cache(maxsize=None)
def _shift_operators(h, w):
    """(9, HW, HW) operators: S_t @ x gathers the (dy, dx) spatial neighbour of
    every pixel (row-major flattened), with zero rows where the 3x3 window
    falls outside the image (i.e. the conv's zero padding)."""
    hw = h * w
    s = np.zeros((9, hw, hw), np.float32)
    for t in range(9):
        dy, dx = t // 3 - 1, t % 3 - 1
        for i in range(h):
            for j in range(w):
                ii, jj = i + dy, j + dx
                if 0 <= ii < h and 0 <= jj < w:
                    s[t, i * w + j, ii * w + jj] = 1.0
    return jnp.asarray(s)


# ---------------------------------------------------------------------------
# Kernel: one full ResBlock for ONE image (grid iterates over the batch)
# ---------------------------------------------------------------------------
def _resblock_kernel(*refs, eps, with_se):
    if with_se:
        (x_ref, s_ref, w1_ref, m1_ref, v1_ref, w2_ref, m2_ref, v2_ref,
         wext_ref, bext_ref, wsq_ref, bsq_ref, o_ref) = refs
    else:
        (x_ref, s_ref, w1_ref, m1_ref, v1_ref,
         w2_ref, m2_ref, v2_ref, o_ref) = refs

    x = x_ref[...]                      # (HW, C) f32, one image, channels on lanes
    hw, c = x.shape

    def conv3x3_bn(inp, w_ref, m_ref, v_ref, relu):
        # 3x3 "same" conv as 9 MXU matmuls:  acc = sum_t (S_t @ inp) @ W_t.
        acc = jnp.zeros((hw, c), jnp.float32)
        for t in range(9):
            if t == 4:                  # centre tap: identity shift
                shifted = inp
            else:
                shifted = jnp.dot(s_ref[t], inp,
                                  preferred_element_type=jnp.float32)
            acc = acc + jnp.dot(shifted, w_ref[t],
                                preferred_element_type=jnp.float32)
        # Inference BatchNorm (affine=False): (y - mean) * rsqrt(var + eps).
        y = (acc - m_ref[...]) * jax.lax.rsqrt(v_ref[...] + eps)
        return jnp.maximum(y, 0.0) if relu else y

    out = conv3x3_bn(x, w1_ref, m1_ref, v1_ref, relu=True)
    out = conv3x3_bn(out, w2_ref, m2_ref, v2_ref, relu=False)

    if with_se:
        # Squeeze-and-excite, entirely in VMEM.
        pooled = jnp.mean(out, axis=0, keepdims=True)                    # (1, C)
        e = jnp.dot(pooled, wext_ref[...],
                    preferred_element_type=jnp.float32) + bext_ref[...]  # (1, se)
        e = jnp.maximum(e, 0.0)
        sq = jnp.dot(e, wsq_ref[...],
                     preferred_element_type=jnp.float32) + bsq_ref[...]  # (1, 2C)
        gammas = sq[:, :c]
        betas = sq[:, c:]
        gate = 1.0 / (1.0 + jnp.exp(-gammas))                            # sigmoid
        out = gate * out + betas

    out = out + x                       # residual
    o_ref[...] = jnp.maximum(out, 0.0).astype(o_ref.dtype)


# ---------------------------------------------------------------------------
# Wrapper
# ---------------------------------------------------------------------------
def res_block_forward(x_nchw, params, *, eps=1e-5):
    """Fused ResBlock forward.  x_nchw: (B, C, H, W) f32 (PyTorch layout)."""
    B, C, H, W = x_nchw.shape
    HW = H * W
    with_se = "ext_w" in params

    # Activation layout glue: NCHW -> (B, HW, C) so channels sit on the lane
    # axis.  In a full network the activations would stay in this layout
    # between blocks; only the weights are (re)laid out, once, at init.
    x = jnp.transpose(x_nchw, (0, 2, 3, 1)).reshape(B, HW, C)
    shift_ops = _shift_operators(H, W)                    # (9, HW, HW)

    kernel = functools.partial(_resblock_kernel, eps=eps, with_se=with_se)

    args = [x, shift_ops,
            params["conv1_w"], params["bn1_mean"], params["bn1_var"],
            params["conv2_w"], params["bn2_mean"], params["bn2_var"]]
    in_specs = [
        pl.BlockSpec((None, HW, C), lambda b: (b, 0, 0)),   # x: one image per step
        pl.BlockSpec((9, HW, HW), lambda b: (0, 0, 0)),     # shift operators (resident)
        pl.BlockSpec((9, C, C), lambda b: (0, 0, 0)),       # conv1 taps (resident)
        pl.BlockSpec((1, C), lambda b: (0, 0)),             # bn1 mean
        pl.BlockSpec((1, C), lambda b: (0, 0)),             # bn1 var
        pl.BlockSpec((9, C, C), lambda b: (0, 0, 0)),       # conv2 taps (resident)
        pl.BlockSpec((1, C), lambda b: (0, 0)),             # bn2 mean
        pl.BlockSpec((1, C), lambda b: (0, 0)),             # bn2 var
    ]

    se_flops = 0
    weight_bytes = 4 * (9 * HW * HW + 2 * 9 * C * C + 4 * C)
    if with_se:
        se_size = params["ext_w"].shape[1]
        args += [params["ext_w"], params["ext_b"], params["sq_w"], params["sq_b"]]
        in_specs += [
            pl.BlockSpec((C, se_size), lambda b: (0, 0)),     # extend weight (C, se)
            pl.BlockSpec((1, se_size), lambda b: (0, 0)),     # extend bias
            pl.BlockSpec((se_size, 2 * C), lambda b: (0, 0)), # squeeze weight (se, 2C)
            pl.BlockSpec((1, 2 * C), lambda b: (0, 0)),       # squeeze bias
        ]
        se_flops = 2 * (C * se_size + se_size * 2 * C)
        weight_bytes += 4 * (C * se_size + se_size + se_size * 2 * C + 2 * C)

    conv_flops = 2 * 2 * 9 * HW * C * (C + HW)
    cost = pl.CostEstimate(
        flops=int(B * (conv_flops + se_flops)),
        transcendentals=int(B * 4 * C),
        bytes_accessed=int(4 * 2 * B * HW * C + weight_bytes),
    )

    out = pl.pallas_call(
        kernel,
        out_shape=jax.ShapeDtypeStruct((B, HW, C), jnp.float32),
        grid_spec=pltpu.PrefetchScalarGridSpec(
            num_scalar_prefetch=0,
            grid=(B,),                                  # pipelined over the batch
            in_specs=in_specs,
            out_specs=pl.BlockSpec((None, HW, C), lambda b: (b, 0, 0)),
        ),
        compiler_params=pltpu.CompilerParams(
            # Batch images are independent -> shard the grid across TensorCores
            # (v7x megacore); weights/shift-ops have constant index_maps so they
            # are DMA'd once and stay resident.
            dimension_semantics=("parallel",),
        ),
        cost_estimate=cost,
    )(*args)

    return jnp.transpose(out.reshape(B, H, W, C), (0, 3, 1, 2))


# ---------------------------------------------------------------------------
# Pure-JAX reference (PyTorch semantics, inference-mode BN)
# ---------------------------------------------------------------------------
def _reference_resblock(x, torch_params, *, eps=1e-5):
    hp = jax.lax.Precision.HIGHEST
    p = torch_params

    def conv_bn(h, w, mean, var, relu):
        y = jax.lax.conv_general_dilated(
            h, w, window_strides=(1, 1), padding="SAME",
            dimension_numbers=("NCHW", "OIHW", "NCHW"), precision=hp)
        y = (y - mean[None, :, None, None]) \
            * jax.lax.rsqrt(var + eps)[None, :, None, None]
        return jnp.maximum(y, 0.0) if relu else y

    out = conv_bn(x, p["conv1_w"], p["bn1_mean"], p["bn1_var"], True)
    out = conv_bn(out, p["conv2_w"], p["bn2_mean"], p["bn2_var"], False)
    if "ext_w" in p:
        c = out.shape[1]
        se = jnp.mean(out, axis=(2, 3))                                    # (B, C)
        e = jnp.maximum(jnp.dot(se, p["ext_w"].T, precision=hp) + p["ext_b"], 0.0)
        sq = jnp.dot(e, p["sq_w"].T, precision=hp) + p["sq_b"]
        gammas, betas = sq[:, :c], sq[:, c:]
        out = jax.nn.sigmoid(gammas)[:, :, None, None] * out \
            + betas[:, :, None, None]
    out = out + x
    return jnp.maximum(out, 0.0)


# ---------------------------------------------------------------------------
if __name__ == "__main__":
    key = jax.random.PRNGKey(0)
    ks = jax.random.split(key, 12)

    B, C, H, W, SE_SIZE = 2, 128, 8, 8, 32   # small, lane-dense (C = 128)

    x = jax.random.normal(ks[0], (B, C, H, W), jnp.float32)

    kaiming = (2.0 / (9 * C)) ** 0.5          # kaiming_normal_(fan_out, relu)
    b1 = 1.0 / (C ** 0.5)
    b2 = 1.0 / (SE_SIZE ** 0.5)
    torch_params = dict(
        conv1_w=kaiming * jax.random.normal(ks[1], (C, C, 3, 3), jnp.float32),
        bn1_mean=0.1 * jax.random.normal(ks[2], (C,), jnp.float32),
        bn1_var=jax.random.uniform(ks[3], (C,), jnp.float32, minval=0.5, maxval=1.5),
        conv2_w=kaiming * jax.random.normal(ks[4], (C, C, 3, 3), jnp.float32),
        bn2_mean=0.1 * jax.random.normal(ks[5], (C,), jnp.float32),
        bn2_var=jax.random.uniform(ks[6], (C,), jnp.float32, minval=0.5, maxval=1.5),
        ext_w=jax.random.uniform(ks[7], (SE_SIZE, C), jnp.float32, minval=-b1, maxval=b1),
        ext_b=jax.random.uniform(ks[8], (SE_SIZE,), jnp.float32, minval=-b1, maxval=b1),
        sq_w=jax.random.uniform(ks[9], (2 * C, SE_SIZE), jnp.float32, minval=-b2, maxval=b2),
        sq_b=jax.random.uniform(ks[10], (2 * C,), jnp.float32, minval=-b2, maxval=b2),
    )

    # --- full ResBlock with SE ---
    prepped = prepare_resblock_params(torch_params)       # one-time init re-layout
    out = jax.block_until_ready(res_block_forward(x, prepped))
    ref = _reference_resblock(x, torch_params)
    assert out.shape == x.shape
    assert jnp.allclose(out, ref, atol=3e-2, rtol=3e-2), \
        float(jnp.max(jnp.abs(out - ref)))

    # --- plain ResBlock (se_size=None path) ---
    plain_tp = {k: torch_params[k] for k in
                ("conv1_w", "bn1_mean", "bn1_var", "conv2_w", "bn2_mean", "bn2_var")}
    plain_prepped = prepare_resblock_params(plain_tp)
    out2 = jax.block_until_ready(res_block_forward(x, plain_prepped))
    ref2 = _reference_resblock(x, plain_tp)
    assert jnp.allclose(out2, ref2, atol=3e-2, rtol=3e-2), \
        float(jnp.max(jnp.abs(out2 - ref2)))

    print("KERNEL_OK")
</pallas_src>

<mosaic_0001>
module attributes {stable_mosaic.version = 11 : i64} {
  func.func @_resblock_kernel(%arg0: i32, %arg1: memref<1x64x128xf32, #tpu.memory_space<vmem>>, %arg2: memref<9x64x64xf32, #tpu.memory_space<vmem>>, %arg3: memref<9x128x128xf32, #tpu.memory_space<vmem>>, %arg4: memref<1x128xf32, #tpu.memory_space<vmem>>, %arg5: memref<1x128xf32, #tpu.memory_space<vmem>>, %arg6: memref<9x128x128xf32, #tpu.memory_space<vmem>>, %arg7: memref<1x128xf32, #tpu.memory_space<vmem>>, %arg8: memref<1x128xf32, #tpu.memory_space<vmem>>, %arg9: memref<128x32xf32, #tpu.memory_space<vmem>>, %arg10: memref<1x32xf32, #tpu.memory_space<vmem>>, %arg11: memref<32x256xf32, #tpu.memory_space<vmem>>, %arg12: memref<1x256xf32, #tpu.memory_space<vmem>>, %arg13: memref<1x64x128xf32, #tpu.memory_space<vmem>>) attributes {dimension_semantics = [#tpu.dimension_semantics<parallel>], iteration_bounds = array<i64: 2>, scalar_prefetch = 0 : i64, scratch_operands = 0 : i64, tpu.core_type = #tpu.core_type<tc>, window_params = [{transform_indices = @transform_0, window_bounds = array<i64: 1, 64, 128>}, {pipeline_mode = #tpu.pipeline_mode<synchronous>, transform_indices = @transform_1, window_bounds = array<i64: 9, 64, 64>}, {pipeline_mode = #tpu.pipeline_mode<synchronous>, transform_indices = @transform_2, window_bounds = array<i64: 9, 128, 128>}, {pipeline_mode = #tpu.pipeline_mode<synchronous>, transform_indices = @transform_3, window_bounds = array<i64: 1, 128>}, {pipeline_mode = #tpu.pipeline_mode<synchronous>, transform_indices = @transform_4, window_bounds = array<i64: 1, 128>}, {pipeline_mode = #tpu.pipeline_mode<synchronous>, transform_indices = @transform_5, window_bounds = array<i64: 9, 128, 128>}, {pipeline_mode = #tpu.pipeline_mode<synchronous>, transform_indices = @transform_6, window_bounds = array<i64: 1, 128>}, {pipeline_mode = #tpu.pipeline_mode<synchronous>, transform_indices = @transform_7, window_bounds = array<i64: 1, 128>}, {pipeline_mode = #tpu.pipeline_mode<synchronous>, transform_indices = @transform_8, window_bounds = array<i64: 128, 32>}, {pipeline_mode = #tpu.pipeline_mode<synchronous>, transform_indices = @transform_9, window_bounds = array<i64: 1, 32>}, {pipeline_mode = #tpu.pipeline_mode<synchronous>, transform_indices = @transform_10, window_bounds = array<i64: 32, 256>}, {pipeline_mode = #tpu.pipeline_mode<synchronous>, transform_indices = @transform_11, window_bounds = array<i64: 1, 256>}, {transform_indices = @transform_12, window_bounds = array<i64: 1, 64, 128>}]} {
    %c0 = arith.constant 0 : index
    %c0_0 = arith.constant 0 : index
    %c0_1 = arith.constant 0 : index
    %0 = vector.load %arg1[%c0, %c0_0, %c0_1] : memref<1x64x128xf32, #tpu.memory_space<vmem>>, vector<1x64x128xf32>
    %1 = vector.shape_cast %0 : vector<1x64x128xf32> to vector<64x128xf32>
    %cst = arith.constant 0.000000e+00 : f32
    %2 = vector.broadcast %cst : f32 to vector<64x128xf32>
    %c0_2 = arith.constant 0 : index
    %c0_3 = arith.constant 0 : index
    %c0_4 = arith.constant 0 : index
    %3 = vector.load %arg2[%c0_2, %c0_3, %c0_4] : memref<9x64x64xf32, #tpu.memory_space<vmem>>, vector<1x64x64xf32>
    %4 = vector.shape_cast %3 : vector<1x64x64xf32> to vector<64x64xf32>
    %cst_5 = arith.constant dense<0.000000e+00> : vector<64x128xf32>
    %5 = tpu.matmul %4, %1, %cst_5 {dimension_numbers = #tpu.dot_dimension_numbers<[1], [0], [0], [1], [0, 0, 1, 1], [], []>} : vector<64x64xf32>, vector<64x128xf32>, vector<64x128xf32> -> vector<64x128xf32>
    %c0_6 = arith.constant 0 : index
    %c0_7 = arith.constant 0 : index
    %c0_8 = arith.constant 0 : index
    %6 = vector.load %arg3[%c0_6, %c0_7, %c0_8] : memref<9x128x128xf32, #tpu.memory_space<vmem>>, vector<1x128x128xf32>
    %7 = vector.shape_cast %6 : vector<1x128x128xf32> to vector<128x128xf32>
    %cst_9 = arith.constant dense<0.000000e+00> : vector<64x128xf32>
    %8 = tpu.matmul %5, %7, %cst_9 {dimension_numbers = #tpu.dot_dimension_numbers<[1], [0], [0], [1], [0, 0, 1, 1], [], []>} : vector<64x128xf32>, vector<128x128xf32>, vector<64x128xf32> -> vector<64x128xf32>
    %9 = arith.addf %2, %8 : vector<64x128xf32>
    %c1 = arith.constant 1 : index
    %c0_10 = arith.constant 0 : index
    %c0_11 = arith.constant 0 : index
    %10 = vector.load %arg2[%c1, %c0_10, %c0_11] : memref<9x64x64xf32, #tpu.memory_space<vmem>>, vector<1x64x64xf32>
    %11 = vector.shape_cast %10 : vector<1x64x64xf32> to vector<64x64xf32>
    %cst_12 = arith.constant dense<0.000000e+00> : vector<64x128xf32>
    %12 = tpu.matmul %11, %1, %cst_12 {dimension_numbers = #tpu.dot_dimension_numbers<[1], [0], [0], [1], [0, 0, 1, 1], [], []>} : vector<64x64xf32>, vector<64x128xf32>, vector<64x128xf32> -> vector<64x128xf32>
    %c1_13 = arith.constant 1 : index
    %c0_14 = arith.constant 0 : index
    %c0_15 = arith.constant 0 : index
    %13 = vector.load %arg3[%c1_13, %c0_14, %c0_15] : memref<9x128x128xf32, #tpu.memory_space<vmem>>, vector<1x128x128xf32>
    %14 = vector.shape_cast %13 : vector<1x128x128xf32> to vector<128x128xf32>
    %cst_16 = arith.constant dense<0.000000e+00> : vector<64x128xf32>
    %15 = tpu.matmul %12, %14, %cst_16 {dimension_numbers = #tpu.dot_dimension_numbers<[1], [0], [0], [1], [0, 0, 1, 1], [], []>} : vector<64x128xf32>, vector<128x128xf32>, vector<64x128xf32> -> vector<64x128xf32>
    %16 = arith.addf %9, %15 : vector<64x128xf32>
    %c2 = arith.constant 2 : index
    %c0_17 = arith.constant 0 : index
    %c0_18 = arith.constant 0 : index
    %17 = vector.load %arg2[%c2, %c0_17, %c0_18] : memref<9x64x64xf32, #tpu.memory_space<vmem>>, vector<1x64x64xf32>
    %18 = vector.shape_cast %17 : vector<1x64x64xf32> to vector<64x64xf32>
    %cst_19 = arith.constant dense<0.000000e+00> : vector<64x128xf32>
    %19 = tpu.matmul %18, %1, %cst_19 {dimension_numbers = #tpu.dot_dimension_numbers<[1], [0], [0], [1], [0, 0, 1, 1], [], []>} : vector<64x64xf32>, vector<64x128xf32>, vector<64x128xf32> -> vector<64x128xf32>
    %c2_20 = arith.constant 2 : index
    %c0_21 = arith.constant 0 : index
    %c0_22 = arith.constant 0 : index
    %20 = vector.load %arg3[%c2_20, %c0_21, %c0_22] : memref<9x128x128xf32, #tpu.memory_space<vmem>>, vector<1x128x128xf32>
    %21 = vector.shape_cast %20 : vector<1x128x128xf32> to vector<128x128xf32>
    %cst_23 = arith.constant dense<0.000000e+00> : vector<64x128xf32>
    %22 = tpu.matmul %19, %21, %cst_23 {dimension_numbers = #tpu.dot_dimension_numbers<[1], [0], [0], [1], [0, 0, 1, 1], [], []>} : vector<64x128xf32>, vector<128x128xf32>, vector<64x128xf32> -> vector<64x128xf32>
    %23 = arith.addf %16, %22 : vector<64x128xf32>
    %c3 = arith.constant 3 : index
    %c0_24 = arith.constant 0 : index
    %c0_25 = arith.constant 0 : index
    %24 = vector.load %arg2[%c3, %c0_24, %c0_25] : memref<9x64x64xf32, #tpu.memory_space<vmem>>, vector<1x64x64xf32>
    %25 = vector.shape_cast %24 : vector<1x64x64xf32> to vector<64x64xf32>
    %cst_26 = arith.constant dense<0.000000e+00> : vector<64x128xf32>
    %26 = tpu.matmul %25, %1, %cst_26 {dimension_numbers = #tpu.dot_dimension_numbers<[1], [0], [0], [1], [0, 0, 1, 1], [], []>} : vector<64x64xf32>, vector<64x128xf32>, vector<64x128xf32> -> vector<64x128xf32>
    %c3_27 = arith.constant 3 : index
    %c0_28 = arith.constant 0 : index
    %c0_29 = arith.constant 0 : index
    %27 = vector.load %arg3[%c3_27, %c0_28, %c0_29] : memref<9x128x128xf32, #tpu.memory_space<vmem>>, vector<1x128x128xf32>
    %28 = vector.shape_cast %27 : vector<1x128x128xf32> to vector<128x128xf32>
    %cst_30 = arith.constant dense<0.000000e+00> : vector<64x128xf32>
    %29 = tpu.matmul %26, %28, %cst_30 {dimension_numbers = #tpu.dot_dimension_numbers<[1], [0], [0], [1], [0, 0, 1, 1], [], []>} : vector<64x128xf32>, vector<128x128xf32>, vector<64x128xf32> -> vector<64x128xf32>
    %30 = arith.addf %23, %29 : vector<64x128xf32>
    %c4 = arith.constant 4 : index
    %c0_31 = arith.constant 0 : index
    %c0_32 = arith.constant 0 : index
    %31 = vector.load %arg3[%c4, %c0_31, %c0_32] : memref<9x128x128xf32, #tpu.memory_space<vmem>>, vector<1x128x128xf32>
    %32 = vector.shape_cast %31 : vector<1x128x128xf32> to vector<128x128xf32>
    %cst_33 = arith.constant dense<0.000000e+00> : vector<64x128xf32>
    %33 = tpu.matmul %1, %32, %cst_33 {dimension_numbers = #tpu.dot_dimension_numbers<[1], [0], [0], [1], [0, 0, 1, 1], [], []>} : vector<64x128xf32>, vector<128x128xf32>, vector<64x128xf32> -> vector<64x128xf32>
    %34 = arith.addf %30, %33 : vector<64x128xf32>
    %c5 = arith.constant 5 : index
    %c0_34 = arith.constant 0 : index
    %c0_35 = arith.constant 0 : index
    %35 = vector.load %arg2[%c5, %c0_34, %c0_35] : memref<9x64x64xf32, #tpu.memory_space<vmem>>, vector<1x64x64xf32>
    %36 = vector.shape_cast %35 : vector<1x64x64xf32> to vector<64x64xf32>
    %cst_36 = arith.constant dense<0.000000e+00> : vector<64x128xf32>
    %37 = tpu.matmul %36, %1, %cst_36 {dimension_numbers = #tpu.dot_dimension_numbers<[1], [0], [0], [1], [0, 0, 1, 1], [], []>} : vector<64x64xf32>, vector<64x128xf32>, vector<64x128xf32> -> vector<64x128xf32>
    %c5_37 = arith.constant 5 : index
    %c0_38 = arith.constant 0 : index
    %c0_39 = arith.constant 0 : index
    %38 = vector.load %arg3[%c5_37, %c0_38, %c0_39] : memref<9x128x128xf32, #tpu.memory_space<vmem>>, vector<1x128x128xf32>
    %39 = vector.shape_cast %38 : vector<1x128x128xf32> to vector<128x128xf32>
    %cst_40 = arith.constant dense<0.000000e+00> : vector<64x128xf32>
    %40 = tpu.matmul %37, %39, %cst_40 {dimension_numbers = #tpu.dot_dimension_numbers<[1], [0], [0], [1], [0, 0, 1, 1], [], []>} : vector<64x128xf32>, vector<128x128xf32>, vector<64x128xf32> -> vector<64x128xf32>
    %41 = arith.addf %34, %40 : vector<64x128xf32>
    %c6 = arith.constant 6 : index
    %c0_41 = arith.constant 0 : index
    %c0_42 = arith.constant 0 : index
    %42 = vector.load %arg2[%c6, %c0_41, %c0_42] : memref<9x64x64xf32, #tpu.memory_space<vmem>>, vector<1x64x64xf32>
    %43 = vector.shape_cast %42 : vector<1x64x64xf32> to vector<64x64xf32>
    %cst_43 = arith.constant dense<0.000000e+00> : vector<64x128xf32>
    %44 = tpu.matmul %43, %1, %cst_43 {dimension_numbers = #tpu.dot_dimension_numbers<[1], [0], [0], [1], [0, 0, 1, 1], [], []>} : vector<64x64xf32>, vector<64x128xf32>, vector<64x128xf32> -> vector<64x128xf32>
    %c6_44 = arith.constant 6 : index
    %c0_45 = arith.constant 0 : index
    %c0_46 = arith.constant 0 : index
    %45 = vector.load %arg3[%c6_44, %c0_45, %c0_46] : memref<9x128x128xf32, #tpu.memory_space<vmem>>, vector<1x128x128xf32>
    %46 = vector.shape_cast %45 : vector<1x128x128xf32> to vector<128x128xf32>
    %cst_47 = arith.constant dense<0.000000e+00> : vector<64x128xf32>
    %47 = tpu.matmul %44, %46, %cst_47 {dimension_numbers = #tpu.dot_dimension_numbers<[1], [0], [0], [1], [0, 0, 1, 1], [], []>} : vector<64x128xf32>, vector<128x128xf32>, vector<64x128xf32> -> vector<64x128xf32>
    %48 = arith.addf %41, %47 : vector<64x128xf32>
    %c7 = arith.constant 7 : index
    %c0_48 = arith.constant 0 : index
    %c0_49 = arith.constant 0 : index
    %49 = vector.load %arg2[%c7, %c0_48, %c0_49] : memref<9x64x64xf32, #tpu.memory_space<vmem>>, vector<1x64x64xf32>
    %50 = vector.shape_cast %49 : vector<1x64x64xf32> to vector<64x64xf32>
    %cst_50 = arith.constant dense<0.000000e+00> : vector<64x128xf32>
    %51 = tpu.matmul %50, %1, %cst_50 {dimension_numbers = #tpu.dot_dimension_numbers<[1], [0], [0], [1], [0, 0, 1, 1], [], []>} : vector<64x64xf32>, vector<64x128xf32>, vector<64x128xf32> -> vector<64x128xf32>
    %c7_51 = arith.constant 7 : index
    %c0_52 = arith.constant 0 : index
    %c0_53 = arith.constant 0 : index
    %52 = vector.load %arg3[%c7_51, %c0_52, %c0_53] : memref<9x128x128xf32, #tpu.memory_space<vmem>>, vector<1x128x128xf32>
    %53 = vector.shape_cast %52 : vector<1x128x128xf32> to vector<128x128xf32>
    %cst_54 = arith.constant dense<0.000000e+00> : vector<64x128xf32>
    %54 = tpu.matmul %51, %53, %cst_54 {dimension_numbers = #tpu.dot_dimension_numbers<[1], [0], [0], [1], [0, 0, 1, 1], [], []>} : vector<64x128xf32>, vector<128x128xf32>, vector<64x128xf32> -> vector<64x128xf32>
    %55 = arith.addf %48, %54 : vector<64x128xf32>
    %c8 = arith.constant 8 : index
    %c0_55 = arith.constant 0 : index
    %c0_56 = arith.constant 0 : index
    %56 = vector.load %arg2[%c8, %c0_55, %c0_56] : memref<9x64x64xf32, #tpu.memory_space<vmem>>, vector<1x64x64xf32>
    %57 = vector.shape_cast %56 : vector<1x64x64xf32> to vector<64x64xf32>
    %cst_57 = arith.constant dense<0.000000e+00> : vector<64x128xf32>
    %58 = tpu.matmul %57, %1, %cst_57 {dimension_numbers = #tpu.dot_dimension_numbers<[1], [0], [0], [1], [0, 0, 1, 1], [], []>} : vector<64x64xf32>, vector<64x128xf32>, vector<64x128xf32> -> vector<64x128xf32>
    %c8_58 = arith.constant 8 : index
    %c0_59 = arith.constant 0 : index
    %c0_60 = arith.constant 0 : index
    %59 = vector.load %arg3[%c8_58, %c0_59, %c0_60] : memref<9x128x128xf32, #tpu.memory_space<vmem>>, vector<1x128x128xf32>
    %60 = vector.shape_cast %59 : vector<1x128x128xf32> to vector<128x128xf32>
    %cst_61 = arith.constant dense<0.000000e+00> : vector<64x128xf32>
    %61 = tpu.matmul %58, %60, %cst_61 {dimension_numbers = #tpu.dot_dimension_numbers<[1], [0], [0], [1], [0, 0, 1, 1], [], []>} : vector<64x128xf32>, vector<128x128xf32>, vector<64x128xf32> -> vector<64x128xf32>
    %62 = arith.addf %55, %61 : vector<64x128xf32>
    %c0_62 = arith.constant 0 : index
    %c0_63 = arith.constant 0 : index
    %63 = vector.load %arg4[%c0_62, %c0_63] : memref<1x128xf32, #tpu.memory_space<vmem>>, vector<1x128xf32>
    %64 = vector.broadcast %63 : vector<1x128xf32> to vector<64x128xf32>
    %65 = arith.subf %62, %64 : vector<64x128xf32>
    %c0_64 = arith.constant 0 : index
    %c0_65 = arith.constant 0 : index
    %66 = vector.load %arg5[%c0_64, %c0_65] : memref<1x128xf32, #tpu.memory_space<vmem>>, vector<1x128xf32>
    %cst_66 = arith.constant 9.99999974E-6 : f32
    %67 = vector.broadcast %cst_66 : f32 to vector<1x128xf32>
    %68 = arith.addf %66, %67 : vector<1x128xf32>
    %69 = math.rsqrt %68 : vector<1x128xf32>
    %70 = vector.broadcast %69 : vector<1x128xf32> to vector<64x128xf32>
    %71 = arith.mulf %65, %70 : vector<64x128xf32>
    %cst_67 = arith.constant 0.000000e+00 : f32
    %72 = vector.broadcast %cst_67 : f32 to vector<64x128xf32>
    %73 = arith.maximumf %71, %72 : vector<64x128xf32>
    %cst_68 = arith.constant 0.000000e+00 : f32
    %74 = vector.broadcast %cst_68 : f32 to vector<64x128xf32>
    %c0_69 = arith.constant 0 : index
    %c0_70 = arith.constant 0 : index
    %c0_71 = arith.constant 0 : index
    %75 = vector.load %arg2[%c0_69, %c0_70, %c0_71] : memref<9x64x64xf32, #tpu.memory_space<vmem>>, vector<1x64x64xf32>
    %76 = vector.shape_cast %75 : vector<1x64x64xf32> to vector<64x64xf32>
    %cst_72 = arith.constant dense<0.000000e+00> : vector<64x128xf32>
    %77 = tpu.matmul %76, %73, %cst_72 {dimension_numbers = #tpu.dot_dimension_numbers<[1], [0], [0], [1], [0, 0, 1, 1], [], []>} : vector<64x64xf32>, vector<64x128xf32>, vector<64x128xf32> -> vector<64x128xf32>
    %c0_73 = arith.constant 0 : index
    %c0_74 = arith.constant 0 : index
    %c0_75 = arith.constant 0 : index
    %78 = vector.load %arg6[%c0_73, %c0_74, %c0_75] : memref<9x128x128xf32, #tpu.memory_space<vmem>>, vector<1x128x128xf32>
    %79 = vector.shape_cast %78 : vector<1x128x128xf32> to vector<128x128xf32>
    %cst_76 = arith.constant dense<0.000000e+00> : vector<64x128xf32>
    %80 = tpu.matmul %77, %79, %cst_76 {dimension_numbers = #tpu.dot_dimension_numbers<[1], [0], [0], [1], [0, 0, 1, 1], [], []>} : vector<64x128xf32>, vector<128x128xf32>, vector<64x128xf32> -> vector<64x128xf32>
    %81 = arith.addf %74, %80 : vector<64x128xf32>
    %c1_77 = arith.constant 1 : index
    %c0_78 = arith.constant 0 : index
    %c0_79 = arith.constant 0 : index
    %82 = vector.load %arg2[%c1_77, %c0_78, %c0_79] : memref<9x64x64xf32, #tpu.memory_space<vmem>>, vector<1x64x64xf32>
    %83 = vector.shape_cast %82 : vector<1x64x64xf32> to vector<64x64xf32>
    %cst_80 = arith.constant dense<0.000000e+00> : vector<64x128xf32>
    %84 = tpu.matmul %83, %73, %cst_80 {dimension_numbers = #tpu.dot_dimension_numbers<[1], [0], [0], [1], [0, 0, 1, 1], [], []>} : vector<64x64xf32>, vector<64x128xf32>, vector<64x128xf32> -> vector<64x128xf32>
    %c1_81 = arith.constant 1 : index
    %c0_82 = arith.constant 0 : index
    %c0_83 = arith.constant 0 : index
    %85 = vector.load %arg6[%c1_81, %c0_82, %c0_83] : memref<9x128x128xf32, #tpu.memory_space<vmem>>, vector<1x128x128xf32>
    %86 = vector.shape_cast %85 : vector<1x128x128xf32> to vector<128x128xf32>
    %cst_84 = arith.constant dense<0.000000e+00> : vector<64x128xf32>
    %87 = tpu.matmul %84, %86, %cst_84 {dimension_numbers = #tpu.dot_dimension_numbers<[1], [0], [0], [1], [0, 0, 1, 1], [], []>} : vector<64x128xf32>, vector<128x128xf32>, vector<64x128xf32> -> vector<64x128xf32>
    %88 = arith.addf %81, %87 : vector<64x128xf32>
    %c2_85 = arith.constant 2 : index
    %c0_86 = arith.constant 0 : index
    %c0_87 = arith.constant 0 : index
    %89 = vector.load %arg2[%c2_85, %c0_86, %c0_87] : memref<9x64x64xf32, #tpu.memory_space<vmem>>, vector<1x64x64xf32>
    %90 = vector.shape_cast %89 : vector<1x64x64xf32> to vector<64x64xf32>
    %cst_88 = arith.constant dense<0.000000e+00> : vector<64x128xf32>
    %91 = tpu.matmul %90, %73, %cst_88 {dimension_numbers = #tpu.dot_dimension_numbers<[1], [0], [0], [1], [0, 0, 1, 1], [], []>} : vector<64x64xf32>, vector<64x128xf32>, vector<64x128xf32> -> vector<64x128xf32>
    %c2_89 = arith.constant 2 : index
    %c0_90 = arith.constant 0 : index
    %c0_91 = arith.constant 0 : index
    %92 = vector.load %arg6[%c2_89, %c0_90, %c0_91] : memref<9x128x128xf32, #tpu.memory_space<vmem>>, vector<1x128x128xf32>
    %93 = vector.shape_cast %92 : vector<1x128x128xf32> to vector<128x128xf32>
    %cst_92 = arith.constant dense<0.000000e+00> : vector<64x128xf32>
    %94 = tpu.matmul %91, %93, %cst_92 {dimension_numbers = #tpu.dot_dimension_numbers<[1], [0], [0], [1], [0, 0, 1, 1], [], []>} : vector<64x128xf32>, vector<128x128xf32>, vector<64x128xf32> -> vector<64x128xf32>
    %95 = arith.addf %88, %94 : vector<64x128xf32>
    %c3_93 = arith.constant 3 : index
    %c0_94 = arith.constant 0 : index
    %c0_95 = arith.constant 0 : index
    %96 = vector.load %arg2[%c3_93, %c0_94, %c0_95] : memref<9x64x64xf32, #tpu.memory_space<vmem>>, vector<1x64x64xf32>
    %97 = vector.shape_cast %96 : vector<1x64x64xf32> to vector<64x64xf32>
    %cst_96 = arith.constant dense<0.000000e+00> : vector<64x128xf32>
    %98 = tpu.matmul %97, %73, %cst_96 {dimension_numbers = #tpu.dot_dimension_numbers<[1], [0], [0], [1], [0, 0, 1, 1], [], []>} : vector<64x64xf32>, vector<64x128xf32>, vector<64x128xf32> -> vector<64x128xf32>
    %c3_97 = arith.constant 3 : index
    %c0_98 = arith.constant 0 : index
    %c0_99 = arith.constant 0 : index
    %99 = vector.load %arg6[%c3_97, %c0_98, %c0_99] : memref<9x128x128xf32, #tpu.memory_space<vmem>>, vector<1x128x128xf32>
    %100 = vector.shape_cast %99 : vector<1x128x128xf32> to vector<128x128xf32>
    %cst_100 = arith.constant dense<0.000000e+00> : vector<64x128xf32>
    %101 = tpu.matmul %98, %100, %cst_100 {dimension_numbers = #tpu.dot_dimension_numbers<[1], [0], [0], [1], [0, 0, 1, 1], [], []>} : vector<64x128xf32>, vector<128x128xf32>, vector<64x128xf32> -> vector<64x128xf32>
    %102 = arith.addf %95, %101 : vector<64x128xf32>
    %c4_101 = arith.constant 4 : index
    %c0_102 = arith.constant 0 : index
    %c0_103 = arith.constant 0 : index
    %103 = vector.load %arg6[%c4_101, %c0_102, %c0_103] : memref<9x128x128xf32, #tpu.memory_space<vmem>>, vector<1x128x128xf32>
    %104 = vector.shape_cast %103 : vector<1x128x128xf32> to vector<128x128xf32>
    %cst_104 = arith.constant dense<0.000000e+00> : vector<64x128xf32>
    %105 = tpu.matmul %73, %104, %cst_104 {dimension_numbers = #tpu.dot_dimension_numbers<[1], [0], [0], [1], [0, 0, 1, 1], [], []>} : vector<64x128xf32>, vector<128x128xf32>, vector<64x128xf32> -> vector<64x128xf32>
    %106 = arith.addf %102, %105 : vector<64x128xf32>
    %c5_105 = arith.constant 5 : index
    %c0_106 = arith.constant 0 : index
    %c0_107 = arith.constant 0 : index
    %107 = vector.load %arg2[%c5_105, %c0_106, %c0_107] : memref<9x64x64xf32, #tpu.memory_space<vmem>>, vector<1x64x64xf32>
    %108 = vector.shape_cast %107 : vector<1x64x64xf32> to vector<64x64xf32>
    %cst_108 = arith.constant dense<0.000000e+00> : vector<64x128xf32>
    %109 = tpu.matmul %108, %73, %cst_108 {dimension_numbers = #tpu.dot_dimension_numbers<[1], [0], [0], [1], [0, 0, 1, 1], [], []>} : vector<64x64xf32>, vector<64x128xf32>, vector<64x128xf32> -> vector<64x128xf32>
    %c5_109 = arith.constant 5 : index
    %c0_110 = arith.constant 0 : index
    %c0_111 = arith.constant 0 : index
    %110 = vector.load %arg6[%c5_109, %c0_110, %c0_111] : memref<9x128x128xf32, #tpu.memory_space<vmem>>, vector<1x128x128xf32>
    %111 = vector.shape_cast %110 : vector<1x128x128xf32> to vector<128x128xf32>
    %cst_112 = arith.constant dense<0.000000e+00> : vector<64x128xf32>
    %112 = tpu.matmul %109, %111, %cst_112 {dimension_numbers = #tpu.dot_dimension_numbers<[1], [0], [0], [1], [0, 0, 1, 1], [], []>} : vector<64x128xf32>, vector<128x128xf32>, vector<64x128xf32> -> vector<64x128xf32>
    %113 = arith.addf %106, %112 : vector<64x128xf32>
    %c6_113 = arith.constant 6 : index
    %c0_114 = arith.constant 0 : index
    %c0_115 = arith.constant 0 : index
    %114 = vector.load %arg2[%c6_113, %c0_114, %c0_115] : memref<9x64x64xf32, #tpu.memory_space<vmem>>, vector<1x64x64xf32>
    %115 = vector.shape_cast %114 : vector<1x64x64xf32> to vector<64x64xf32>
    %cst_116 = arith.constant dense<0.000000e+00> : vector<64x128xf32>
    %116 = tpu.matmul %115, %73, %cst_116 {dimension_numbers = #tpu.dot_dimension_numbers<[1], [0], [0], [1], [0, 0, 1, 1], [], []>} : vector<64x64xf32>, vector<64x128xf32>, vector<64x128xf32> -> vector<64x128xf32>
    %c6_117 = arith.constant 6 : index
    %c0_118 = arith.constant 0 : index
    %c0_119 = arith.constant 0 : index
    %117 = vector.load %arg6[%c6_117, %c0_118, %c0_119] : memref<9x128x128xf32, #tpu.memory_space<vmem>>, vector<1x128x128xf32>
    %118 = vector.shape_cast %117 : vector<1x128x128xf32> to vector<128x128xf32>
    %cst_120 = arith.constant dense<0.000000e+00> : vector<64x128xf32>
    %119 = tpu.matmul %116, %118, %cst_120 {dimension_numbers = #tpu.dot_dimension_numbers<[1], [0], [0], [1], [0, 0, 1, 1], [], []>} : vector<64x128xf32>, vector<128x128xf32>, vector<64x128xf32> -> vector<64x128xf32>
    %120 = arith.addf %113, %119 : vector<64x128xf32>
    %c7_121 = arith.constant 7 : index
    %c0_122 = arith.constant 0 : index
    %c0_123 = arith.constant 0 : index
    %121 = vector.load %arg2[%c7_121, %c0_122, %c0_123] : memref<9x64x64xf32, #tpu.memory_space<vmem>>, vector<1x64x64xf32>
    %122 = vector.shape_cast %121 : vector<1x64x64xf32> to vector<64x64xf32>
    %cst_124 = arith.constant dense<0.000000e+00> : vector<64x128xf32>
    %123 = tpu.matmul %122, %73, %cst_124 {dimension_numbers = #tpu.dot_dimension_numbers<[1], [0], [0], [1], [0, 0, 1, 1], [], []>} : vector<64x64xf32>, vector<64x128xf32>, vector<64x128xf32> -> vector<64x128xf32>
    %c7_125 = arith.constant 7 : index
    %c0_126 = arith.constant 0 : index
    %c0_127 = arith.constant 0 : index
    %124 = vector.load %arg6[%c7_125, %c0_126, %c0_127] : memref<9x128x128xf32, #tpu.memory_space<vmem>>, vector<1x128x128xf32>
    %125 = vector.shape_cast %124 : vector<1x128x128xf32> to vector<128x128xf32>
    %cst_128 = arith.constant dense<0.000000e+00> : vector<64x128xf32>
    %126 = tpu.matmul %123, %125, %cst_128 {dimension_numbers = #tpu.dot_dimension_numbers<[1], [0], [0], [1], [0, 0, 1, 1], [], []>} : vector<64x128xf32>, vector<128x128xf32>, vector<64x128xf32> -> vector<64x128xf32>
    %127 = arith.addf %120, %126 : vector<64x128xf32>
    %c8_129 = arith.constant 8 : index
    %c0_130 = arith.constant 0 : index
    %c0_131 = arith.constant 0 : index
    %128 = vector.load %arg2[%c8_129, %c0_130, %c0_131] : memref<9x64x64xf32, #tpu.memory_space<vmem>>, vector<1x64x64xf32>
    %129 = vector.shape_cast %128 : vector<1x64x64xf32> to vector<64x64xf32>
    %cst_132 = arith.constant dense<0.000000e+00> : vector<64x128xf32>
    %130 = tpu.matmul %129, %73, %cst_132 {dimension_numbers = #tpu.dot_dimension_numbers<[1], [0], [0], [1], [0, 0, 1, 1], [], []>} : vector<64x64xf32>, vector<64x128xf32>, vector<64x128xf32> -> vector<64x128xf32>
    %c8_133 = arith.constant 8 : index
    %c0_134 = arith.constant 0 : index
    %c0_135 = arith.constant 0 : index
    %131 = vector.load %arg6[%c8_133, %c0_134, %c0_135] : memref<9x128x128xf32, #tpu.memory_space<vmem>>, vector<1x128x128xf32>
    %132 = vector.shape_cast %131 : vector<1x128x128xf32> to vector<128x128xf32>
    %cst_136 = arith.constant dense<0.000000e+00> : vector<64x128xf32>
    %133 = tpu.matmul %130, %132, %cst_136 {dimension_numbers = #tpu.dot_dimension_numbers<[1], [0], [0], [1], [0, 0, 1, 1], [], []>} : vector<64x128xf32>, vector<128x128xf32>, vector<64x128xf32> -> vector<64x128xf32>
    %134 = arith.addf %127, %133 : vector<64x128xf32>
    %c0_137 = arith.constant 0 : index
    %c0_138 = arith.constant 0 : index
    %135 = vector.load %arg7[%c0_137, %c0_138] : memref<1x128xf32, #tpu.memory_space<vmem>>, vector<1x128xf32>
    %136 = vector.broadcast %135 : vector<1x128xf32> to vector<64x128xf32>
    %137 = arith.subf %134, %136 : vector<64x128xf32>
    %c0_139 = arith.constant 0 : index
    %c0_140 = arith.constant 0 : index
    %138 = vector.load %arg8[%c0_139, %c0_140] : memref<1x128xf32, #tpu.memory_space<vmem>>, vector<1x128xf32>
    %cst_141 = arith.constant 9.99999974E-6 : f32
    %139 = vector.broadcast %cst_141 : f32 to vector<1x128xf32>
    %140 = arith.addf %138, %139 : vector<1x128xf32>
    %141 = math.rsqrt %140 : vector<1x128xf32>
    %142 = vector.broadcast %141 : vector<1x128xf32> to vector<64x128xf32>
    %143 = arith.mulf %137, %142 : vector<64x128xf32>
    %cst_142 = arith.constant dense<0.000000e+00> : vector<128xf32>
    %144 = vector.multi_reduction <add>, %143, %cst_142 [0] : vector<64x128xf32> to vector<128xf32>
    %145 = vector.shape_cast %144 : vector<128xf32> to vector<1x128xf32>
    %cst_143 = arith.constant 6.400000e+01 : f32
    %146 = vector.broadcast %cst_143 : f32 to vector<1x128xf32>
    %147 = arith.divf %145, %146 : vector<1x128xf32>
    %c0_144 = arith.constant 0 : index
    %c0_145 = arith.constant 0 : index
    %148 = vector.load %arg9[%c0_144, %c0_145] : memref<128x32xf32, #tpu.memory_space<vmem>>, vector<128x32xf32>
    %cst_146 = arith.constant dense<0.000000e+00> : vector<1x32xf32>
    %149 = tpu.matmul %147, %148, %cst_146 {dimension_numbers = #tpu.dot_dimension_numbers<[1], [0], [0], [1], [0, 0, 1, 1], [], []>} : vector<1x128xf32>, vector<128x32xf32>, vector<1x32xf32> -> vector<1x32xf32>
    %c0_147 = arith.constant 0 : index
    %c0_148 = arith.constant 0 : index
    %150 = vector.load %arg10[%c0_147, %c0_148] : memref<1x32xf32, #tpu.memory_space<vmem>>, vector<1x32xf32>
    %151 = arith.addf %149, %150 : vector<1x32xf32>
    %cst_149 = arith.constant 0.000000e+00 : f32
    %152 = vector.broadcast %cst_149 : f32 to vector<1x32xf32>
    %153 = arith.maximumf %151, %152 : vector<1x32xf32>
    %c0_150 = arith.constant 0 : index
    %c0_151 = arith.constant 0 : index
    %154 = vector.load %arg11[%c0_150, %c0_151] : memref<32x256xf32, #tpu.memory_space<vmem>>, vector<32x256xf32>
    %cst_152 = arith.constant dense<0.000000e+00> : vector<1x256xf32>
    %155 = tpu.matmul %153, %154, %cst_152 {dimension_numbers = #tpu.dot_dimension_numbers<[1], [0], [0], [1], [0, 0, 1, 1], [], []>} : vector<1x32xf32>, vector<32x256xf32>, vector<1x256xf32> -> vector<1x256xf32>
    %c0_153 = arith.constant 0 : index
    %c0_154 = arith.constant 0 : index
    %156 = vector.load %arg12[%c0_153, %c0_154] : memref<1x256xf32, #tpu.memory_space<vmem>>, vector<1x256xf32>
    %157 = arith.addf %155, %156 : vector<1x256xf32>
    %158 = vector.extract_strided_slice %157 {offsets = [0, 0], sizes = [1, 128], strides = [1, 1]} : vector<1x256xf32> to vector<1x128xf32>
    %159 = vector.extract_strided_slice %157 {offsets = [0, 128], sizes = [1, 128], strides = [1, 1]} : vector<1x256xf32> to vector<1x128xf32>
    %cst_155 = arith.constant 0.000000e+00 : f32
    %160 = vector.broadcast %cst_155 : f32 to vector<1x128xf32>
    %161 = arith.subf %160, %158 : vector<1x128xf32>
    %162 = math.exp %161 : vector<1x128xf32>
    %cst_156 = arith.constant 1.000000e+00 : f32
    %163 = vector.broadcast %cst_156 : f32 to vector<1x128xf32>
    %164 = arith.addf %163, %162 : vector<1x128xf32>
    %cst_157 = arith.constant 1.000000e+00 : f32
    %165 = vector.broadcast %cst_157 : f32 to vector<1x128xf32>
    %166 = arith.divf %165, %164 : vector<1x128xf32>
    %167 = vector.broadcast %166 : vector<1x128xf32> to vector<64x128xf32>
    %168 = arith.mulf %167, %143 : vector<64x128xf32>
    %169 = vector.broadcast %159 : vector<1x128xf32> to vector<64x128xf32>
    %170 = arith.addf %168, %169 : vector<64x128xf32>
    %171 = arith.addf %170, %1 : vector<64x128xf32>
    %cst_158 = arith.constant 0.000000e+00 : f32
    %172 = vector.broadcast %cst_158 : f32 to vector<64x128xf32>
    %173 = arith.maximumf %171, %172 : vector<64x128xf32>
    %c0_159 = arith.constant 0 : index
    %c0_160 = arith.constant 0 : index
    %c0_161 = arith.constant 0 : index
    %174 = vector.load %arg13[%c0_159, %c0_160, %c0_161] : memref<1x64x128xf32, #tpu.memory_space<vmem>>, vector<1x64x128xf32>
    %175 = vector.shape_cast %174 : vector<1x64x128xf32> to vector<64x128xf32>
    %176 = vector.shape_cast %173 : vector<64x128xf32> to vector<1x64x128xf32>
    tpu.vector_store %arg13[%c0_159, %c0_160, %c0_161], %176 {strides = array<i32>} : memref<1x64x128xf32, #tpu.memory_space<vmem>>, vector<1x64x128xf32>,
    return
  }
  func.func @transform_0(%arg0: i32) -> (i32, i32, i32) {
    %c0_i32 = arith.constant 0 : i32
    %c0_i32_0 = arith.constant 0 : i32
    %c0_i32_1 = arith.constant 0 : i32
    return %arg0, %c0_i32, %c0_i32_0 : i32, i32, i32
  }
  func.func @transform_1(%arg0: i32) -> (i32, i32, i32) {
    %c0_i32 = arith.constant 0 : i32
    %c0_i32_0 = arith.constant 0 : i32
    %c0_i32_1 = arith.constant 0 : i32
    %c0_i32_2 = arith.constant 0 : i32
    return %c0_i32, %c0_i32_0, %c0_i32_1 : i32, i32, i32
  }
  func.func @transform_2(%arg0: i32) -> (i32, i32, i32) {
    %c0_i32 = arith.constant 0 : i32
    %c0_i32_0 = arith.constant 0 : i32
    %c0_i32_1 = arith.constant 0 : i32
    %c0_i32_2 = arith.constant 0 : i32
    return %c0_i32, %c0_i32_0, %c0_i32_1 : i32, i32, i32
  }
  func.func @transform_3(%arg0: i32) -> (i32, i32) {
    %c0_i32 = arith.constant 0 : i32
    %c0_i32_0 = arith.constant 0 : i32
    %c0_i32_1 = arith.constant 0 : i32
    return %c0_i32, %c0_i32_0 : i32, i32
  }
  func.func @transform_4(%arg0: i32) -> (i32, i32) {
    %c0_i32 = arith.constant 0 : i32
    %c0_i32_0 = arith.constant 0 : i32
    %c0_i32_1 = arith.constant 0 : i32
    return %c0_i32, %c0_i32_0 : i32, i32
  }
  func.func @transform_5(%arg0: i32) -> (i32, i32, i32) {
    %c0_i32 = arith.constant 0 : i32
    %c0_i32_0 = arith.constant 0 : i32
    %c0_i32_1 = arith.constant 0 : i32
    %c0_i32_2 = arith.constant 0 : i32
    return %c0_i32, %c0_i32_0, %c0_i32_1 : i32, i32, i32
  }
  func.func @transform_6(%arg0: i32) -> (i32, i32) {
    %c0_i32 = arith.constant 0 : i32
    %c0_i32_0 = arith.constant 0 : i32
    %c0_i32_1 = arith.constant 0 : i32
    return %c0_i32, %c0_i32_0 : i32, i32
  }
  func.func @transform_7(%arg0: i32) -> (i32, i32) {
    %c0_i32 = arith.constant 0 : i32
    %c0_i32_0 = arith.constant 0 : i32
    %c0_i32_1 = arith.constant 0 : i32
    return %c0_i32, %c0_i32_0 : i32, i32
  }
  func.func @transform_8(%arg0: i32) -> (i32, i32) {
    %c0_i32 = arith.constant 0 : i32
    %c0_i32_0 = arith.constant 0 : i32
    %c0_i32_1 = arith.constant 0 : i32
    return %c0_i32, %c0_i32_0 : i32, i32
  }
  func.func @transform_9(%arg0: i32) -> (i32, i32) {
    %c0_i32 = arith.constant 0 : i32
    %c0_i32_0 = arith.constant 0 : i32
    %c0_i32_1 = arith.constant 0 : i32
    return %c0_i32, %c0_i32_0 : i32, i32
  }
  func.func @transform_10(%arg0: i32) -> (i32, i32) {
    %c0_i32 = arith.constant 0 : i32
    %c0_i32_0 = arith.constant 0 : i32
    %c0_i32_1 = arith.constant 0 : i32
    return %c0_i32, %c0_i32_0 : i32, i32
  }
  func.func @transform_11(%arg0: i32) -> (i32, i32) {
    %c0_i32 = arith.constant 0 : i32
    %c0_i32_0 = arith.constant 0 : i32
    %c0_i32_1 = arith.constant 0 : i32
    return %c0_i32, %c0_i32_0 : i32, i32
  }
  func.func @transform_12(%arg0: i32) -> (i32, i32, i32) {
    %c0_i32 = arith.constant 0 : i32
    %c0_i32_0 = arith.constant 0 : i32
    %c0_i32_1 = arith.constant 0 : i32
    return %arg0, %c0_i32, %c0_i32_0 : i32, i32, i32
  }
}

</mosaic_0001>

<llo_original>
// kernel: tpu_custom_call.1
$region0: #{tpu_custom_call.1}
  #allocation0 [shape = 'u32[]', space=smem, size = 0x4, offset = 0x4, fixed_abs, tag = 'smem constant byte address 0x4 - core index']
  #allocation1 [shape = 'u32[144,128]{1,0:T(1,128)}', space=vmem, size = 0x12000, scoped, tag = 'internal scratch']
  %s0 = inlined_call_operand.vmem [shape: f32[2,64,128], index: 0, kind: input, shape index: {}]
  %s1 = inlined_call_operand.hbm [shape: f32[9,64,64], index: 1, kind: input, shape index: {}]
  %s2 = inlined_call_operand.hbm [shape: f32[9,128,128], index: 2, kind: input, shape index: {}]
  %s3 = inlined_call_operand.hbm [shape: f32[1,128], index: 3, kind: input, shape index: {}]
  %s4 = inlined_call_operand.hbm [shape: f32[1,128], index: 4, kind: input, shape index: {}]
  %s5 = inlined_call_operand.hbm [shape: f32[9,128,128], index: 5, kind: input, shape index: {}]
  %s6 = inlined_call_operand.hbm [shape: f32[1,128], index: 6, kind: input, shape index: {}]
  %s7 = inlined_call_operand.hbm [shape: f32[1,128], index: 7, kind: input, shape index: {}]
  %s8 = inlined_call_operand.vmem [shape: f32[128,32], index: 8, kind: input, shape index: {}]
  %s9 = inlined_call_operand.hbm [shape: f32[1,32], index: 9, kind: input, shape index: {}]
  %s10 = inlined_call_operand.vmem [shape: f32[32,256], index: 10, kind: input, shape index: {}]
  %s11 = inlined_call_operand.vmem [shape: f32[1,256], index: 11, kind: input, shape index: {}]
  %s12 = inlined_call_operand.hbm [shape: f32[2,64,128], index: 12, kind: output, shape index: {}]
  %s13 = sld [smem:[#allocation0]]
  $region113: #{tpu_custom_call.1} parent=0
    _
  %s15 = ssub.s32 1, %s13
  %s16 = scalar_select 0, %s15, %s13
  $region1: #{tpu_custom_call.1} parent=0
    #allocation2 [shape = 'u8[294912]{0}', space=vmem, size = 0x48000, scoped, tag = 'input window, operand 1, single buffered']
    #allocation3 [shape = 's32[2]{0}', space=sflag, size = 0x8, scoped, tag = 'scoped memory for tpu_custom_call.1']
    #allocation4 [shape = 's32[2]{0}', space=sflag, size = 0x8, scoped, tag = 'scoped memory for tpu_custom_call.1']
    #allocation5 [shape = 'u8[589824]{0}', space=vmem, size = 0x90000, scoped, tag = 'input window, operand 2, single buffered']
    #allocation6 [shape = 's32[1]{0}', space=sflag, size = 0x4, scoped, tag = 'scoped memory for tpu_custom_call.1']
    #allocation7 [shape = 'u8[512]{0}', space=vmem, size = 0x400, scoped, tag = 'input window, operand 3, single buffered']
    #allocation8 [shape = 'u8[512]{0}', space=vmem, size = 0x400, scoped, tag = 'input window, operand 4, single buffered']
    #allocation9 [shape = 's32[1]{0}', space=sflag, size = 0x4, scoped, tag = 'scoped memory for tpu_custom_call.1']
    #allocation10 [shape = 'u8[589824]{0}', space=vmem, size = 0x90000, scoped, tag = 'input window, operand 5, single buffered']
    #allocation11 [shape = 'u8[512]{0}', space=vmem, size = 0x400, scoped, tag = 'input window, operand 6, single buffered']
    #allocation12 [shape = 's32[1]{0}', space=sflag, size = 0x4, scoped, tag = 'scoped memory for tpu_custom_call.1']
    #allocation13 [shape = 'u8[512]{0}', space=vmem, size = 0x400, scoped, tag = 'input window, operand 7, single buffered']
    #allocation14 [shape = 'u8[512]{0}', space=vmem, size = 0x400, scoped, tag = 'input window, operand 9, single buffered']
    #allocation15 [shape = 's32[1]{0}', space=sflag, size = 0x4, scoped, tag = 'scoped memory for tpu_custom_call.1']
    #allocation16 [shape = 'u8[65536]{0}', space=vmem, size = 0x10000, scoped, tag = 'output window, operand 0']
    %17 = vsyncpa [#allocation3], 0
    %18 = vsyncpa [#allocation6], 0
    %19 = vsyncpa [#allocation9], 0
    %20 = vsyncpa [#allocation12], 0
    %21 = vsyncpa [#allocation15], 0
    %22 = vsyncpa [#allocation4], 0
    %s23 = scalar_lea.sflag [#allocation4], 1
    %24 = vsyncpa %s23, 0
    loop: start=0, step=1, limit=4
    $region2: #{tpu_custom_call.1} parent=1 // loop_pre_header
      _
    $region3: #{tpu_custom_call.1} parent=1 // loop_header
      %s26 = sphi 0, %s30
      %p27 = scmp.ge.s32.totalorder %s26, 4
      %s36 = sphi 0, %s38
      %s39 = sphi 0, %s36
      %s40 = sphi 0, %s39
      %s56 = sphi 0, %s40
      %s60 = sphi 0, %s60
      %s62 = sphi 0, %s60
      %s63 = sphi 0, %s62
      %s77 = sphi 0, %s63
      %s81 = sphi 0, %s81
      %s83 = sphi 0, %s81
      %s84 = sphi 0, %s83
      %s98 = sphi 0, %s84
      %s102 = sphi 0, %s102
      %s104 = sphi 0, %s102
      %s105 = sphi 0, %s104
      %s119 = sphi 0, %s105
      %s123 = sphi 0, %s123
      %s125 = sphi 0, %s123
      %s126 = sphi 0, %s125
      %s140 = sphi 0, %s126
      %s144 = sphi 0, %s144
      %s146 = sphi 0, %s144
      %s147 = sphi 0, %s146
      %s161 = sphi 0, %s147
      %s165 = sphi 0, %s165
      %s167 = sphi 0, %s165
      %s168 = sphi 0, %s167
      %s182 = sphi 0, %s168
      %s186 = sphi 0, %s186
      %s188 = sphi 0, %s186
      %s189 = sphi 0, %s188
      %s203 = sphi 0, %s189
      %s207 = sphi 0, %s207
      %s209 = sphi 0, %s207
      %s210 = sphi 0, %s209
      %s224 = sphi 0, %s210
      %s228 = sphi 0, %s228
      %s230 = sphi 0, %s228
      %s231 = sphi 0, %s230
      %s245 = sphi 0, %s231
      %s249 = sphi 0, %s249
      %s251 = sphi 0, %s249
      %s252 = sphi 0, %s251
      %s266 = sphi 0, %s252
      %s270 = sphi 0, %s270
      %s272 = sphi 0, %s270
      %s273 = sphi 0, %s272
      %s287 = sphi 0, %s273
      %s293 = sphi 0, %s295
      %s296 = sphi 0, %s293
      %s297 = sphi 0, %s296
      %s313 = sphi 0, %s297
    $region4: #{tpu_custom_call.1} parent=1 // loop_header_branch
      %29 = sbr.rel (%p27) target = $region8
    $region5: #{tpu_custom_call.1} parent=1 // loop_body
      %s31 = ssub.s32 %s26, 1
      %s32 = ssub.s32 %s26, 2
      %s33 = sadd.s32 %s26, 1
      %s34 = ssub.s32 %s26, %s33
      %p35 = scmp.eq.s32.totalorder %s34, 0
      %s37 = sadd.s32 %s36, 1
      %s38 = scalar_select %p35, %s36, %s37
      %p41 = pneg %p35
      %p42 = scmp.eq.s32.totalorder %s26, 1
      %p43 = por %p41, %p42
      %p44 = scmp.ne.s32.totalorder %s36, %s39
      %p45 = scmp.eq.s32.totalorder %s26, 0
      %p46 = por %p44, %p45
      %p47 = scmp.ne.s32.totalorder %s36, %s39
      %p48 = scmp.eq.s32.totalorder %s31, 1
      %p49 = por %p47, %p48
      %p50 = scmp.ne.s32.totalorder %s39, %s40
      %p51 = scmp.eq.s32.totalorder %s31, 0
      %p52 = por %p50, %p51
      %p53 = scmp.ne.s32.totalorder %s39, %s40
      %p54 = scmp.eq.s32.totalorder %s32, 1
      %p55 = por %p53, %p54
      %p57 = scmp.ne.s32.totalorder %s40, %s56
      %p58 = scmp.eq.s32.totalorder %s32, 0
      %p59 = por %p57, %p58
      %s61 = sadd.s32 %s60, 1
      %p64 = scmp.eq.s32.totalorder %s26, 1
      %p65 = scmp.ne.s32.totalorder %s60, %s62
      %p66 = scmp.eq.s32.totalorder %s26, 0
      %p67 = por %p65, %p66
      %p68 = scmp.ne.s32.totalorder %s60, %s62
      %p69 = scmp.eq.s32.totalorder %s31, 1
      %p70 = por %p68, %p69
      %p71 = scmp.ne.s32.totalorder %s62, %s63
      %p72 = scmp.eq.s32.totalorder %s31, 0
      %p73 = por %p71, %p72
      %p74 = scmp.ne.s32.totalorder %s62, %s63
      %p75 = scmp.eq.s32.totalorder %s32, 1
      %p76 = por %p74, %p75
      %p78 = scmp.ne.s32.totalorder %s63, %s77
      %p79 = scmp.eq.s32.totalorder %s32, 0
      %p80 = por %p78, %p79
      %s82 = sadd.s32 %s81, 1
      %p85 = scmp.eq.s32.totalorder %s26, 1
      %p86 = scmp.ne.s32.totalorder %s81, %s83
      %p87 = scmp.eq.s32.totalorder %s26, 0
      %p88 = por %p86, %p87
      %p89 = scmp.ne.s32.totalorder %s81, %s83
      %p90 = scmp.eq.s32.totalorder %s31, 1
      %p91 = por %p89, %p90
      %p92 = scmp.ne.s32.totalorder %s83, %s84
      %p93 = scmp.eq.s32.totalorder %s31, 0
      %p94 = por %p92, %p93
      %p95 = scmp.ne.s32.totalorder %s83, %s84
      %p96 = scmp.eq.s32.totalorder %s32, 1
      %p97 = por %p95, %p96
      %p99 = scmp.ne.s32.totalorder %s84, %s98
      %p100 = scmp.eq.s32.totalorder %s32, 0
      %p101 = por %p99, %p100
      %s103 = sadd.s32 %s102, 1
      %p106 = scmp.eq.s32.totalorder %s26, 1
      %p107 = scmp.ne.s32.totalorder %s102, %s104
      %p108 = scmp.eq.s32.totalorder %s26, 0
      %p109 = por %p107, %p108
      %p110 = scmp.ne.s32.totalorder %s102, %s104
      %p111 = scmp.eq.s32.totalorder %s31, 1
      %p112 = por %p110, %p111
      %p113 = scmp.ne.s32.totalorder %s104, %s105
      %p114 = scmp.eq.s32.totalorder %s31, 0
      %p115 = por %p113, %p114
      %p116 = scmp.ne.s32.totalorder %s104, %s105
      %p117 = scmp.eq.s32.totalorder %s32, 1
      %p118 = por %p116, %p117
      %p120 = scmp.ne.s32.totalorder %s105, %s119
      %p121 = scmp.eq.s32.totalorder %s32, 0
      %p122 = por %p120, %p121
      %s124 = sadd.s32 %s123, 1
      %p127 = scmp.eq.s32.totalorder %s26, 1
      %p128 = scmp.ne.s32.totalorder %s123, %s125
      %p129 = scmp.eq.s32.totalorder %s26, 0
      %p130 = por %p128, %p129
      %p131 = scmp.ne.s32.totalorder %s123, %s125
      %p132 = scmp.eq.s32.totalorder %s31, 1
      %p133 = por %p131, %p132
      %p134 = scmp.ne.s32.totalorder %s125, %s126
      %p135 = scmp.eq.s32.totalorder %s31, 0
      %p136 = por %p134, %p135
      %p137 = scmp.ne.s32.totalorder %s125, %s126
      %p138 = scmp.eq.s32.totalorder %s32, 1
      %p139 = por %p137, %p138
      %p141 = scmp.ne.s32.totalorder %s126, %s140
      %p142 = scmp.eq.s32.totalorder %s32, 0
      %p143 = por %p141, %p142
      %s145 = sadd.s32 %s144, 1
      %p148 = scmp.eq.s32.totalorder %s26, 1
      %p149 = scmp.ne.s32.totalorder %s144, %s146
      %p150 = scmp.eq.s32.totalorder %s26, 0
      %p151 = por %p149, %p150
      %p152 = scmp.ne.s32.totalorder %s144, %s146
      %p153 = scmp.eq.s32.totalorder %s31, 1
      %p154 = por %p152, %p153
      %p155 = scmp.ne.s32.totalorder %s146, %s147
      %p156 = scmp.eq.s32.totalorder %s31, 0
      %p157 = por %p155, %p156
      %p158 = scmp.ne.s32.totalorder %s146, %s147
      %p159 = scmp.eq.s32.totalorder %s32, 1
      %p160 = por %p158, %p159
      %p162 = scmp.ne.s32.totalorder %s147, %s161
      %p163 = scmp.eq.s32.totalorder %s32, 0
      %p164 = por %p162, %p163
      %s166 = sadd.s32 %s165, 1
      %p169 = scmp.eq.s32.totalorder %s26, 1
      %p170 = scmp.ne.s32.totalorder %s165, %s167
      %p171 = scmp.eq.s32.totalorder %s26, 0
      %p172 = por %p170, %p171
      %p173 = scmp.ne.s32.totalorder %s165, %s167
      %p174 = scmp.eq.s32.totalorder %s31, 1
      %p175 = por %p173, %p174
      %p176 = scmp.ne.s32.totalorder %s167, %s168
      %p177 = scmp.eq.s32.totalorder %s31, 0
      %p178 = por %p176, %p177
      %p179 = scmp.ne.s32.totalorder %s167, %s168
      %p180 = scmp.eq.s32.totalorder %s32, 1
      %p181 = por %p179, %p180
      %p183 = scmp.ne.s32.totalorder %s168, %s182
      %p184 = scmp.eq.s32.totalorder %s32, 0
      %p185 = por %p183, %p184
      %s187 = sadd.s32 %s186, 1
      %p190 = scmp.eq.s32.totalorder %s26, 1
      %p191 = scmp.ne.s32.totalorder %s186, %s188
      %p192 = scmp.eq.s32.totalorder %s26, 0
      %p193 = por %p191, %p192
      %p194 = scmp.ne.s32.totalorder %s186, %s188
      %p195 = scmp.eq.s32.totalorder %s31, 1
      %p196 = por %p194, %p195
      %p197 = scmp.ne.s32.totalorder %s188, %s189
      %p198 = scmp.eq.s32.totalorder %s31, 0
      %p199 = por %p197, %p198
      %p200 = scmp.ne.s32.totalorder %s188, %s189
      %p201 = scmp.eq.s32.totalorder %s32, 1
      %p202 = por %p200, %p201
      %p204 = scmp.ne.s32.totalorder %s189, %s203
      %p205 = scmp.eq.s32.totalorder %s32, 0
      %p206 = por %p204, %p205
      %s208 = sadd.s32 %s207, 1
      %p211 = scmp.eq.s32.totalorder %s26, 1
      %p212 = scmp.ne.s32.totalorder %s207, %s209
      %p213 = scmp.eq.s32.totalorder %s26, 0
      %p214 = por %p212, %p213
      %p215 = scmp.ne.s32.totalorder %s207, %s209
      %p216 = scmp.eq.s32.totalorder %s31, 1
      %p217 = por %p215, %p216
      %p218 = scmp.ne.s32.totalorder %s209, %s210
      %p219 = scmp.eq.s32.totalorder %s31, 0
      %p220 = por %p218, %p219
      %p221 = scmp.ne.s32.totalorder %s209, %s210
      %p222 = scmp.eq.s32.totalorder %s32, 1
      %p223 = por %p221, %p222
      %p225 = scmp.ne.s32.totalorder %s210, %s224
      %p226 = scmp.eq.s32.totalorder %s32, 0
      %p227 = por %p225, %p226
      %s229 = sadd.s32 %s228, 1
      %p232 = scmp.eq.s32.totalorder %s26, 1
      %p233 = scmp.ne.s32.totalorder %s228, %s230
      %p234 = scmp.eq.s32.totalorder %s26, 0
      %p235 = por %p233, %p234
      %p236 = scmp.ne.s32.totalorder %s228, %s230
      %p237 = scmp.eq.s32.totalorder %s31, 1
      %p238 = por %p236, %p237
      %p239 = scmp.ne.s32.totalorder %s230, %s231
      %p240 = scmp.eq.s32.totalorder %s31, 0
      %p241 = por %p239, %p240
      %p242 = scmp.ne.s32.totalorder %s230, %s231
      %p243 = scmp.eq.s32.totalorder %s32, 1
      %p244 = por %p242, %p243
      %p246 = scmp.ne.s32.totalorder %s231, %s245
      %p247 = scmp.eq.s32.totalorder %s32, 0
      %p248 = por %p246, %p247
      %s250 = sadd.s32 %s249, 1
      %p253 = scmp.eq.s32.totalorder %s26, 1
      %p254 = scmp.ne.s32.totalorder %s249, %s251
      %p255 = scmp.eq.s32.totalorder %s26, 0
      %p256 = por %p254, %p255
      %p257 = scmp.ne.s32.totalorder %s249, %s251
      %p258 = scmp.eq.s32.totalorder %s31, 1
      %p259 = por %p257, %p258
      %p260 = scmp.ne.s32.totalorder %s251, %s252
      %p261 = scmp.eq.s32.totalorder %s31, 0
      %p262 = por %p260, %p261
      %p263 = scmp.ne.s32.totalorder %s251, %s252
      %p264 = scmp.eq.s32.totalorder %s32, 1
      %p265 = por %p263, %p264
      %p267 = scmp.ne.s32.totalorder %s252, %s266
      %p268 = scmp.eq.s32.totalorder %s32, 0
      %p269 = por %p267, %p268
      %s271 = sadd.s32 %s270, 1
      %p274 = scmp.eq.s32.totalorder %s26, 1
      %p275 = scmp.ne.s32.totalorder %s270, %s272
      %p276 = scmp.eq.s32.totalorder %s26, 0
      %p277 = por %p275, %p276
      %p278 = scmp.ne.s32.totalorder %s270, %s272
      %p279 = scmp.eq.s32.totalorder %s31, 1
      %p280 = por %p278, %p279
      %p281 = scmp.ne.s32.totalorder %s272, %s273
      %p282 = scmp.eq.s32.totalorder %s31, 0
      %p283 = por %p281, %p282
      %p284 = scmp.ne.s32.totalorder %s272, %s273
      %p285 = scmp.eq.s32.totalorder %s32, 1
      %p286 = por %p284, %p285
      %p288 = scmp.ne.s32.totalorder %s273, %s287
      %p289 = scmp.eq.s32.totalorder %s32, 0
      %p290 = por %p288, %p289
      %s291 = ssub.s32 %s26, %s33
      %p292 = scmp.eq.s32.totalorder %s291, 0
      %s294 = sadd.s32 %s293, 1
      %s295 = scalar_select %p292, %s293, %s294
      %p298 = pneg %p292
      %p299 = scmp.eq.s32.totalorder %s26, 1
      %p300 = por %p298, %p299
      %p301 = scmp.ne.s32.totalorder %s293, %s296
      %p302 = scmp.eq.s32.totalorder %s26, 0
      %p303 = por %p301, %p302
      %p304 = scmp.ne.s32.totalorder %s293, %s296
      %p305 = scmp.eq.s32.totalorder %s31, 1
      %p306 = por %p304, %p305
      %p307 = scmp.ne.s32.totalorder %s296, %s297
      %p308 = scmp.eq.s32.totalorder %s31, 0
      %p309 = por %p307, %p308
      %p310 = scmp.ne.s32.totalorder %s296, %s297
      %p311 = scmp.eq.s32.totalorder %s32, 1
      %p312 = por %p310, %p311
      %p314 = scmp.ne.s32.totalorder %s297, %s313
      %p315 = scmp.eq.s32.totalorder %s32, 0
      %p316 = por %p314, %p315
      %p317 = scmp.le.s32.totalorder 1, %s26
      %p318 = scmp.lt.s32.totalorder %s26, 3
      %p319 = pnand %p317, %p318
      %p320 = pneg %p319
      // Predicated region
      $region9: #{tpu_custom_call.1} parent=5 // pred_check
        _
      $region10: #{tpu_custom_call.1} parent=5 // pred_check_branch
        %322 = sbr.rel (%p319) target = $region12
      $region11: #{tpu_custom_call.1} parent=5 // pred_region
        %s323 = ssub.s32 %s26, 1
        // Predicated region
        $region13: #{tpu_custom_call.1} parent=11 // pred_check
          %p324 = pneg %p73
        $region14: #{tpu_custom_call.1} parent=11 // pred_check_branch
          %326 = sbr.rel (%p324) target = $region16
        $region15: #{tpu_custom_call.1} parent=11 // pred_region
          %s328 = ssub.s32 9216, 9216
          %329 = vsyncadd [#allocation3], %s328
          %s330 = sshll.u32 [#allocation2], 4
          %s331 = int_to_ptr.vmem [resolvable:$true] %s330
          %336 = dma.hbm_to_vmem [thread:$0]  %s1, 9216, %s331, [#allocation3], 128, 128, 8
        $region16: #{tpu_custom_call.1} parent=11 // pred_fallthru
          _
        // Predicated region
        $region17: #{tpu_custom_call.1} parent=11 // pred_check
          %p337 = pneg %p94
        $region18: #{tpu_custom_call.1} parent=11 // pred_check_branch
          %339 = sbr.rel (%p337) target = $region20
        $region19: #{tpu_custom_call.1} parent=11 // pred_region
          %s341 = ssub.s32 18432, 18432
          %342 = vsyncadd [#allocation6], %s341
          %s343 = sshll.u32 [#allocation5], 4
          %s344 = int_to_ptr.vmem [resolvable:$true] %s343
          %349 = dma.hbm_to_vmem [thread:$0]  %s2, 18432, %s344, [#allocation6], 128, 128, 8
        $region20: #{tpu_custom_call.1} parent=11 // pred_fallthru
          _
        // Predicated region
        $region21: #{tpu_custom_call.1} parent=11 // pred_check
          %p350 = pneg %p115
        $region22: #{tpu_custom_call.1} parent=11 // pred_check_branch
          %352 = sbr.rel (%p350) target = $region24
        $region23: #{tpu_custom_call.1} parent=11 // pred_region
          %s354 = ssub.s32 16, 16
          %355 = vsyncadd [#allocation6], %s354
          %s357 = sshll.u32 [#allocation7], 4
          %s358 = int_to_ptr.vmem [resolvable:$true] %s357
          %360 = dma.hbm_to_vmem [thread:$0]  %s3, 16, %s358, [#allocation6]
        $region24: #{tpu_custom_call.1} parent=11 // pred_fallthru
          _
        // Predicated region
        $region25: #{tpu_custom_call.1} parent=11 // pred_check
          %p361 = pneg %p136
        $region26: #{tpu_custom_call.1} parent=11 // pred_check_branch
          %363 = sbr.rel (%p361) target = $region28
        $region27: #{tpu_custom_call.1} parent=11 // pred_region
          %s365 = ssub.s32 16, 16
          %366 = vsyncadd [#allocation9], %s365
          %s368 = sshll.u32 [#allocation8], 4
          %s369 = int_to_ptr.vmem [resolvable:$true] %s368
          %371 = dma.hbm_to_vmem [thread:$0]  %s4, 16, %s369, [#allocation9]
        $region28: #{tpu_custom_call.1} parent=11 // pred_fallthru
          _
        // Predicated region
        $region29: #{tpu_custom_call.1} parent=11 // pred_check
          %p372 = pneg %p157
        $region30: #{tpu_custom_call.1} parent=11 // pred_check_branch
          %374 = sbr.rel (%p372) target = $region32
        $region31: #{tpu_custom_call.1} parent=11 // pred_region
          %s376 = ssub.s32 18432, 18432
          %377 = vsyncadd [#allocation9], %s376
          %s378 = sshll.u32 [#allocation10], 4
          %s379 = int_to_ptr.vmem [resolvable:$true] %s378
          %384 = dma.hbm_to_vmem [thread:$0]  %s5, 18432, %s379, [#allocation9], 128, 128, 8
        $region32: #{tpu_custom_call.1} parent=11 // pred_fallthru
          _
        // Predicated region
        $region33: #{tpu_custom_call.1} parent=11 // pred_check
          %p385 = pneg %p178
        $region34: #{tpu_custom_call.1} parent=11 // pred_check_branch
          %387 = sbr.rel (%p385) target = $region36
        $region35: #{tpu_custom_call.1} parent=11 // pred_region
          %s389 = ssub.s32 16, 16
          %390 = vsyncadd [#allocation12], %s389
          %s392 = sshll.u32 [#allocation11], 4
          %s393 = int_to_ptr.vmem [resolvable:$true] %s392
          %395 = dma.hbm_to_vmem [thread:$0]  %s6, 16, %s393, [#allocation12]
        $region36: #{tpu_custom_call.1} parent=11 // pred_fallthru
          _
        // Predicated region
        $region37: #{tpu_custom_call.1} parent=11 // pred_check
          %p396 = pneg %p199
        $region38: #{tpu_custom_call.1} parent=11 // pred_check_branch
          %398 = sbr.rel (%p396) target = $region40
        $region39: #{tpu_custom_call.1} parent=11 // pred_region
          %s400 = ssub.s32 16, 16
          %401 = vsyncadd [#allocation12], %s400
          %s403 = sshll.u32 [#allocation13], 4
          %s404 = int_to_ptr.vmem [resolvable:$true] %s403
          %406 = dma.hbm_to_vmem [thread:$0]  %s7, 16, %s404, [#allocation12]
        $region40: #{tpu_custom_call.1} parent=11 // pred_fallthru
          _
        // Predicated region
        $region41: #{tpu_custom_call.1} parent=11 // pred_check
          %p407 = pneg %p220
        $region42: #{tpu_custom_call.1} parent=11 // pred_check_branch
          %409 = sbr.rel (%p407) target = $region44
        $region43: #{tpu_custom_call.1} parent=11 // pred_region
          _
        $region44: #{tpu_custom_call.1} parent=11 // pred_fallthru
          _
        // Predicated region
        $region45: #{tpu_custom_call.1} parent=11 // pred_check
          %p410 = pneg %p241
        $region46: #{tpu_custom_call.1} parent=11 // pred_check_branch
          %412 = sbr.rel (%p410) target = $region48
        $region47: #{tpu_custom_call.1} parent=11 // pred_region
          %s414 = ssub.s32 16, 16
          %415 = vsyncadd [#allocation15], %s414
          %s417 = sshll.u32 [#allocation14], 4
          %s418 = int_to_ptr.vmem [resolvable:$true] %s417
          %420 = dma.hbm_to_vmem [thread:$0]  %s9, 16, %s418, [#allocation15]
        $region48: #{tpu_custom_call.1} parent=11 // pred_fallthru
          _
        // Predicated region
        $region49: #{tpu_custom_call.1} parent=11 // pred_check
          %p421 = pneg %p262
        $region50: #{tpu_custom_call.1} parent=11 // pred_check_branch
          %423 = sbr.rel (%p421) target = $region52
        $region51: #{tpu_custom_call.1} parent=11 // pred_region
          _
        $region52: #{tpu_custom_call.1} parent=11 // pred_fallthru
          _
        // Predicated region
        $region53: #{tpu_custom_call.1} parent=11 // pred_check
          %p424 = pneg %p283
        $region54: #{tpu_custom_call.1} parent=11 // pred_check_branch
          %426 = sbr.rel (%p424) target = $region56
        $region55: #{tpu_custom_call.1} parent=11 // pred_region
          _
        $region56: #{tpu_custom_call.1} parent=11 // pred_fallthru
          _
      $region12: #{tpu_custom_call.1} parent=5 // pred_fallthru
        _
      %p427 = scmp.lt.s32.totalorder %s26, 2
      // Predicated region
      $region57: #{tpu_custom_call.1} parent=5 // pred_check
        %p428 = pneg %p427
      $region58: #{tpu_custom_call.1} parent=5 // pred_check_branch
        %430 = sbr.rel (%p428) target = $region60
      $region59: #{tpu_custom_call.1} parent=5 // pred_region
        // Predicated region
        $region61: #{tpu_custom_call.1} parent=59 // pred_check
          %p431 = pneg %p46
        $region62: #{tpu_custom_call.1} parent=59 // pred_check_branch
          %433 = sbr.rel (%p431) target = $region64
        $region63: #{tpu_custom_call.1} parent=59 // pred_region
          %p434 = scmp.lt.s32.totalorder %s26, 1
          %s435 = scalar_select %p434, %s26, 1
          %s436 = smul.addr %s435, 8
          %s437 = smul.addr %s436, 8
          %s438 = scalar_lea.vmem %s0, %s437
        $region64: #{tpu_custom_call.1} parent=59 // pred_fallthru
          _
      $region60: #{tpu_custom_call.1} parent=5 // pred_fallthru
        _
      %p439 = scmp.le.s32.totalorder 1, %s26
      %p440 = scmp.lt.s32.totalorder %s26, 3
      %p441 = pnand %p439, %p440
      %p442 = pneg %p441
      // Predicated region
      $region65: #{tpu_custom_call.1} parent=5 // pred_check
        _
      $region66: #{tpu_custom_call.1} parent=5 // pred_check_branch
        %444 = sbr.rel (%p441) target = $region68
      $region67: #{tpu_custom_call.1} parent=5 // pred_region
        %s445 = ssub.s32 %s26, 1
        // Predicated region
        $region69: #{tpu_custom_call.1} parent=67 // pred_check
          %p446 = pneg %p73
        $region70: #{tpu_custom_call.1} parent=67 // pred_check_branch
          %448 = sbr.rel (%p446) target = $region72
        $region71: #{tpu_custom_call.1} parent=67 // pred_region
          %449 = dma.done [#allocation3], 9216
        $region72: #{tpu_custom_call.1} parent=67 // pred_fallthru
          _
        // Predicated region
        $region73: #{tpu_custom_call.1} parent=67 // pred_check
          %p450 = pneg %p94
        $region74: #{tpu_custom_call.1} parent=67 // pred_check_branch
          %452 = sbr.rel (%p450) target = $region76
        $region75: #{tpu_custom_call.1} parent=67 // pred_region
          %453 = dma.done [#allocation6], 18432
        $region76: #{tpu_custom_call.1} parent=67 // pred_fallthru
          _
        // Predicated region
        $region77: #{tpu_custom_call.1} parent=67 // pred_check
          %p454 = pneg %p115
        $region78: #{tpu_custom_call.1} parent=67 // pred_check_branch
          %456 = sbr.rel (%p454) target = $region80
        $region79: #{tpu_custom_call.1} parent=67 // pred_region
          %457 = dma.done [#allocation6], 16
        $region80: #{tpu_custom_call.1} parent=67 // pred_fallthru
          _
        // Predicated region
        $region81: #{tpu_custom_call.1} parent=67 // pred_check
          %p458 = pneg %p136
        $region82: #{tpu_custom_call.1} parent=67 // pred_check_branch
          %460 = sbr.rel (%p458) target = $region84
        $region83: #{tpu_custom_call.1} parent=67 // pred_region
          %461 = dma.done [#allocation9], 16
        $region84: #{tpu_custom_call.1} parent=67 // pred_fallthru
          _
        // Predicated region
        $region85: #{tpu_custom_call.1} parent=67 // pred_check
          %p462 = pneg %p157
        $region86: #{tpu_custom_call.1} parent=67 // pred_check_branch
          %464 = sbr.rel (%p462) target = $region88
        $region87: #{tpu_custom_call.1} parent=67 // pred_region
          %465 = dma.done [#allocation9], 18432
        $region88: #{tpu_custom_call.1} parent=67 // pred_fallthru
          _
        // Predicated region
        $region89: #{tpu_custom_call.1} parent=67 // pred_check
          %p466 = pneg %p178
        $region90: #{tpu_custom_call.1} parent=67 // pred_check_branch
          %468 = sbr.rel (%p466) target = $region92
        $region91: #{tpu_custom_call.1} parent=67 // pred_region
          %469 = dma.done [#allocation12], 16
        $region92: #{tpu_custom_call.1} parent=67 // pred_fallthru
          _
        // Predicated region
        $region93: #{tpu_custom_call.1} parent=67 // pred_check
          %p470 = pneg %p199
        $region94: #{tpu_custom_call.1} parent=67 // pred_check_branch
          %472 = sbr.rel (%p470) target = $region96
        $region95: #{tpu_custom_call.1} parent=67 // pred_region
          %473 = dma.done [#allocation12], 16
        $region96: #{tpu_custom_call.1} parent=67 // pred_fallthru
          _
        // Predicated region
        $region97: #{tpu_custom_call.1} parent=67 // pred_check
          %p474 = pneg %p241
        $region98: #{tpu_custom_call.1} parent=67 // pred_check_branch
          %476 = sbr.rel (%p474) target = $region100
        $region99: #{tpu_custom_call.1} parent=67 // pred_region
          %477 = dma.done [#allocation15], 16
        $region100: #{tpu_custom_call.1} parent=67 // pred_fallthru
          _
        %p478 = scmp.lt.s32.totalorder %s31, 1
        %s479 = scalar_select %p478, %s31, 1
        %s480 = smul.addr %s479, 8
        %s481 = smul.addr %s480, 8
        %s482 = scalar_lea.vmem %s0, %s481
        %p483 = pneg %p52
        %p484 = pneg %p49
        %p485 = pneg %p73
        %p486 = pneg %p70
        %p487 = pneg %p94
        %p488 = pneg %p91
        %p489 = pneg %p115
        %p490 = pneg %p112
        %p491 = pneg %p136
        %p492 = pneg %p133
        %p493 = pneg %p157
        %p494 = pneg %p154
        %p495 = pneg %p178
        %p496 = pneg %p175
        %p497 = pneg %p199
        %p498 = pneg %p196
        %p499 = pneg %p220
        %p500 = pneg %p217
        %p501 = pneg %p241
        %p502 = pneg %p238
        %p503 = pneg %p262
        %p504 = pneg %p259
        %p505 = pneg %p283
        %p506 = pneg %p280
        %p507 = pneg %p309
        %p508 = pneg %p306
        %s509 = sand.u32 %s296, 1
        %s510 = scalar_lea.sflag [#allocation4], %s509
        %s511 = sand.u32 %s296, 1
        %s512 = smul.addr %s511, 64
        %s513 = scalar_lea.vmem [#allocation16], %s512
        %p514 = scmp.lt.s32.totalorder %s31, 1
        %s515 = scalar_select %p514, %s31, 1
        %s516 = smul.addr %s515, 8
        %s517 = smul.addr %s516, 8
        %s518 = scalar_lea.vmem %s0, %s517
        %v519 = vld [vmem:[%s518] sm:$0xff]
        %v520 = vld [vmem:[%s518 + $0x8] sm:$0xff]
        %v521 = vld [vmem:[%s518 + $0x10] sm:$0xff]
        %v522 = vld [vmem:[%s518 + $0x18] sm:$0xff]
        %v523 = vld [vmem:[%s518 + $0x20] sm:$0xff]
        %v524 = vld [vmem:[%s518 + $0x28] sm:$0xff]
        %v525 = vld [vmem:[%s518 + $0x30] sm:$0xff]
        %v526 = vld [vmem:[%s518 + $0x38] sm:$0xff]
        %v527 = vld [vmem:[#allocation2] sm:$0xff]
        %v528 = vld [vmem:[#allocation2 + $0x8] sm:$0xff]
        %v529 = vld [vmem:[#allocation2 + $0x10] sm:$0xff]
        %v530 = vld [vmem:[#allocation2 + $0x18] sm:$0xff]
        %v531 = vld [vmem:[#allocation2 + $0x20] sm:$0xff]
        %v532 = vld [vmem:[#allocation2 + $0x28] sm:$0xff]
        %v533 = vld [vmem:[#allocation2 + $0x30] sm:$0xff]
        %v534 = vld [vmem:[#allocation2 + $0x38] sm:$0xff]
        %vm535 = vcmask 523264
        %v537 = vsel %vm535, %v527, 0
        %v540 = vsel %vm535, %v528, 0
        %v543 = vsel %vm535, %v529, 0
        %v546 = vsel %vm535, %v530, 0
        %v549 = vsel %vm535, %v531, 0
        %v552 = vsel %vm535, %v532, 0
        %v555 = vsel %vm535, %v533, 0
        %v558 = vsel %vm535, %v534, 0
        %560 = vmatprep.subr.mxu0 0.0
        %561 = vmatpush1.msra.mxu0 %v519
        %562 = vmatprep.subr.mxu0 0.0
        %563 = vmatpush1.msra.mxu0 %v520
        %564 = vmatprep.subr.mxu0 0.0
        %565 = vmatpush1.msra.mxu0 %v521
        %566 = vmatprep.subr.mxu0 0.0
        %567 = vmatpush1.msra.mxu0 %v522
        %568 = vmatprep.subr.mxu0 0.0
        %569 = vmatpush1.msra.mxu0 %v523
        %570 = vmatprep.subr.mxu0 0.0
        %571 = vmatpush1.msra.mxu0 %v524
        %572 = vmatprep.subr.mxu0 0.0
        %573 = vmatpush1.msra.mxu0 %v525
        %574 = vmatprep.subr.mxu0 0.0
        %575 = vmatpush1.msra.mxu0 %v526
        %576 = vmatprep.subr.mxu0 0.0
        %577 = vmatpush1.msra.mxu0 0.0
        %578 = vmatprep.subr.mxu0 0.0
        %579 = vmatpush1.msra.mxu0 0.0
        %580 = vmatprep.subr.mxu0 0.0
        %581 = vmatpush1.msra.mxu0 0.0
        %582 = vmatprep.subr.mxu0 0.0
        %583 = vmatpush1.msra.mxu0 0.0
        %584 = vmatprep.subr.mxu0 0.0
        %585 = vmatpush1.msra.mxu0 0.0
        %586 = vmatprep.subr.mxu0 0.0
        %587 = vmatpush1.msra.mxu0 0.0
        %588 = vmatprep.subr.mxu0 0.0
        %589 = vmatpush1.msra.mxu0 0.0
        %590 = vmatprep.subr.mxu0 0.0
        %591 = vmatpush1.msra.mxu0 0.0
        %592 = vmatprep.subr.mxu0 0.0
        %593 = vmatpush1.msra.mxu0 0.0
        %594 = vmatprep.subr.mxu0 0.0
        %595 = vmatpush1.msra.mxu0 0.0
        %596 = vmatprep.subr.mxu0 0.0
        %597 = vmatpush1.msra.mxu0 0.0
        %598 = vmatprep.subr.mxu0 0.0
        %599 = vmatpush1.msra.mxu0 0.0
        %600 = vmatprep.subr.mxu0 0.0
        %601 = vmatpush1.msra.mxu0 0.0
        %602 = vmatprep.subr.mxu0 0.0
        %603 = vmatpush1.msra.mxu0 0.0
        %604 = vmatprep.subr.mxu0 0.0
        %605 = vmatpush1.msra.mxu0 0.0
        %606 = vmatprep.subr.mxu0 0.0
        %607 = vmatpush1.msra.mxu0 0.0
        %608 = vmatprep.subr.mxu0 0.0
        %609 = vmatpush1.msra.mxu0 0.0
        %610 = vmatprep.subr.mxu0 0.0
        %611 = vmatpush1.msra.mxu0 0.0
        %612 = vmatprep.subr.mxu0 0.0
        %613 = vmatpush1.msra.mxu0 0.0
        %614 = vmatprep.subr.mxu0 0.0
        %615 = vmatpush1.msra.mxu0 0.0
        %616 = vmatprep.subr.mxu0 0.0
        %617 = vmatpush1.msra.mxu0 0.0
        %618 = vmatprep.subr.mxu0 0.0
        %619 = vmatpush1.msra.mxu0 0.0
        %620 = vmatprep.subr.mxu0 0.0
        %621 = vmatpush1.msra.mxu0 0.0
        %622 = vmatprep.subr.mxu0 0.0
        %623 = vmatpush1.msra.mxu0 0.0
        %624 = vmatprep.mubr.f32.mxu0 0.0
        %625 = vmatmul.mubr.f32.gmra.mrb[0].mxu0 %v537
        %v626 = vpop.f32.mrb[0].mxu0
        %v627 = vadd.f32 0.0, %v626
        %v628 = vpop.f32.mrb[0].mxu0
        %629 = vmatprep.mubr.f32.mxu0 0.0
        %630 = vmatmul.mubr.f32.gmra.mrb[0].mxu0 %v540
        %v631 = vpop.f32.mrb[0].mxu0
        %v632 = vadd.f32 0.0, %v631
        %v633 = vpop.f32.mrb[0].mxu0
        %634 = vmatprep.mubr.f32.mxu0 0.0
        %635 = vmatmul.mubr.f32.gmra.mrb[0].mxu0 %v543
        %v636 = vpop.f32.mrb[0].mxu0
        %v637 = vadd.f32 0.0, %v636
        %v638 = vpop.f32.mrb[0].mxu0
        %639 = vmatprep.mubr.f32.mxu0 0.0
        %640 = vmatmul.mubr.f32.gmra.mrb[0].mxu0 %v546
        %v641 = vpop.f32.mrb[0].mxu0
        %v642 = vadd.f32 0.0, %v641
        %v643 = vpop.f32.mrb[0].mxu0
        %644 = vmatprep.mubr.f32.mxu0 0.0
        %645 = vmatmul.mubr.f32.gmra.mrb[0].mxu0 %v549
        %v646 = vpop.f32.mrb[0].mxu0
        %v647 = vadd.f32 0.0, %v646
        %v648 = vpop.f32.mrb[0].mxu0
        %649 = vmatprep.mubr.f32.mxu0 0.0
        %650 = vmatmul.mubr.f32.gmra.mrb[0].mxu0 %v552
        %v651 = vpop.f32.mrb[0].mxu0
        %v652 = vadd.f32 0.0, %v651
        %v653 = vpop.f32.mrb[0].mxu0
        %654 = vmatprep.mubr.f32.mxu0 0.0
        %655 = vmatmul.mubr.f32.gmra.mrb[0].mxu0 %v555
        %v656 = vpop.f32.mrb[0].mxu0
        %v657 = vadd.f32 0.0, %v656
        %v658 = vpop.f32.mrb[0].mxu0
        %659 = vmatprep.mubr.f32.mxu0 0.0
        %660 = vmatmul.mubr.f32.gmra.mrb[0].mxu0 %v558
        %v661 = vpop.f32.mrb[0].mxu0
        %v662 = vadd.f32 0.0, %v661
        %v663 = vpop.f32.mrb[0].mxu0
        %664 = vdwg.mxu0
        %v665 = vld [vmem:[#allocation5] sm:$0xff]
        %v666 = vld [vmem:[#allocation5 + $0x8] sm:$0xff]
        %v667 = vld [vmem:[#allocation5 + $0x10] sm:$0xff]
        %v668 = vld [vmem:[#allocation5 + $0x18] sm:$0xff]
        %v669 = vld [vmem:[#allocation5 + $0x20] sm:$0xff]
        %v670 = vld [vmem:[#allocation5 + $0x28] sm:$0xff]
        %v671 = vld [vmem:[#allocation5 + $0x30] sm:$0xff]
        %v672 = vld [vmem:[#allocation5 + $0x38] sm:$0xff]
        %v673 = vld [vmem:[#allocation5 + $0x40] sm:$0xff]
        %v674 = vld [vmem:[#allocation5 + $0x48] sm:$0xff]
        %v675 = vld [vmem:[#allocation5 + $0x50] sm:$0xff]
        %v676 = vld [vmem:[#allocation5 + $0x58] sm:$0xff]
        %v677 = vld [vmem:[#allocation5 + $0x60] sm:$0xff]
        %v678 = vld [vmem:[#allocation5 + $0x68] sm:$0xff]
        %v679 = vld [vmem:[#allocation5 + $0x70] sm:$0xff]
        %v680 = vld [vmem:[#allocation5 + $0x78] sm:$0xff]
        %s681 = scalar_lea.vmem [#allocation2], 64
        %v682 = vld [vmem:[%s681] sm:$0xff]
        %v683 = vld [vmem:[%s681 + $0x8] sm:$0xff]
        %v684 = vld [vmem:[%s681 + $0x10] sm:$0xff]
        %v685 = vld [vmem:[%s681 + $0x18] sm:$0xff]
        %v686 = vld [vmem:[%s681 + $0x20] sm:$0xff]
        %v687 = vld [vmem:[%s681 + $0x28] sm:$0xff]
        %v688 = vld [vmem:[%s681 + $0x30] sm:$0xff]
        %v689 = vld [vmem:[%s681 + $0x38] sm:$0xff]
        %v691 = vsel %vm535, %v682, 0
        %v694 = vsel %vm535, %v683, 0
        %v697 = vsel %vm535, %v684, 0
        %v700 = vsel %vm535, %v685, 0
        %v703 = vsel %vm535, %v686, 0
        %v706 = vsel %vm535, %v687, 0
        %v709 = vsel %vm535, %v688, 0
        %v712 = vsel %vm535, %v689, 0
        %714 = vmatprep.subr.mxu0 0.0
        %715 = vmatpush1.msra.mxu0 %v519
        %716 = vmatprep.subr.mxu0 0.0
        %717 = vmatpush1.msra.mxu0 %v520
        %718 = vmatprep.subr.mxu0 0.0
        %719 = vmatpush1.msra.mxu0 %v521
        %720 = vmatprep.subr.mxu0 0.0
        %721 = vmatpush1.msra.mxu0 %v522
        %722 = vmatprep.subr.mxu0 0.0
        %723 = vmatpush1.msra.mxu0 %v523
        %724 = vmatprep.subr.mxu0 0.0
        %725 = vmatpush1.msra.mxu0 %v524
        %726 = vmatprep.subr.mxu0 0.0
        %727 = vmatpush1.msra.mxu0 %v525
        %728 = vmatprep.subr.mxu0 0.0
        %729 = vmatpush1.msra.mxu0 %v526
        %730 = vmatprep.subr.mxu0 0.0
        %731 = vmatpush1.msra.mxu0 0.0
        %732 = vmatprep.subr.mxu0 0.0
        %733 = vmatpush1.msra.mxu0 0.0
        %734 = vmatprep.subr.mxu0 0.0
        %735 = vmatpush1.msra.mxu0 0.0
        %736 = vmatprep.subr.mxu0 0.0
        %737 = vmatpush1.msra.mxu0 0.0
        %738 = vmatprep.subr.mxu0 0.0
        %739 = vmatpush1.msra.mxu0 0.0
        %740 = vmatprep.subr.mxu0 0.0
        %741 = vmatpush1.msra.mxu0 0.0
        %742 = vmatprep.subr.mxu0 0.0
        %743 = vmatpush1.msra.mxu0 0.0
        %744 = vmatprep.subr.mxu0 0.0
        %745 = vmatpush1.msra.mxu0 0.0
        %746 = vmatprep.subr.mxu0 0.0
        %747 = vmatpush1.msra.mxu0 0.0
        %748 = vmatprep.subr.mxu0 0.0
        %749 = vmatpush1.msra.mxu0 0.0
        %750 = vmatprep.subr.mxu0 0.0
        %751 = vmatpush1.msra.mxu0 0.0
        %752 = vmatprep.subr.mxu0 0.0
        %753 = vmatpush1.msra.mxu0 0.0
        %754 = vmatprep.subr.mxu0 0.0
        %755 = vmatpush1.msra.mxu0 0.0
        %756 = vmatprep.subr.mxu0 0.0
        %757 = vmatpush1.msra.mxu0 0.0
        %758 = vmatprep.subr.mxu0 0.0
        %759 = vmatpush1.msra.mxu0 0.0
        %760 = vmatprep.subr.mxu0 0.0
        %761 = vmatpush1.msra.mxu0 0.0
        %762 = vmatprep.subr.mxu0 0.0
        %763 = vmatpush1.msra.mxu0 0.0
        %764 = vmatprep.subr.mxu0 0.0
        %765 = vmatpush1.msra.mxu0 0.0
        %766 = vmatprep.subr.mxu0 0.0
        %767 = vmatpush1.msra.mxu0 0.0
        %768 = vmatprep.subr.mxu0 0.0
        %769 = vmatpush1.msra.mxu0 0.0
        %770 = vmatprep.subr.mxu0 0.0
        %771 = vmatpush1.msra.mxu0 0.0
        %772 = vmatprep.subr.mxu0 0.0
        %773 = vmatpush1.msra.mxu0 0.0
        %774 = vmatprep.subr.mxu0 0.0
        %775 = vmatpush1.msra.mxu0 0.0
        %776 = vmatprep.subr.mxu0 0.0
        %777 = vmatpush1.msra.mxu0 0.0
        %778 = vmatprep.mubr.f32.mxu0 0.0
        %779 = vmatmul.mubr.f32.gmra.mrb[0].mxu0 %v691
        %v780 = vpop.f32.mrb[0].mxu0
        %v781 = vadd.f32 0.0, %v780
        %v782 = vpop.f32.mrb[0].mxu0
        %783 = vmatprep.mubr.f32.mxu0 0.0
        %784 = vmatmul.mubr.f32.gmra.mrb[0].mxu0 %v694
        %v785 = vpop.f32.mrb[0].mxu0
        %v786 = vadd.f32 0.0, %v785
        %v787 = vpop.f32.mrb[0].mxu0
        %788 = vmatprep.mubr.f32.mxu0 0.0
        %789 = vmatmul.mubr.f32.gmra.mrb[0].mxu0 %v697
        %v790 = vpop.f32.mrb[0].mxu0
        %v791 = vadd.f32 0.0, %v790
        %v792 = vpop.f32.mrb[0].mxu0
        %793 = vmatprep.mubr.f32.mxu0 0.0
        %794 = vmatmul.mubr.f32.gmra.mrb[0].mxu0 %v700
        %v795 = vpop.f32.mrb[0].mxu0
        %v796 = vadd.f32 0.0, %v795
        %v797 = vpop.f32.mrb[0].mxu0
        %798 = vmatprep.mubr.f32.mxu0 0.0
        %799 = vmatmul.mubr.f32.gmra.mrb[0].mxu0 %v703
        %v800 = vpop.f32.mrb[0].mxu0
        %v801 = vadd.f32 0.0, %v800
        %v802 = vpop.f32.mrb[0].mxu0
        %803 = vmatprep.mubr.f32.mxu0 0.0
        %804 = vmatmul.mubr.f32.gmra.mrb[0].mxu0 %v706
        %v805 = vpop.f32.mrb[0].mxu0
        %v806 = vadd.f32 0.0, %v805
        %v807 = vpop.f32.mrb[0].mxu0
        %808 = vmatprep.mubr.f32.mxu0 0.0
        %809 = vmatmul.mubr.f32.gmra.mrb[0].mxu0 %v709
        %v810 = vpop.f32.mrb[0].mxu0
        %v811 = vadd.f32 0.0, %v810
        %v812 = vpop.f32.mrb[0].mxu0
        %813 = vmatprep.mubr.f32.mxu0 0.0
        %814 = vmatmul.mubr.f32.gmra.mrb[0].mxu0 %v712
        %v815 = vpop.f32.mrb[0].mxu0
        %v816 = vadd.f32 0.0, %v815
        %v817 = vpop.f32.mrb[0].mxu0
        %818 = vdwg.mxu0
        %s819 = scalar_lea.vmem [#allocation5], 128
        %v820 = vld [vmem:[%s819] sm:$0xff]
        %v821 = vld [vmem:[%s819 + $0x8] sm:$0xff]
        %v822 = vld [vmem:[%s819 + $0x10] sm:$0xff]
        %v823 = vld [vmem:[%s819 + $0x18] sm:$0xff]
        %v824 = vld [vmem:[%s819 + $0x20] sm:$0xff]
        %v825 = vld [vmem:[%s819 + $0x28] sm:$0xff]
        %v826 = vld [vmem:[%s819 + $0x30] sm:$0xff]
        %v827 = vld [vmem:[%s819 + $0x38] sm:$0xff]
        %v828 = vld [vmem:[%s819 + $0x40] sm:$0xff]
        %v829 = vld [vmem:[%s819 + $0x48] sm:$0xff]
        %v830 = vld [vmem:[%s819 + $0x50] sm:$0xff]
        %v831 = vld [vmem:[%s819 + $0x58] sm:$0xff]
        %v832 = vld [vmem:[%s819 + $0x60] sm:$0xff]
        %v833 = vld [vmem:[%s819 + $0x68] sm:$0xff]
        %v834 = vld [vmem:[%s819 + $0x70] sm:$0xff]
        %v835 = vld [vmem:[%s819 + $0x78] sm:$0xff]
        %836 = vmatprep.subr.mxu0 0.0
        %837 = vmatpush1.msra.mxu0 %v820
        %838 = vmatprep.subr.mxu0 0.0
        %839 = vmatpush1.msra.mxu0 %v821
        %840 = vmatprep.subr.mxu0 0.0
        %841 = vmatpush1.msra.mxu0 %v822
        %842 = vmatprep.subr.mxu0 0.0
        %843 = vmatpush1.msra.mxu0 %v823
        %844 = vmatprep.subr.mxu0 0.0
        %845 = vmatpush1.msra.mxu0 %v824
        %846 = vmatprep.subr.mxu0 0.0
        %847 = vmatpush1.msra.mxu0 %v825
        %848 = vmatprep.subr.mxu0 0.0
        %849 = vmatpush1.msra.mxu0 %v826
        %850 = vmatprep.subr.mxu0 0.0
        %851 = vmatpush1.msra.mxu0 %v827
        %852 = vmatprep.subr.mxu0 0.0
        %853 = vmatpush1.msra.mxu0 %v828
        %854 = vmatprep.subr.mxu0 0.0
        %855 = vmatpush1.msra.mxu0 %v829
        %856 = vmatprep.subr.mxu0 0.0
        %857 = vmatpush1.msra.mxu0 %v830
        %858 = vmatprep.subr.mxu0 0.0
        %859 = vmatpush1.msra.mxu0 %v831
        %860 = vmatprep.subr.mxu0 0.0
        %861 = vmatpush1.msra.mxu0 %v832
        %862 = vmatprep.subr.mxu0 0.0
        %863 = vmatpush1.msra.mxu0 %v833
        %864 = vmatprep.subr.mxu0 0.0
        %865 = vmatpush1.msra.mxu0 %v834
        %866 = vmatprep.subr.mxu0 0.0
        %867 = vmatpush1.msra.mxu0 %v835
        %868 = vmatprep.subr.mxu0 0.0
        %869 = vmatpush1.msra.mxu0 0.0
        %870 = vmatprep.subr.mxu0 0.0
        %871 = vmatpush1.msra.mxu0 0.0
        %872 = vmatprep.subr.mxu0 0.0
        %873 = vmatpush1.msra.mxu0 0.0
        %874 = vmatprep.subr.mxu0 0.0
        %875 = vmatpush1.msra.mxu0 0.0
        %876 = vmatprep.subr.mxu0 0.0
        %877 = vmatpush1.msra.mxu0 0.0
        %878 = vmatprep.subr.mxu0 0.0
        %879 = vmatpush1.msra.mxu0 0.0
        %880 = vmatprep.subr.mxu0 0.0
        %881 = vmatpush1.msra.mxu0 0.0
        %882 = vmatprep.subr.mxu0 0.0
        %883 = vmatpush1.msra.mxu0 0.0
        %884 = vmatprep.subr.mxu0 0.0
        %885 = vmatpush1.msra.mxu0 0.0
        %886 = vmatprep.subr.mxu0 0.0
        %887 = vmatpush1.msra.mxu0 0.0
        %888 = vmatprep.subr.mxu0 0.0
        %889 = vmatpush1.msra.mxu0 0.0
        %890 = vmatprep.subr.mxu0 0.0
        %891 = vmatpush1.msra.mxu0 0.0
        %892 = vmatprep.subr.mxu0 0.0
        %893 = vmatpush1.msra.mxu0 0.0
        %894 = vmatprep.subr.mxu0 0.0
        %895 = vmatpush1.msra.mxu0 0.0
        %896 = vmatprep.subr.mxu0 0.0
        %897 = vmatpush1.msra.mxu0 0.0
        %898 = vmatprep.subr.mxu0 0.0
        %899 = vmatpush1.msra.mxu0 0.0
        %900 = vmatprep.mubr.f32.mxu0 0.0
        %901 = vmatmul.mubr.f32.gmra.mrb[0].mxu0 %v781
        %v902 = vpop.f32.mrb[0].mxu0
        %v903 = vadd.f32 0.0, %v902
        %v904 = vpop.f32.mrb[0].mxu0
        %905 = vmatprep.mubr.f32.mxu0 0.0
        %906 = vmatmul.mubr.f32.gmra.mrb[0].mxu0 %v786
        %v907 = vpop.f32.mrb[0].mxu0
        %v908 = vadd.f32 0.0, %v907
        %v909 = vpop.f32.mrb[0].mxu0
        %910 = vmatprep.mubr.f32.mxu0 0.0
        %911 = vmatmul.mubr.f32.gmra.mrb[0].mxu0 %v791
        %v912 = vpop.f32.mrb[0].mxu0
        %v913 = vadd.f32 0.0, %v912
        %v914 = vpop.f32.mrb[0].mxu0
        %915 = vmatprep.mubr.f32.mxu0 0.0
        %916 = vmatmul.mubr.f32.gmra.mrb[0].mxu0 %v796
        %v917 = vpop.f32.mrb[0].mxu0
        %v918 = vadd.f32 0.0, %v917
        %v919 = vpop.f32.mrb[0].mxu0
        %920 = vmatprep.mubr.f32.mxu0 0.0
        %921 = vmatmul.mubr.f32.gmra.mrb[0].mxu0 %v801
        %v922 = vpop.f32.mrb[0].mxu0
        %v923 = vadd.f32 0.0, %v922
        %v924 = vpop.f32.mrb[0].mxu0
        %925 = vmatprep.mubr.f32.mxu0 0.0
        %926 = vmatmul.mubr.f32.gmra.mrb[0].mxu0 %v806
        %v927 = vpop.f32.mrb[0].mxu0
        %v928 = vadd.f32 0.0, %v927
        %v929 = vpop.f32.mrb[0].mxu0
        %930 = vmatprep.mubr.f32.mxu0 0.0
        %931 = vmatmul.mubr.f32.gmra.mrb[0].mxu0 %v811
        %v932 = vpop.f32.mrb[0].mxu0
        %v933 = vadd.f32 0.0, %v932
        %v934 = vpop.f32.mrb[0].mxu0
        %935 = vmatprep.mubr.f32.mxu0 0.0
        %936 = vmatmul.mubr.f32.gmra.mrb[0].mxu0 %v816
        %v937 = vpop.f32.mrb[0].mxu0
        %v938 = vadd.f32 0.0, %v937
        %v939 = vpop.f32.mrb[0].mxu0
        %940 = vdwg.mxu0
        %941 = vmatprep.subr.mxu0 0.0
        %942 = vmatpush1.msra.mxu0 %v665
        %943 = vmatprep.subr.mxu0 0.0
        %944 = vmatpush1.msra.mxu0 %v666
        %945 = vmatprep.subr.mxu0 0.0
        %946 = vmatpush1.msra.mxu0 %v667
        %947 = vmatprep.subr.mxu0 0.0
        %948 = vmatpush1.msra.mxu0 %v668
        %949 = vmatprep.subr.mxu0 0.0
        %950 = vmatpush1.msra.mxu0 %v669
        %951 = vmatprep.subr.mxu0 0.0
        %952 = vmatpush1.msra.mxu0 %v670
        %953 = vmatprep.subr.mxu0 0.0
        %954 = vmatpush1.msra.mxu0 %v671
        %955 = vmatprep.subr.mxu0 0.0
        %956 = vmatpush1.msra.mxu0 %v672
        %957 = vmatprep.subr.mxu0 0.0
        %958 = vmatpush1.msra.mxu0 %v673
        %959 = vmatprep.subr.mxu0 0.0
        %960 = vmatpush1.msra.mxu0 %v674
        %961 = vmatprep.subr.mxu0 0.0
        %962 = vmatpush1.msra.mxu0 %v675
        %963 = vmatprep.subr.mxu0 0.0
        %964 = vmatpush1.msra.mxu0 %v676
        %965 = vmatprep.subr.mxu0 0.0
        %966 = vmatpush1.msra.mxu0 %v677
        %967 = vmatprep.subr.mxu0 0.0
        %968 = vmatpush1.msra.mxu0 %v678
        %969 = vmatprep.subr.mxu0 0.0
        %970 = vmatpush1.msra.mxu0 %v679
        %971 = vmatprep.subr.mxu0 0.0
        %972 = vmatpush1.msra.mxu0 %v680
        %973 = vmatprep.subr.mxu0 0.0
        %974 = vmatpush1.msra.mxu0 0.0
        %975 = vmatprep.subr.mxu0 0.0
        %976 = vmatpush1.msra.mxu0 0.0
        %977 = vmatprep.subr.mxu0 0.0
        %978 = vmatpush1.msra.mxu0 0.0
        %979 = vmatprep.subr.mxu0 0.0
        %980 = vmatpush1.msra.mxu0 0.0
        %981 = vmatprep.subr.mxu0 0.0
        %982 = vmatpush1.msra.mxu0 0.0
        %983 = vmatprep.subr.mxu0 0.0
        %984 = vmatpush1.msra.mxu0 0.0
        %985 = vmatprep.subr.mxu0 0.0
        %986 = vmatpush1.msra.mxu0 0.0
        %987 = vmatprep.subr.mxu0 0.0
        %988 = vmatpush1.msra.mxu0 0.0
        %989 = vmatprep.subr.mxu0 0.0
        %990 = vmatpush1.msra.mxu0 0.0
        %991 = vmatprep.subr.mxu0 0.0
        %992 = vmatpush1.msra.mxu0 0.0
        %993 = vmatprep.subr.mxu0 0.0
        %994 = vmatpush1.msra.mxu0 0.0
        %995 = vmatprep.subr.mxu0 0.0
        %996 = vmatpush1.msra.mxu0 0.0
        %997 = vmatprep.subr.mxu0 0.0
        %998 = vmatpush1.msra.mxu0 0.0
        %999 = vmatprep.subr.mxu0 0.0
        %1000 = vmatpush1.msra.mxu0 0.0
        %1001 = vmatprep.subr.mxu0 0.0
        %1002 = vmatpush1.msra.mxu0 0.0
        %1003 = vmatprep.subr.mxu0 0.0
        %1004 = vmatpush1.msra.mxu0 0.0
        %1005 = vmatprep.mubr.f32.mxu0 0.0
        %1006 = vmatmul.mubr.f32.gmra.mrb[0].mxu0 %v627
        %v1007 = vpop.f32.mrb[0].mxu0
        %v1008 = vadd.f32 %v903, %v1007
        %v1009 = vpop.f32.mrb[0].mxu0
        %1010 = vmatprep.mubr.f32.mxu0 0.0
        %1011 = vmatmul.mubr.f32.gmra.mrb[0].mxu0 %v632
        %v1012 = vpop.f32.mrb[0].mxu0
        %v1013 = vadd.f32 %v908, %v1012
        %v1014 = vpop.f32.mrb[0].mxu0
        %1015 = vmatprep.mubr.f32.mxu0 0.0
        %1016 = vmatmul.mubr.f32.gmra.mrb[0].mxu0 %v637
        %v1017 = vpop.f32.mrb[0].mxu0
        %v1018 = vadd.f32 %v913, %v1017
        %v1019 = vpop.f32.mrb[0].mxu0
        %1020 = vmatprep.mubr.f32.mxu0 0.0
        %1021 = vmatmul.mubr.f32.gmra.mrb[0].mxu0 %v642
        %v1022 = vpop.f32.mrb[0].mxu0
        %v1023 = vadd.f32 %v918, %v1022
        %v1024 = vpop.f32.mrb[0].mxu0
        %1025 = vmatprep.mubr.f32.mxu0 0.0
        %1026 = vmatmul.mubr.f32.gmra.mrb[0].mxu0 %v647
        %v1027 = vpop.f32.mrb[0].mxu0
        %v1028 = vadd.f32 %v923, %v1027
        %v1029 = vpop.f32.mrb[0].mxu0
        %1030 = vmatprep.mubr.f32.mxu0 0.0
        %1031 = vmatmul.mubr.f32.gmra.mrb[0].mxu0 %v652
        %v1032 = vpop.f32.mrb[0].mxu0
        %v1033 = vadd.f32 %v928, %v1032
        %v1034 = vpop.f32.mrb[0].mxu0
        %1035 = vmatprep.mubr.f32.mxu0 0.0
        %1036 = vmatmul.mubr.f32.gmra.mrb[0].mxu0 %v657
        %v1037 = vpop.f32.mrb[0].mxu0
        %v1038 = vadd.f32 %v933, %v1037
        %v1039 = vpop.f32.mrb[0].mxu0
        %1040 = vmatprep.mubr.f32.mxu0 0.0
        %1041 = vmatmul.mubr.f32.gmra.mrb[0].mxu0 %v662
        %v1042 = vpop.f32.mrb[0].mxu0
        %v1043 = vadd.f32 %v938, %v1042
        %v1044 = vpop.f32.mrb[0].mxu0
        %1045 = vdwg.mxu0
        %s1046 = scalar_lea.vmem [#allocation2], 128
        %v1047 = vld [vmem:[%s1046] sm:$0xff]
        %v1048 = vld [vmem:[%s1046 + $0x8] sm:$0xff]
        %v1049 = vld [vmem:[%s1046 + $0x10] sm:$0xff]
        %v1050 = vld [vmem:[%s1046 + $0x18] sm:$0xff]
        %v1051 = vld [vmem:[%s1046 + $0x20] sm:$0xff]
        %v1052 = vld [vmem:[%s1046 + $0x28] sm:$0xff]
        %v1053 = vld [vmem:[%s1046 + $0x30] sm:$0xff]
        %v1054 = vld [vmem:[%s1046 + $0x38] sm:$0xff]
        %v1056 = vsel %vm535, %v1047, 0
        %v1059 = vsel %vm535, %v1048, 0
        %v1062 = vsel %vm535, %v1049, 0
        %v1065 = vsel %vm535, %v1050, 0
        %v1068 = vsel %vm535, %v1051, 0
        %v1071 = vsel %vm535, %v1052, 0
        %v1074 = vsel %vm535, %v1053, 0
        %v1077 = vsel %vm535, %v1054, 0
        %1079 = vmatprep.subr.mxu0 0.0
        %1080 = vmatpush1.msra.mxu0 %v519
        %1081 = vmatprep.subr.mxu0 0.0
        %1082 = vmatpush1.msra.mxu0 %v520
        %1083 = vmatprep.subr.mxu0 0.0
        %1084 = vmatpush1.msra.mxu0 %v521
        %1085 = vmatprep.subr.mxu0 0.0
        %1086 = vmatpush1.msra.mxu0 %v522
        %1087 = vmatprep.subr.mxu0 0.0
        %1088 = vmatpush1.msra.mxu0 %v523
        %1089 = vmatprep.subr.mxu0 0.0
        %1090 = vmatpush1.msra.mxu0 %v524
        %1091 = vmatprep.subr.mxu0 0.0
        %1092 = vmatpush1.msra.mxu0 %v525
        %1093 = vmatprep.subr.mxu0 0.0
        %1094 = vmatpush1.msra.mxu0 %v526
        %1095 = vmatprep.subr.mxu0 0.0
        %1096 = vmatpush1.msra.mxu0 0.0
        %1097 = vmatprep.subr.mxu0 0.0
        %1098 = vmatpush1.msra.mxu0 0.0
        %1099 = vmatprep.subr.mxu0 0.0
        %1100 = vmatpush1.msra.mxu0 0.0
        %1101 = vmatprep.subr.mxu0 0.0
        %1102 = vmatpush1.msra.mxu0 0.0
        %1103 = vmatprep.subr.mxu0 0.0
        %1104 = vmatpush1.msra.mxu0 0.0
        %1105 = vmatprep.subr.mxu0 0.0
        %1106 = vmatpush1.msra.mxu0 0.0
        %1107 = vmatprep.subr.mxu0 0.0
        %1108 = vmatpush1.msra.mxu0 0.0
        %1109 = vmatprep.subr.mxu0 0.0
        %1110 = vmatpush1.msra.mxu0 0.0
        %1111 = vmatprep.subr.mxu0 0.0
        %1112 = vmatpush1.msra.mxu0 0.0
        %1113 = vmatprep.subr.mxu0 0.0
        %1114 = vmatpush1.msra.mxu0 0.0
        %1115 = vmatprep.subr.mxu0 0.0
        %1116 = vmatpush1.msra.mxu0 0.0
        %1117 = vmatprep.subr.mxu0 0.0
        %1118 = vmatpush1.msra.mxu0 0.0
        %1119 = vmatprep.subr.mxu0 0.0
        %1120 = vmatpush1.msra.mxu0 0.0
        %1121 = vmatprep.subr.mxu0 0.0
        %1122 = vmatpush1.msra.mxu0 0.0
        %1123 = vmatprep.subr.mxu0 0.0
        %1124 = vmatpush1.msra.mxu0 0.0
        %1125 = vmatprep.subr.mxu0 0.0
        %1126 = vmatpush1.msra.mxu0 0.0
        %1127 = vmatprep.subr.mxu0 0.0
        %1128 = vmatpush1.msra.mxu0 0.0
        %1129 = vmatprep.subr.mxu0 0.0
        %1130 = vmatpush1.msra.mxu0 0.0
        %1131 = vmatprep.subr.mxu0 0.0
        %1132 = vmatpush1.msra.mxu0 0.0
        %1133 = vmatprep.subr.mxu0 0.0
        %1134 = vmatpush1.msra.mxu0 0.0
        %1135 = vmatprep.subr.mxu0 0.0
        %1136 = vmatpush1.msra.mxu0 0.0
        %1137 = vmatprep.subr.mxu0 0.0
        %1138 = vmatpush1.msra.mxu0 0.0
        %1139 = vmatprep.subr.mxu0 0.0
        %1140 = vmatpush1.msra.mxu0 0.0
        %1141 = vmatprep.subr.mxu0 0.0
        %1142 = vmatpush1.msra.mxu0 0.0
        %1143 = vmatprep.mubr.f32.mxu0 0.0
        %1144 = vmatmul.mubr.f32.gmra.mrb[0].mxu0 %v1056
        %v1145 = vpop.f32.mrb[0].mxu0
        %v1146 = vadd.f32 0.0, %v1145
        %v1147 = vpop.f32.mrb[0].mxu0
        %1148 = vmatprep.mubr.f32.mxu0 0.0
        %1149 = vmatmul.mubr.f32.gmra.mrb[0].mxu0 %v1059
        %v1150 = vpop.f32.mrb[0].mxu0
        %v1151 = vadd.f32 0.0, %v1150
        %v1152 = vpop.f32.mrb[0].mxu0
        %1153 = vmatprep.mubr.f32.mxu0 0.0
        %1154 = vmatmul.mubr.f32.gmra.mrb[0].mxu0 %v1062
        %v1155 = vpop.f32.mrb[0].mxu0
        %v1156 = vadd.f32 0.0, %v1155
        %v1157 = vpop.f32.mrb[0].mxu0
        %1158 = vmatprep.mubr.f32.mxu0 0.0
        %1159 = vmatmul.mubr.f32.gmra.mrb[0].mxu0 %v1065
        %v1160 = vpop.f32.mrb[0].mxu0
        %v1161 = vadd.f32 0.0, %v1160
        %v1162 = vpop.f32.mrb[0].mxu0
        %1163 = vmatprep.mubr.f32.mxu0 0.0
        %1164 = vmatmul.mubr.f32.gmra.mrb[0].mxu0 %v1068
        %v1165 = vpop.f32.mrb[0].mxu0
        %v1166 = vadd.f32 0.0, %v1165
        %v1167 = vpop.f32.mrb[0].mxu0
        %1168 = vmatprep.mubr.f32.mxu0 0.0
        %1169 = vmatmul.mubr.f32.gmra.mrb[0].mxu0 %v1071
        %v1170 = vpop.f32.mrb[0].mxu0
        %v1171 = vadd.f32 0.0, %v1170
        %v1172 = vpop.f32.mrb[0].mxu0
        %1173 = vmatprep.mubr.f32.mxu0 0.0
        %1174 = vmatmul.mubr.f32.gmra.mrb[0].mxu0 %v1074
        %v1175 = vpop.f32.mrb[0].mxu0
        %v1176 = vadd.f32 0.0, %v1175
        %v1177 = vpop.f32.mrb[0].mxu0
        %1178 = vmatprep.mubr.f32.mxu0 0.0
        %1179 = vmatmul.mubr.f32.gmra.mrb[0].mxu0 %v1077
        %v1180 = vpop.f32.mrb[0].mxu0
        %v1181 = vadd.f32 0.0, %v1180
        %v1182 = vpop.f32.mrb[0].mxu0
        %1183 = vdwg.mxu0
        %s1184 = scalar_lea.vmem [#allocation5], 256
        %v1185 = vld [vmem:[%s1184] sm:$0xff]
        %v1186 = vld [vmem:[%s1184 + $0x8] sm:$0xff]
        %v1187 = vld [vmem:[%s1184 + $0x10] sm:$0xff]
        %v1188 = vld [vmem:[%s1184 + $0x18] sm:$0xff]
        %v1189 = vld [vmem:[%s1184 + $0x20] sm:$0xff]
        %v1190 = vld [vmem:[%s1184 + $0x28] sm:$0xff]
        %v1191 = vld [vmem:[%s1184 + $0x30] sm:$0xff]
        %v1192 = vld [vmem:[%s1184 + $0x38] sm:$0xff]
        %v1193 = vld [vmem:[%s1184 + $0x40] sm:$0xff]
        %v1194 = vld [vmem:[%s1184 + $0x48] sm:$0xff]
        %v1195 = vld [vmem:[%s1184 + $0x50] sm:$0xff]
        %v1196 = vld [vmem:[%s1184 + $0x58] sm:$0xff]
        %v1197 = vld [vmem:[%s1184 + $0x60] sm:$0xff]
        %v1198 = vld [vmem:[%s1184 + $0x68] sm:$0xff]
        %v1199 = vld [vmem:[%s1184 + $0x70] sm:$0xff]
        %v1200 = vld [vmem:[%s1184 + $0x78] sm:$0xff]
        %1201 = vmatprep.subr.mxu0 0.0
        %1202 = vmatpush1.msra.mxu0 %v1185
        %1203 = vmatprep.subr.mxu0 0.0
        %1204 = vmatpush1.msra.mxu0 %v1186
        %1205 = vmatprep.subr.mxu0 0.0
        %1206 = vmatpush1.msra.mxu0 %v1187
        %1207 = vmatprep.subr.mxu0 0.0
        %1208 = vmatpush1.msra.mxu0 %v1188
        %1209 = vmatprep.subr.mxu0 0.0
        %1210 = vmatpush1.msra.mxu0 %v1189
        %1211 = vmatprep.subr.mxu0 0.0
        %1212 = vmatpush1.msra.mxu0 %v1190
        %1213 = vmatprep.subr.mxu0 0.0
        %1214 = vmatpush1.msra.mxu0 %v1191
        %1215 = vmatprep.subr.mxu0 0.0
        %1216 = vmatpush1.msra.mxu0 %v1192
        %1217 = vmatprep.subr.mxu0 0.0
        %1218 = vmatpush1.msra.mxu0 %v1193
        %1219 = vmatprep.subr.mxu0 0.0
        %1220 = vmatpush1.msra.mxu0 %v1194
        %1221 = vmatprep.subr.mxu0 0.0
        %1222 = vmatpush1.msra.mxu0 %v1195
        %1223 = vmatprep.subr.mxu0 0.0
        %1224 = vmatpush1.msra.mxu0 %v1196
        %1225 = vmatprep.subr.mxu0 0.0
        %1226 = vmatpush1.msra.mxu0 %v1197
        %1227 = vmatprep.subr.mxu0 0.0
        %1228 = vmatpush1.msra.mxu0 %v1198
        %1229 = vmatprep.subr.mxu0 0.0
        %1230 = vmatpush1.msra.mxu0 %v1199
        %1231 = vmatprep.subr.mxu0 0.0
        %1232 = vmatpush1.msra.mxu0 %v1200
        %1233 = vmatprep.subr.mxu0 0.0
        %1234 = vmatpush1.msra.mxu0 0.0
        %1235 = vmatprep.subr.mxu0 0.0
        %1236 = vmatpush1.msra.mxu0 0.0
        %1237 = vmatprep.subr.mxu0 0.0
        %1238 = vmatpush1.msra.mxu0 0.0
        %1239 = vmatprep.subr.mxu0 0.0
        %1240 = vmatpush1.msra.mxu0 0.0
        %1241 = vmatprep.subr.mxu0 0.0
        %1242 = vmatpush1.msra.mxu0 0.0
        %1243 = vmatprep.subr.mxu0 0.0
        %1244 = vmatpush1.msra.mxu0 0.0
        %1245 = vmatprep.subr.mxu0 0.0
        %1246 = vmatpush1.msra.mxu0 0.0
        %1247 = vmatprep.subr.mxu0 0.0
        %1248 = vmatpush1.msra.mxu0 0.0
        %1249 = vmatprep.subr.mxu0 0.0
        %1250 = vmatpush1.msra.mxu0 0.0
        %1251 = vmatprep.subr.mxu0 0.0
        %1252 = vmatpush1.msra.mxu0 0.0
        %1253 = vmatprep.subr.mxu0 0.0
        %1254 = vmatpush1.msra.mxu0 0.0
        %1255 = vmatprep.subr.mxu0 0.0
        %1256 = vmatpush1.msra.mxu0 0.0
        %1257 = vmatprep.subr.mxu0 0.0
        %1258 = vmatpush1.msra.mxu0 0.0
        %1259 = vmatprep.subr.mxu0 0.0
        %1260 = vmatpush1.msra.mxu0 0.0
        %1261 = vmatprep.subr.mxu0 0.0
        %1262 = vmatpush1.msra.mxu0 0.0
        %1263 = vmatprep.subr.mxu0 0.0
        %1264 = vmatpush1.msra.mxu0 0.0
        %1265 = vmatprep.mubr.f32.mxu0 0.0
        %1266 = vmatmul.mubr.f32.gmra.mrb[0].mxu0 %v1146
        %v1267 = vpop.f32.mrb[0].mxu0
        %v1268 = vadd.f32 0.0, %v1267
        %v1269 = vpop.f32.mrb[0].mxu0
        %1270 = vmatprep.mubr.f32.mxu0 0.0
        %1271 = vmatmul.mubr.f32.gmra.mrb[0].mxu0 %v1151
        %v1272 = vpop.f32.mrb[0].mxu0
        %v1273 = vadd.f32 0.0, %v1272
        %v1274 = vpop.f32.mrb[0].mxu0
        %1275 = vmatprep.mubr.f32.mxu0 0.0
        %1276 = vmatmul.mubr.f32.gmra.mrb[0].mxu0 %v1156
        %v1277 = vpop.f32.mrb[0].mxu0
        %v1278 = vadd.f32 0.0, %v1277
        %v1279 = vpop.f32.mrb[0].mxu0
        %1280 = vmatprep.mubr.f32.mxu0 0.0
        %1281 = vmatmul.mubr.f32.gmra.mrb[0].mxu0 %v1161
        %v1282 = vpop.f32.mrb[0].mxu0
        %v1283 = vadd.f32 0.0, %v1282
        %v1284 = vpop.f32.mrb[0].mxu0
        %1285 = vmatprep.mubr.f32.mxu0 0.0
        %1286 = vmatmul.mubr.f32.gmra.mrb[0].mxu0 %v1166
        %v1287 = vpop.f32.mrb[0].mxu0
        %v1288 = vadd.f32 0.0, %v1287
        %v1289 = vpop.f32.mrb[0].mxu0
        %1290 = vmatprep.mubr.f32.mxu0 0.0
        %1291 = vmatmul.mubr.f32.gmra.mrb[0].mxu0 %v1171
        %v1292 = vpop.f32.mrb[0].mxu0
        %v1293 = vadd.f32 0.0, %v1292
        %v1294 = vpop.f32.mrb[0].mxu0
        %1295 = vmatprep.mubr.f32.mxu0 0.0
        %1296 = vmatmul.mubr.f32.gmra.mrb[0].mxu0 %v1176
        %v1297 = vpop.f32.mrb[0].mxu0
        %v1298 = vadd.f32 0.0, %v1297
        %v1299 = vpop.f32.mrb[0].mxu0
        %1300 = vmatprep.mubr.f32.mxu0 0.0
        %1301 = vmatmul.mubr.f32.gmra.mrb[0].mxu0 %v1181
        %v1302 = vpop.f32.mrb[0].mxu0
        %v1303 = vadd.f32 0.0, %v1302
        %v1304 = vpop.f32.mrb[0].mxu0
        %1305 = vdwg.mxu0
        %v1306 = vadd.f32 %v1008, %v1268
        %v1307 = vadd.f32 %v1013, %v1273
        %v1308 = vadd.f32 %v1018, %v1278
        %v1309 = vadd.f32 %v1023, %v1283
        %v1310 = vadd.f32 %v1028, %v1288
        %v1311 = vadd.f32 %v1033, %v1293
        %v1312 = vadd.f32 %v1038, %v1298
        %v1313 = vadd.f32 %v1043, %v1303
        %s1314 = scalar_lea.vmem [#allocation2], 192
        %v1315 = vld [vmem:[%s1314] sm:$0xff]
        %v1316 = vld [vmem:[%s1314 + $0x8] sm:$0xff]
        %v1317 = vld [vmem:[%s1314 + $0x10] sm:$0xff]
        %v1318 = vld [vmem:[%s1314 + $0x18] sm:$0xff]
        %v1319 = vld [vmem:[%s1314 + $0x20] sm:$0xff]
        %v1320 = vld [vmem:[%s1314 + $0x28] sm:$0xff]
        %v1321 = vld [vmem:[%s1314 + $0x30] sm:$0xff]
        %v1322 = vld [vmem:[%s1314 + $0x38] sm:$0xff]
        %v1324 = vsel %vm535, %v1315, 0
        %v1327 = vsel %vm535, %v1316, 0
        %v1330 = vsel %vm535, %v1317, 0
        %v1333 = vsel %vm535, %v1318, 0
        %v1336 = vsel %vm535, %v1319, 0
        %v1339 = vsel %vm535, %v1320, 0
        %v1342 = vsel %vm535, %v1321, 0
        %v1345 = vsel %vm535, %v1322, 0
        %1347 = vmatprep.subr.mxu0 0.0
        %1348 = vmatpush1.msra.mxu0 %v519
        %1349 = vmatprep.subr.mxu0 0.0
        %1350 = vmatpush1.msra.mxu0 %v520
        %1351 = vmatprep.subr.mxu0 0.0
        %1352 = vmatpush1.msra.mxu0 %v521
        %1353 = vmatprep.subr.mxu0 0.0
        %1354 = vmatpush1.msra.mxu0 %v522
        %1355 = vmatprep.subr.mxu0 0.0
        %1356 = vmatpush1.msra.mxu0 %v523
        %1357 = vmatprep.subr.mxu0 0.0
        %1358 = vmatpush1.msra.mxu0 %v524
        %1359 = vmatprep.subr.mxu0 0.0
        %1360 = vmatpush1.msra.mxu0 %v525
        %1361 = vmatprep.subr.mxu0 0.0
        %1362 = vmatpush1.msra.mxu0 %v526
        %1363 = vmatprep.subr.mxu0 0.0
        %1364 = vmatpush1.msra.mxu0 0.0
        %1365 = vmatprep.subr.mxu0 0.0
        %1366 = vmatpush1.msra.mxu0 0.0
        %1367 = vmatprep.subr.mxu0 0.0
        %1368 = vmatpush1.msra.mxu0 0.0
        %1369 = vmatprep.subr.mxu0 0.0
        %1370 = vmatpush1.msra.mxu0 0.0
        %1371 = vmatprep.subr.mxu0 0.0
        %1372 = vmatpush1.msra.mxu0 0.0
        %1373 = vmatprep.subr.mxu0 0.0
        %1374 = vmatpush1.msra.mxu0 0.0
        %1375 = vmatprep.subr.mxu0 0.0
        %1376 = vmatpush1.msra.mxu0 0.0
        %1377 = vmatprep.subr.mxu0 0.0
        %1378 = vmatpush1.msra.mxu0 0.0
        %1379 = vmatprep.subr.mxu0 0.0
        %1380 = vmatpush1.msra.mxu0 0.0
        %1381 = vmatprep.subr.mxu0 0.0
        %1382 = vmatpush1.msra.mxu0 0.0
        %1383 = vmatprep.subr.mxu0 0.0
        %1384 = vmatpush1.msra.mxu0 0.0
        %1385 = vmatprep.subr.mxu0 0.0
        %1386 = vmatpush1.msra.mxu0 0.0
        %1387 = vmatprep.subr.mxu0 0.0
        %1388 = vmatpush1.msra.mxu0 0.0
        %1389 = vmatprep.subr.mxu0 0.0
        %1390 = vmatpush1.msra.mxu0 0.0
        %1391 = vmatprep.subr.mxu0 0.0
        %1392 = vmatpush1.msra.mxu0 0.0
        %1393 = vmatprep.subr.mxu0 0.0
        %1394 = vmatpush1.msra.mxu0 0.0
        %1395 = vmatprep.subr.mxu0 0.0
        %1396 = vmatpush1.msra.mxu0 0.0
        %1397 = vmatprep.subr.mxu0 0.0
        %1398 = vmatpush1.msra.mxu0 0.0
        %1399 = vmatprep.subr.mxu0 0.0
        %1400 = vmatpush1.msra.mxu0 0.0
        %1401 = vmatprep.subr.mxu0 0.0
        %1402 = vmatpush1.msra.mxu0 0.0
        %1403 = vmatprep.subr.mxu0 0.0
        %1404 = vmatpush1.msra.mxu0 0.0
        %1405 = vmatprep.subr.mxu0 0.0
        %1406 = vmatpush1.msra.mxu0 0.0
        %1407 = vmatprep.subr.mxu0 0.0
        %1408 = vmatpush1.msra.mxu0 0.0
        %1409 = vmatprep.subr.mxu0 0.0
        %1410 = vmatpush1.msra.mxu0 0.0
        %1411 = vmatprep.mubr.f32.mxu0 0.0
        %1412 = vmatmul.mubr.f32.gmra.mrb[0].mxu0 %v1324
        %v1413 = vpop.f32.mrb[0].mxu0
        %v1414 = vadd.f32 0.0, %v1413
        %v1415 = vpop.f32.mrb[0].mxu0
        %1416 = vmatprep.mubr.f32.mxu0 0.0
        %1417 = vmatmul.mubr.f32.gmra.mrb[0].mxu0 %v1327
        %v1418 = vpop.f32.mrb[0].mxu0
        %v1419 = vadd.f32 0.0, %v1418
        %v1420 = vpop.f32.mrb[0].mxu0
        %1421 = vmatprep.mubr.f32.mxu0 0.0
        %1422 = vmatmul.mubr.f32.gmra.mrb[0].mxu0 %v1330
        %v1423 = vpop.f32.mrb[0].mxu0
        %v1424 = vadd.f32 0.0, %v1423
        %v1425 = vpop.f32.mrb[0].mxu0
        %1426 = vmatprep.mubr.f32.mxu0 0.0
        %1427 = vmatmul.mubr.f32.gmra.mrb[0].mxu0 %v1333
        %v1428 = vpop.f32.mrb[0].mxu0
        %v1429 = vadd.f32 0.0, %v1428
        %v1430 = vpop.f32.mrb[0].mxu0
        %1431 = vmatprep.mubr.f32.mxu0 0.0
        %1432 = vmatmul.mubr.f32.gmra.mrb[0].mxu0 %v1336
        %v1433 = vpop.f32.mrb[0].mxu0
        %v1434 = vadd.f32 0.0, %v1433
        %v1435 = vpop.f32.mrb[0].mxu0
        %1436 = vmatprep.mubr.f32.mxu0 0.0
        %1437 = vmatmul.mubr.f32.gmra.mrb[0].mxu0 %v1339
        %v1438 = vpop.f32.mrb[0].mxu0
        %v1439 = vadd.f32 0.0, %v1438
        %v1440 = vpop.f32.mrb[0].mxu0
        %1441 = vmatprep.mubr.f32.mxu0 0.0
        %1442 = vmatmul.mubr.f32.gmra.mrb[0].mxu0 %v1342
        %v1443 = vpop.f32.mrb[0].mxu0
        %v1444 = vadd.f32 0.0, %v1443
        %v1445 = vpop.f32.mrb[0].mxu0
        %1446 = vmatprep.mubr.f32.mxu0 0.0
        %1447 = vmatmul.mubr.f32.gmra.mrb[0].mxu0 %v1345
        %v1448 = vpop.f32.mrb[0].mxu0
        %v1449 = vadd.f32 0.0, %v1448
        %v1450 = vpop.f32.mrb[0].mxu0
        %1451 = vdwg.mxu0
        %s1452 = scalar_lea.vmem [#allocation5], 384
        %v1453 = vld [vmem:[%s1452] sm:$0xff]
        %v1454 = vld [vmem:[%s1452 + $0x8] sm:$0xff]
        %v1455 = vld [vmem:[%s1452 + $0x10] sm:$0xff]
        %v1456 = vld [vmem:[%s1452 + $0x18] sm:$0xff]
        %v1457 = vld [vmem:[%s1452 + $0x20] sm:$0xff]
        %v1458 = vld [vmem:[%s1452 + $0x28] sm:$0xff]
        %v1459 = vld [vmem:[%s1452 + $0x30] sm:$0xff]
        %v1460 = vld [vmem:[%s1452 + $0x38] sm:$0xff]
        %v1461 = vld [vmem:[%s1452 + $0x40] sm:$0xff]
        %v1462 = vld [vmem:[%s1452 + $0x48] sm:$0xff]
        %v1463 = vld [vmem:[%s1452 + $0x50] sm:$0xff]
        %v1464 = vld [vmem:[%s1452 + $0x58] sm:$0xff]
        %v1465 = vld [vmem:[%s1452 + $0x60] sm:$0xff]
        %v1466 = vld [vmem:[%s1452 + $0x68] sm:$0xff]
        %v1467 = vld [vmem:[%s1452 + $0x70] sm:$0xff]
        %v1468 = vld [vmem:[%s1452 + $0x78] sm:$0xff]
        %1469 = vmatprep.subr.mxu0 0.0
        %1470 = vmatpush1.msra.mxu0 %v1453
        %1471 = vmatprep.subr.mxu0 0.0
        %1472 = vmatpush1.msra.mxu0 %v1454
        %1473 = vmatprep.subr.mxu0 0.0
        %1474 = vmatpush1.msra.mxu0 %v1455
        %1475 = vmatprep.subr.mxu0 0.0
        %1476 = vmatpush1.msra.mxu0 %v1456
        %1477 = vmatprep.subr.mxu0 0.0
        %1478 = vmatpush1.msra.mxu0 %v1457
        %1479 = vmatprep.subr.mxu0 0.0
        %1480 = vmatpush1.msra.mxu0 %v1458
        %1481 = vmatprep.subr.mxu0 0.0
        %1482 = vmatpush1.msra.mxu0 %v1459
        %1483 = vmatprep.subr.mxu0 0.0
        %1484 = vmatpush1.msra.mxu0 %v1460
        %1485 = vmatprep.subr.mxu0 0.0
        %1486 = vmatpush1.msra.mxu0 %v1461
        %1487 = vmatprep.subr.mxu0 0.0
        %1488 = vmatpush1.msra.mxu0 %v1462
        %1489 = vmatprep.subr.mxu0 0.0
        %1490 = vmatpush1.msra.mxu0 %v1463
        %1491 = vmatprep.subr.mxu0 0.0
        %1492 = vmatpush1.msra.mxu0 %v1464
        %1493 = vmatprep.subr.mxu0 0.0
        %1494 = vmatpush1.msra.mxu0 %v1465
        %1495 = vmatprep.subr.mxu0 0.0
        %1496 = vmatpush1.msra.mxu0 %v1466
        %1497 = vmatprep.subr.mxu0 0.0
        %1498 = vmatpush1.msra.mxu0 %v1467
        %1499 = vmatprep.subr.mxu0 0.0
        %1500 = vmatpush1.msra.mxu0 %v1468
        %1501 = vmatprep.subr.mxu0 0.0
        %1502 = vmatpush1.msra.mxu0 0.0
        %1503 = vmatprep.subr.mxu0 0.0
        %1504 = vmatpush1.msra.mxu0 0.0
        %1505 = vmatprep.subr.mxu0 0.0
        %1506 = vmatpush1.msra.mxu0 0.0
        %1507 = vmatprep.subr.mxu0 0.0
        %1508 = vmatpush1.msra.mxu0 0.0
        %1509 = vmatprep.subr.mxu0 0.0
        %1510 = vmatpush1.msra.mxu0 0.0
        %1511 = vmatprep.subr.mxu0 0.0
        %1512 = vmatpush1.msra.mxu0 0.0
        %1513 = vmatprep.subr.mxu0 0.0
        %1514 = vmatpush1.msra.mxu0 0.0
        %1515 = vmatprep.subr.mxu0 0.0
        %1516 = vmatpush1.msra.mxu0 0.0
        %1517 = vmatprep.subr.mxu0 0.0
        %1518 = vmatpush1.msra.mxu0 0.0
        %1519 = vmatprep.subr.mxu0 0.0
        %1520 = vmatpush1.msra.mxu0 0.0
        %1521 = vmatprep.subr.mxu0 0.0
        %1522 = vmatpush1.msra.mxu0 0.0
        %1523 = vmatprep.subr.mxu0 0.0
        %1524 = vmatpush1.msra.mxu0 0.0
        %1525 = vmatprep.subr.mxu0 0.0
        %1526 = vmatpush1.msra.mxu0 0.0
        %1527 = vmatprep.subr.mxu0 0.0
        %1528 = vmatpush1.msra.mxu0 0.0
        %1529 = vmatprep.subr.mxu0 0.0
        %1530 = vmatpush1.msra.mxu0 0.0
        %1531 = vmatprep.subr.mxu0 0.0
        %1532 = vmatpush1.msra.mxu0 0.0
        %1533 = vmatprep.mubr.f32.mxu0 0.0
        %1534 = vmatmul.mubr.f32.gmra.mrb[0].mxu0 %v1414
        %v1535 = vpop.f32.mrb[0].mxu0
        %v1536 = vadd.f32 0.0, %v1535
        %v1537 = vpop.f32.mrb[0].mxu0
        %1538 = vmatprep.mubr.f32.mxu0 0.0
        %1539 = vmatmul.mubr.f32.gmra.mrb[0].mxu0 %v1419
        %v1540 = vpop.f32.mrb[0].mxu0
        %v1541 = vadd.f32 0.0, %v1540
        %v1542 = vpop.f32.mrb[0].mxu0
        %1543 = vmatprep.mubr.f32.mxu0 0.0
        %1544 = vmatmul.mubr.f32.gmra.mrb[0].mxu0 %v1424
        %v1545 = vpop.f32.mrb[0].mxu0
        %v1546 = vadd.f32 0.0, %v1545
        %v1547 = vpop.f32.mrb[0].mxu0
        %1548 = vmatprep.mubr.f32.mxu0 0.0
        %1549 = vmatmul.mubr.f32.gmra.mrb[0].mxu0 %v1429
        %v1550 = vpop.f32.mrb[0].mxu0
        %v1551 = vadd.f32 0.0, %v1550
        %v1552 = vpop.f32.mrb[0].mxu0
        %1553 = vmatprep.mubr.f32.mxu0 0.0
        %1554 = vmatmul.mubr.f32.gmra.mrb[0].mxu0 %v1434
        %v1555 = vpop.f32.mrb[0].mxu0
        %v1556 = vadd.f32 0.0, %v1555
        %v1557 = vpop.f32.mrb[0].mxu0
        %1558 = vmatprep.mubr.f32.mxu0 0.0
        %1559 = vmatmul.mubr.f32.gmra.mrb[0].mxu0 %v1439
        %v1560 = vpop.f32.mrb[0].mxu0
        %v1561 = vadd.f32 0.0, %v1560
        %v1562 = vpop.f32.mrb[0].mxu0
        %1563 = vmatprep.mubr.f32.mxu0 0.0
        %1564 = vmatmul.mubr.f32.gmra.mrb[0].mxu0 %v1444
        %v1565 = vpop.f32.mrb[0].mxu0
        %v1566 = vadd.f32 0.0, %v1565
        %v1567 = vpop.f32.mrb[0].mxu0
        %1568 = vmatprep.mubr.f32.mxu0 0.0
        %1569 = vmatmul.mubr.f32.gmra.mrb[0].mxu0 %v1449
        %v1570 = vpop.f32.mrb[0].mxu0
        %v1571 = vadd.f32 0.0, %v1570
        %v1572 = vpop.f32.mrb[0].mxu0
        %1573 = vdwg.mxu0
        %v1574 = vadd.f32 %v1306, %v1536
        %v1575 = vadd.f32 %v1307, %v1541
        %v1576 = vadd.f32 %v1308, %v1546
        %v1577 = vadd.f32 %v1309, %v1551
        %v1578 = vadd.f32 %v1310, %v1556
        %v1579 = vadd.f32 %v1311, %v1561
        %v1580 = vadd.f32 %v1312, %v1566
        %v1581 = vadd.f32 %v1313, %v1571
        %s1582 = scalar_lea.vmem [#allocation5], 512
        %v1583 = vld [vmem:[%s1582] sm:$0xff]
        %v1584 = vld [vmem:[%s1582 + $0x8] sm:$0xff]
        %v1585 = vld [vmem:[%s1582 + $0x10] sm:$0xff]
        %v1586 = vld [vmem:[%s1582 + $0x18] sm:$0xff]
        %v1587 = vld [vmem:[%s1582 + $0x20] sm:$0xff]
        %v1588 = vld [vmem:[%s1582 + $0x28] sm:$0xff]
        %v1589 = vld [vmem:[%s1582 + $0x30] sm:$0xff]
        %v1590 = vld [vmem:[%s1582 + $0x38] sm:$0xff]
        %v1591 = vld [vmem:[%s1582 + $0x40] sm:$0xff]
        %v1592 = vld [vmem:[%s1582 + $0x48] sm:$0xff]
        %v1593 = vld [vmem:[%s1582 + $0x50] sm:$0xff]
        %v1594 = vld [vmem:[%s1582 + $0x58] sm:$0xff]
        %v1595 = vld [vmem:[%s1582 + $0x60] sm:$0xff]
        %v1596 = vld [vmem:[%s1582 + $0x68] sm:$0xff]
        %v1597 = vld [vmem:[%s1582 + $0x70] sm:$0xff]
        %v1598 = vld [vmem:[%s1582 + $0x78] sm:$0xff]
        %1599 = vmatprep.subr.mxu0 0.0
        %1600 = vmatpush1.msra.mxu0 %v1583
        %1601 = vmatprep.subr.mxu0 0.0
        %1602 = vmatpush1.msra.mxu0 %v1584
        %1603 = vmatprep.subr.mxu0 0.0
        %1604 = vmatpush1.msra.mxu0 %v1585
        %1605 = vmatprep.subr.mxu0 0.0
        %1606 = vmatpush1.msra.mxu0 %v1586
        %1607 = vmatprep.subr.mxu0 0.0
        %1608 = vmatpush1.msra.mxu0 %v1587
        %1609 = vmatprep.subr.mxu0 0.0
        %1610 = vmatpush1.msra.mxu0 %v1588
        %1611 = vmatprep.subr.mxu0 0.0
        %1612 = vmatpush1.msra.mxu0 %v1589
        %1613 = vmatprep.subr.mxu0 0.0
        %1614 = vmatpush1.msra.mxu0 %v1590
        %1615 = vmatprep.subr.mxu0 0.0
        %1616 = vmatpush1.msra.mxu0 %v1591
        %1617 = vmatprep.subr.mxu0 0.0
        %1618 = vmatpush1.msra.mxu0 %v1592
        %1619 = vmatprep.subr.mxu0 0.0
        %1620 = vmatpush1.msra.mxu0 %v1593
        %1621 = vmatprep.subr.mxu0 0.0
        %1622 = vmatpush1.msra.mxu0 %v1594
        %1623 = vmatprep.subr.mxu0 0.0
        %1624 = vmatpush1.msra.mxu0 %v1595
        %1625 = vmatprep.subr.mxu0 0.0
        %1626 = vmatpush1.msra.mxu0 %v1596
        %1627 = vmatprep.subr.mxu0 0.0
        %1628 = vmatpush1.msra.mxu0 %v1597
        %1629 = vmatprep.subr.mxu0 0.0
        %1630 = vmatpush1.msra.mxu0 %v1598
        %1631 = vmatprep.subr.mxu0 0.0
        %1632 = vmatpush1.msra.mxu0 0.0
        %1633 = vmatprep.subr.mxu0 0.0
        %1634 = vmatpush1.msra.mxu0 0.0
        %1635 = vmatprep.subr.mxu0 0.0
        %1636 = vmatpush1.msra.mxu0 0.0
        %1637 = vmatprep.subr.mxu0 0.0
        %1638 = vmatpush1.msra.mxu0 0.0
        %1639 = vmatprep.subr.mxu0 0.0
        %1640 = vmatpush1.msra.mxu0 0.0
        %1641 = vmatprep.subr.mxu0 0.0
        %1642 = vmatpush1.msra.mxu0 0.0
        %1643 = vmatprep.subr.mxu0 0.0
        %1644 = vmatpush1.msra.mxu0 0.0
        %1645 = vmatprep.subr.mxu0 0.0
        %1646 = vmatpush1.msra.mxu0 0.0
        %1647 = vmatprep.subr.mxu0 0.0
        %1648 = vmatpush1.msra.mxu0 0.0
        %1649 = vmatprep.subr.mxu0 0.0
        %1650 = vmatpush1.msra.mxu0 0.0
        %1651 = vmatprep.subr.mxu0 0.0
        %1652 = vmatpush1.msra.mxu0 0.0
        %1653 = vmatprep.subr.mxu0 0.0
        %1654 = vmatpush1.msra.mxu0 0.0
        %1655 = vmatprep.subr.mxu0 0.0
        %1656 = vmatpush1.msra.mxu0 0.0
        %1657 = vmatprep.subr.mxu0 0.0
        %1658 = vmatpush1.msra.mxu0 0.0
        %1659 = vmatprep.subr.mxu0 0.0
        %1660 = vmatpush1.msra.mxu0 0.0
        %1661 = vmatprep.subr.mxu0 0.0
        %1662 = vmatpush1.msra.mxu0 0.0
        %1663 = vmatprep.mubr.f32.mxu0 0.0
        %1664 = vmatmul.mubr.f32.gmra.mrb[0].mxu0 %v519
        %v1665 = vpop.f32.mrb[0].mxu0
        %v1666 = vadd.f32 0.0, %v1665
        %v1667 = vpop.f32.mrb[0].mxu0
        %1668 = vmatprep.mubr.f32.mxu0 0.0
        %1669 = vmatmul.mubr.f32.gmra.mrb[0].mxu0 %v520
        %v1670 = vpop.f32.mrb[0].mxu0
        %v1671 = vadd.f32 0.0, %v1670
        %v1672 = vpop.f32.mrb[0].mxu0
        %1673 = vmatprep.mubr.f32.mxu0 0.0
        %1674 = vmatmul.mubr.f32.gmra.mrb[0].mxu0 %v521
        %v1675 = vpop.f32.mrb[0].mxu0
        %v1676 = vadd.f32 0.0, %v1675
        %v1677 = vpop.f32.mrb[0].mxu0
        %1678 = vmatprep.mubr.f32.mxu0 0.0
        %1679 = vmatmul.mubr.f32.gmra.mrb[0].mxu0 %v522
        %v1680 = vpop.f32.mrb[0].mxu0
        %v1681 = vadd.f32 0.0, %v1680
        %v1682 = vpop.f32.mrb[0].mxu0
        %1683 = vmatprep.mubr.f32.mxu0 0.0
        %1684 = vmatmul.mubr.f32.gmra.mrb[0].mxu0 %v523
        %v1685 = vpop.f32.mrb[0].mxu0
        %v1686 = vadd.f32 0.0, %v1685
        %v1687 = vpop.f32.mrb[0].mxu0
        %1688 = vmatprep.mubr.f32.mxu0 0.0
        %1689 = vmatmul.mubr.f32.gmra.mrb[0].mxu0 %v524
        %v1690 = vpop.f32.mrb[0].mxu0
        %v1691 = vadd.f32 0.0, %v1690
        %v1692 = vpop.f32.mrb[0].mxu0
        %1693 = vmatprep.mubr.f32.mxu0 0.0
        %1694 = vmatmul.mubr.f32.gmra.mrb[0].mxu0 %v525
        %v1695 = vpop.f32.mrb[0].mxu0
        %v1696 = vadd.f32 0.0, %v1695
        %v1697 = vpop.f32.mrb[0].mxu0
        %1698 = vmatprep.mubr.f32.mxu0 0.0
        %1699 = vmatmul.mubr.f32.gmra.mrb[0].mxu0 %v526
        %v1700 = vpop.f32.mrb[0].mxu0
        %v1701 = vadd.f32 0.0, %v1700
        %v1702 = vpop.f32.mrb[0].mxu0
        %1703 = vdwg.mxu0
        %v1704 = vadd.f32 %v1574, %v1666
        %v1705 = vadd.f32 %v1575, %v1671
        %v1706 = vadd.f32 %v1576, %v1676
        %v1707 = vadd.f32 %v1577, %v1681
        %v1708 = vadd.f32 %v1578, %v1686
        %v1709 = vadd.f32 %v1579, %v1691
        %v1710 = vadd.f32 %v1580, %v1696
        %v1711 = vadd.f32 %v1581, %v1701
        %s1712 = scalar_lea.vmem [#allocation2], 320
        %v1713 = vld [vmem:[%s1712] sm:$0xff]
        %v1714 = vld [vmem:[%s1712 + $0x8] sm:$0xff]
        %v1715 = vld [vmem:[%s1712 + $0x10] sm:$0xff]
        %v1716 = vld [vmem:[%s1712 + $0x18] sm:$0xff]
        %v1717 = vld [vmem:[%s1712 + $0x20] sm:$0xff]
        %v1718 = vld [vmem:[%s1712 + $0x28] sm:$0xff]
        %v1719 = vld [vmem:[%s1712 + $0x30] sm:$0xff]
        %v1720 = vld [vmem:[%s1712 + $0x38] sm:$0xff]
        %v1722 = vsel %vm535, %v1713, 0
        %v1725 = vsel %vm535, %v1714, 0
        %v1728 = vsel %vm535, %v1715, 0
        %v1731 = vsel %vm535, %v1716, 0
        %v1734 = vsel %vm535, %v1717, 0
        %v1737 = vsel %vm535, %v1718, 0
        %v1740 = vsel %vm535, %v1719, 0
        %v1743 = vsel %vm535, %v1720, 0
        %1745 = vmatprep.subr.mxu0 0.0
        %1746 = vmatpush1.msra.mxu0 %v519
        %1747 = vmatprep.subr.mxu0 0.0
        %1748 = vmatpush1.msra.mxu0 %v520
        %1749 = vmatprep.subr.mxu0 0.0
        %1750 = vmatpush1.msra.mxu0 %v521
        %1751 = vmatprep.subr.mxu0 0.0
        %1752 = vmatpush1.msra.mxu0 %v522
        %1753 = vmatprep.subr.mxu0 0.0
        %1754 = vmatpush1.msra.mxu0 %v523
        %1755 = vmatprep.subr.mxu0 0.0
        %1756 = vmatpush1.msra.mxu0 %v524
        %1757 = vmatprep.subr.mxu0 0.0
        %1758 = vmatpush1.msra.mxu0 %v525
        %1759 = vmatprep.subr.mxu0 0.0
        %1760 = vmatpush1.msra.mxu0 %v526
        %1761 = vmatprep.subr.mxu0 0.0
        %1762 = vmatpush1.msra.mxu0 0.0
        %1763 = vmatprep.subr.mxu0 0.0
        %1764 = vmatpush1.msra.mxu0 0.0
        %1765 = vmatprep.subr.mxu0 0.0
        %1766 = vmatpush1.msra.mxu0 0.0
        %1767 = vmatprep.subr.mxu0 0.0
        %1768 = vmatpush1.msra.mxu0 0.0
        %1769 = vmatprep.subr.mxu0 0.0
        %1770 = vmatpush1.msra.mxu0 0.0
        %1771 = vmatprep.subr.mxu0 0.0
        %1772 = vmatpush1.msra.mxu0 0.0
        %1773 = vmatprep.subr.mxu0 0.0
        %1774 = vmatpush1.msra.mxu0 0.0
        %1775 = vmatprep.subr.mxu0 0.0
        %1776 = vmatpush1.msra.mxu0 0.0
        %1777 = vmatprep.subr.mxu0 0.0
        %1778 = vmatpush1.msra.mxu0 0.0
        %1779 = vmatprep.subr.mxu0 0.0
        %1780 = vmatpush1.msra.mxu0 0.0
        %1781 = vmatprep.subr.mxu0 0.0
        %1782 = vmatpush1.msra.mxu0 0.0
        %1783 = vmatprep.subr.mxu0 0.0
        %1784 = vmatpush1.msra.mxu0 0.0
        %1785 = vmatprep.subr.mxu0 0.0
        %1786 = vmatpush1.msra.mxu0 0.0
        %1787 = vmatprep.subr.mxu0 0.0
        %1788 = vmatpush1.msra.mxu0 0.0
        %1789 = vmatprep.subr.mxu0 0.0
        %1790 = vmatpush1.msra.mxu0 0.0
        %1791 = vmatprep.subr.mxu0 0.0
        %1792 = vmatpush1.msra.mxu0 0.0
        %1793 = vmatprep.subr.mxu0 0.0
        %1794 = vmatpush1.msra.mxu0 0.0
        %1795 = vmatprep.subr.mxu0 0.0
        %1796 = vmatpush1.msra.mxu0 0.0
        %1797 = vmatprep.subr.mxu0 0.0
        %1798 = vmatpush1.msra.mxu0 0.0
        %1799 = vmatprep.subr.mxu0 0.0
        %1800 = vmatpush1.msra.mxu0 0.0
        %1801 = vmatprep.subr.mxu0 0.0
        %1802 = vmatpush1.msra.mxu0 0.0
        %1803 = vmatprep.subr.mxu0 0.0
        %1804 = vmatpush1.msra.mxu0 0.0
        %1805 = vmatprep.subr.mxu0 0.0
        %1806 = vmatpush1.msra.mxu0 0.0
        %1807 = vmatprep.subr.mxu0 0.0
        %1808 = vmatpush1.msra.mxu0 0.0
        %1809 = vmatprep.mubr.f32.mxu0 0.0
        %1810 = vmatmul.mubr.f32.gmra.mrb[0].mxu0 %v1722
        %v1811 = vpop.f32.mrb[0].mxu0
        %v1812 = vadd.f32 0.0, %v1811
        %v1813 = vpop.f32.mrb[0].mxu0
        %1814 = vmatprep.mubr.f32.mxu0 0.0
        %1815 = vmatmul.mubr.f32.gmra.mrb[0].mxu0 %v1725
        %v1816 = vpop.f32.mrb[0].mxu0
        %v1817 = vadd.f32 0.0, %v1816
        %v1818 = vpop.f32.mrb[0].mxu0
        %1819 = vmatprep.mubr.f32.mxu0 0.0
        %1820 = vmatmul.mubr.f32.gmra.mrb[0].mxu0 %v1728
        %v1821 = vpop.f32.mrb[0].mxu0
        %v1822 = vadd.f32 0.0, %v1821
        %v1823 = vpop.f32.mrb[0].mxu0
        %1824 = vmatprep.mubr.f32.mxu0 0.0
        %1825 = vmatmul.mubr.f32.gmra.mrb[0].mxu0 %v1731
        %v1826 = vpop.f32.mrb[0].mxu0
        %v1827 = vadd.f32 0.0, %v1826
        %v1828 = vpop.f32.mrb[0].mxu0
        %1829 = vmatprep.mubr.f32.mxu0 0.0
        %1830 = vmatmul.mubr.f32.gmra.mrb[0].mxu0 %v1734
        %v1831 = vpop.f32.mrb[0].mxu0
        %v1832 = vadd.f32 0.0, %v1831
        %v1833 = vpop.f32.mrb[0].mxu0
        %1834 = vmatprep.mubr.f32.mxu0 0.0
        %1835 = vmatmul.mubr.f32.gmra.mrb[0].mxu0 %v1737
        %v1836 = vpop.f32.mrb[0].mxu0
        %v1837 = vadd.f32 0.0, %v1836
        %v1838 = vpop.f32.mrb[0].mxu0
        %1839 = vmatprep.mubr.f32.mxu0 0.0
        %1840 = vmatmul.mubr.f32.gmra.mrb[0].mxu0 %v1740
        %v1841 = vpop.f32.mrb[0].mxu0
        %v1842 = vadd.f32 0.0, %v1841
        %v1843 = vpop.f32.mrb[0].mxu0
        %1844 = vmatprep.mubr.f32.mxu0 0.0
        %1845 = vmatmul.mubr.f32.gmra.mrb[0].mxu0 %v1743
        %v1846 = vpop.f32.mrb[0].mxu0
        %v1847 = vadd.f32 0.0, %v1846
        %v1848 = vpop.f32.mrb[0].mxu0
        %1849 = vdwg.mxu0
        %s1850 = scalar_lea.vmem [#allocation5], 640
        %v1851 = vld [vmem:[%s1850] sm:$0xff]
        %v1852 = vld [vmem:[%s1850 + $0x8] sm:$0xff]
        %v1853 = vld [vmem:[%s1850 + $0x10] sm:$0xff]
        %v1854 = vld [vmem:[%s1850 + $0x18] sm:$0xff]
        %v1855 = vld [vmem:[%s1850 + $0x20] sm:$0xff]
        %v1856 = vld [vmem:[%s1850 + $0x28] sm:$0xff]
        %v1857 = vld [vmem:[%s1850 + $0x30] sm:$0xff]
        %v1858 = vld [vmem:[%s1850 + $0x38] sm:$0xff]
        %v1859 = vld [vmem:[%s1850 + $0x40] sm:$0xff]
        %v1860 = vld [vmem:[%s1850 + $0x48] sm:$0xff]
        %v1861 = vld [vmem:[%s1850 + $0x50] sm:$0xff]
        %v1862 = vld [vmem:[%s1850 + $0x58] sm:$0xff]
        %v1863 = vld [vmem:[%s1850 + $0x60] sm:$0xff]
        %v1864 = vld [vmem:[%s1850 + $0x68] sm:$0xff]
        %v1865 = vld [vmem:[%s1850 + $0x70] sm:$0xff]
        %v1866 = vld [vmem:[%s1850 + $0x78] sm:$0xff]
        %1867 = vmatprep.subr.mxu0 0.0
        %1868 = vmatpush1.msra.mxu0 %v1851
        %1869 = vmatprep.subr.mxu0 0.0
        %1870 = vmatpush1.msra.mxu0 %v1852
        %1871 = vmatprep.subr.mxu0 0.0
        %1872 = vmatpush1.msra.mxu0 %v1853
        %1873 = vmatprep.subr.mxu0 0.0
        %1874 = vmatpush1.msra.mxu0 %v1854
        %1875 = vmatprep.subr.mxu0 0.0
        %1876 = vmatpush1.msra.mxu0 %v1855
        %1877 = vmatprep.subr.mxu0 0.0
        %1878 = vmatpush1.msra.mxu0 %v1856
        %1879 = vmatprep.subr.mxu0 0.0
        %1880 = vmatpush1.msra.mxu0 %v1857
        %1881 = vmatprep.subr.mxu0 0.0
        %1882 = vmatpush1.msra.mxu0 %v1858
        %1883 = vmatprep.subr.mxu0 0.0
        %1884 = vmatpush1.msra.mxu0 %v1859
        %1885 = vmatprep.subr.mxu0 0.0
        %1886 = vmatpush1.msra.mxu0 %v1860
        %1887 = vmatprep.subr.mxu0 0.0
        %1888 = vmatpush1.msra.mxu0 %v1861
        %1889 = vmatprep.subr.mxu0 0.0
        %1890 = vmatpush1.msra.mxu0 %v1862
        %1891 = vmatprep.subr.mxu0 0.0
        %1892 = vmatpush1.msra.mxu0 %v1863
        %1893 = vmatprep.subr.mxu0 0.0
        %1894 = vmatpush1.msra.mxu0 %v1864
        %1895 = vmatprep.subr.mxu0 0.0
        %1896 = vmatpush1.msra.mxu0 %v1865
        %1897 = vmatprep.subr.mxu0 0.0
        %1898 = vmatpush1.msra.mxu0 %v1866
        %1899 = vmatprep.subr.mxu0 0.0
        %1900 = vmatpush1.msra.mxu0 0.0
        %1901 = vmatprep.subr.mxu0 0.0
        %1902 = vmatpush1.msra.mxu0 0.0
        %1903 = vmatprep.subr.mxu0 0.0
        %1904 = vmatpush1.msra.mxu0 0.0
        %1905 = vmatprep.subr.mxu0 0.0
        %1906 = vmatpush1.msra.mxu0 0.0
        %1907 = vmatprep.subr.mxu0 0.0
        %1908 = vmatpush1.msra.mxu0 0.0
        %1909 = vmatprep.subr.mxu0 0.0
        %1910 = vmatpush1.msra.mxu0 0.0
        %1911 = vmatprep.subr.mxu0 0.0
        %1912 = vmatpush1.msra.mxu0 0.0
        %1913 = vmatprep.subr.mxu0 0.0
        %1914 = vmatpush1.msra.mxu0 0.0
        %1915 = vmatprep.subr.mxu0 0.0
        %1916 = vmatpush1.msra.mxu0 0.0
        %1917 = vmatprep.subr.mxu0 0.0
        %1918 = vmatpush1.msra.mxu0 0.0
        %1919 = vmatprep.subr.mxu0 0.0
        %1920 = vmatpush1.msra.mxu0 0.0
        %1921 = vmatprep.subr.mxu0 0.0
        %1922 = vmatpush1.msra.mxu0 0.0
        %1923 = vmatprep.subr.mxu0 0.0
        %1924 = vmatpush1.msra.mxu0 0.0
        %1925 = vmatprep.subr.mxu0 0.0
        %1926 = vmatpush1.msra.mxu0 0.0
        %1927 = vmatprep.subr.mxu0 0.0
        %1928 = vmatpush1.msra.mxu0 0.0
        %1929 = vmatprep.subr.mxu0 0.0
        %1930 = vmatpush1.msra.mxu0 0.0
        %1931 = vmatprep.mubr.f32.mxu0 0.0
        %1932 = vmatmul.mubr.f32.gmra.mrb[0].mxu0 %v1812
        %v1933 = vpop.f32.mrb[0].mxu0
        %v1934 = vadd.f32 0.0, %v1933
        %v1935 = vpop.f32.mrb[0].mxu0
        %1936 = vmatprep.mubr.f32.mxu0 0.0
        %1937 = vmatmul.mubr.f32.gmra.mrb[0].mxu0 %v1817
        %v1938 = vpop.f32.mrb[0].mxu0
        %v1939 = vadd.f32 0.0, %v1938
        %v1940 = vpop.f32.mrb[0].mxu0
        %1941 = vmatprep.mubr.f32.mxu0 0.0
        %1942 = vmatmul.mubr.f32.gmra.mrb[0].mxu0 %v1822
        %v1943 = vpop.f32.mrb[0].mxu0
        %v1944 = vadd.f32 0.0, %v1943
        %v1945 = vpop.f32.mrb[0].mxu0
        %1946 = vmatprep.mubr.f32.mxu0 0.0
        %1947 = vmatmul.mubr.f32.gmra.mrb[0].mxu0 %v1827
        %v1948 = vpop.f32.mrb[0].mxu0
        %v1949 = vadd.f32 0.0, %v1948
        %v1950 = vpop.f32.mrb[0].mxu0
        %1951 = vmatprep.mubr.f32.mxu0 0.0
        %1952 = vmatmul.mubr.f32.gmra.mrb[0].mxu0 %v1832
        %v1953 = vpop.f32.mrb[0].mxu0
        %v1954 = vadd.f32 0.0, %v1953
        %v1955 = vpop.f32.mrb[0].mxu0
        %1956 = vmatprep.mubr.f32.mxu0 0.0
        %1957 = vmatmul.mubr.f32.gmra.mrb[0].mxu0 %v1837
        %v1958 = vpop.f32.mrb[0].mxu0
        %v1959 = vadd.f32 0.0, %v1958
        %v1960 = vpop.f32.mrb[0].mxu0
        %1961 = vmatprep.mubr.f32.mxu0 0.0
        %1962 = vmatmul.mubr.f32.gmra.mrb[0].mxu0 %v1842
        %v1963 = vpop.f32.mrb[0].mxu0
        %v1964 = vadd.f32 0.0, %v1963
        %v1965 = vpop.f32.mrb[0].mxu0
        %1966 = vmatprep.mubr.f32.mxu0 0.0
        %1967 = vmatmul.mubr.f32.gmra.mrb[0].mxu0 %v1847
        %v1968 = vpop.f32.mrb[0].mxu0
        %v1969 = vadd.f32 0.0, %v1968
        %v1970 = vpop.f32.mrb[0].mxu0
        %1971 = vdwg.mxu0
        %v1972 = vadd.f32 %v1704, %v1934
        %v1973 = vadd.f32 %v1705, %v1939
        %v1974 = vadd.f32 %v1706, %v1944
        %v1975 = vadd.f32 %v1707, %v1949
        %v1976 = vadd.f32 %v1708, %v1954
        %v1977 = vadd.f32 %v1709, %v1959
        %v1978 = vadd.f32 %v1710, %v1964
        %v1979 = vadd.f32 %v1711, %v1969
        %s1980 = scalar_lea.vmem [#allocation2], 384
        %v1981 = vld [vmem:[%s1980] sm:$0xff]
        %v1982 = vld [vmem:[%s1980 + $0x8] sm:$0xff]
        %v1983 = vld [vmem:[%s1980 + $0x10] sm:$0xff]
        %v1984 = vld [vmem:[%s1980 + $0x18] sm:$0xff]
        %v1985 = vld [vmem:[%s1980 + $0x20] sm:$0xff]
        %v1986 = vld [vmem:[%s1980 + $0x28] sm:$0xff]
        %v1987 = vld [vmem:[%s1980 + $0x30] sm:$0xff]
        %v1988 = vld [vmem:[%s1980 + $0x38] sm:$0xff]
        %v1990 = vsel %vm535, %v1981, 0
        %v1993 = vsel %vm535, %v1982, 0
        %v1996 = vsel %vm535, %v1983, 0
        %v1999 = vsel %vm535, %v1984, 0
        %v2002 = vsel %vm535, %v1985, 0
        %v2005 = vsel %vm535, %v1986, 0
        %v2008 = vsel %vm535, %v1987, 0
        %v2011 = vsel %vm535, %v1988, 0
        %2013 = vmatprep.subr.mxu0 0.0
        %2014 = vmatpush1.msra.mxu0 %v519
        %2015 = vmatprep.subr.mxu0 0.0
        %2016 = vmatpush1.msra.mxu0 %v520
        %2017 = vmatprep.subr.mxu0 0.0
        %2018 = vmatpush1.msra.mxu0 %v521
        %2019 = vmatprep.subr.mxu0 0.0
        %2020 = vmatpush1.msra.mxu0 %v522
        %2021 = vmatprep.subr.mxu0 0.0
        %2022 = vmatpush1.msra.mxu0 %v523
        %2023 = vmatprep.subr.mxu0 0.0
        %2024 = vmatpush1.msra.mxu0 %v524
        %2025 = vmatprep.subr.mxu0 0.0
        %2026 = vmatpush1.msra.mxu0 %v525
        %2027 = vmatprep.subr.mxu0 0.0
        %2028 = vmatpush1.msra.mxu0 %v526
        %2029 = vmatprep.subr.mxu0 0.0
        %2030 = vmatpush1.msra.mxu0 0.0
        %2031 = vmatprep.subr.mxu0 0.0
        %2032 = vmatpush1.msra.mxu0 0.0
        %2033 = vmatprep.subr.mxu0 0.0
        %2034 = vmatpush1.msra.mxu0 0.0
        %2035 = vmatprep.subr.mxu0 0.0
        %2036 = vmatpush1.msra.mxu0 0.0
        %2037 = vmatprep.subr.mxu0 0.0
        %2038 = vmatpush1.msra.mxu0 0.0
        %2039 = vmatprep.subr.mxu0 0.0
        %2040 = vmatpush1.msra.mxu0 0.0
        %2041 = vmatprep.subr.mxu0 0.0
        %2042 = vmatpush1.msra.mxu0 0.0
        %2043 = vmatprep.subr.mxu0 0.0
        %2044 = vmatpush1.msra.mxu0 0.0
        %2045 = vmatprep.subr.mxu0 0.0
        %2046 = vmatpush1.msra.mxu0 0.0
        %2047 = vmatprep.subr.mxu0 0.0
        %2048 = vmatpush1.msra.mxu0 0.0
        %2049 = vmatprep.subr.mxu0 0.0
        %2050 = vmatpush1.msra.mxu0 0.0
        %2051 = vmatprep.subr.mxu0 0.0
        %2052 = vmatpush1.msra.mxu0 0.0
        %2053 = vmatprep.subr.mxu0 0.0
        %2054 = vmatpush1.msra.mxu0 0.0
        %2055 = vmatprep.subr.mxu0 0.0
        %2056 = vmatpush1.msra.mxu0 0.0
        %2057 = vmatprep.subr.mxu0 0.0
        %2058 = vmatpush1.msra.mxu0 0.0
        %2059 = vmatprep.subr.mxu0 0.0
        %2060 = vmatpush1.msra.mxu0 0.0
        %2061 = vmatprep.subr.mxu0 0.0
        %2062 = vmatpush1.msra.mxu0 0.0
        %2063 = vmatprep.subr.mxu0 0.0
        %2064 = vmatpush1.msra.mxu0 0.0
        %2065 = vmatprep.subr.mxu0 0.0
        %2066 = vmatpush1.msra.mxu0 0.0
        %2067 = vmatprep.subr.mxu0 0.0
        %2068 = vmatpush1.msra.mxu0 0.0
        %2069 = vmatprep.subr.mxu0 0.0
        %2070 = vmatpush1.msra.mxu0 0.0
        %2071 = vmatprep.subr.mxu0 0.0
        %2072 = vmatpush1.msra.mxu0 0.0
        %2073 = vmatprep.subr.mxu0 0.0
        %2074 = vmatpush1.msra.mxu0 0.0
        %2075 = vmatprep.subr.mxu0 0.0
        %2076 = vmatpush1.msra.mxu0 0.0
        %2077 = vmatprep.mubr.f32.mxu0 0.0
        %2078 = vmatmul.mubr.f32.gmra.mrb[0].mxu0 %v1990
        %v2079 = vpop.f32.mrb[0].mxu0
        %v2080 = vadd.f32 0.0, %v2079
        %v2081 = vpop.f32.mrb[0].mxu0
        %2082 = vmatprep.mubr.f32.mxu0 0.0
        %2083 = vmatmul.mubr.f32.gmra.mrb[0].mxu0 %v1993
        %v2084 = vpop.f32.mrb[0].mxu0
        %v2085 = vadd.f32 0.0, %v2084
        %v2086 = vpop.f32.mrb[0].mxu0
        %2087 = vmatprep.mubr.f32.mxu0 0.0
        %2088 = vmatmul.mubr.f32.gmra.mrb[0].mxu0 %v1996
        %v2089 = vpop.f32.mrb[0].mxu0
        %v2090 = vadd.f32 0.0, %v2089
        %v2091 = vpop.f32.mrb[0].mxu0
        %2092 = vmatprep.mubr.f32.mxu0 0.0
        %2093 = vmatmul.mubr.f32.gmra.mrb[0].mxu0 %v1999
        %v2094 = vpop.f32.mrb[0].mxu0
        %v2095 = vadd.f32 0.0, %v2094
        %v2096 = vpop.f32.mrb[0].mxu0
        %2097 = vmatprep.mubr.f32.mxu0 0.0
        %2098 = vmatmul.mubr.f32.gmra.mrb[0].mxu0 %v2002
        %v2099 = vpop.f32.mrb[0].mxu0
        %v2100 = vadd.f32 0.0, %v2099
        %v2101 = vpop.f32.mrb[0].mxu0
        %2102 = vmatprep.mubr.f32.mxu0 0.0
        %2103 = vmatmul.mubr.f32.gmra.mrb[0].mxu0 %v2005
        %v2104 = vpop.f32.mrb[0].mxu0
        %v2105 = vadd.f32 0.0, %v2104
        %v2106 = vpop.f32.mrb[0].mxu0
        %2107 = vmatprep.mubr.f32.mxu0 0.0
        %2108 = vmatmul.mubr.f32.gmra.mrb[0].mxu0 %v2008
        %v2109 = vpop.f32.mrb[0].mxu0
        %v2110 = vadd.f32 0.0, %v2109
        %v2111 = vpop.f32.mrb[0].mxu0
        %2112 = vmatprep.mubr.f32.mxu0 0.0
        %2113 = vmatmul.mubr.f32.gmra.mrb[0].mxu0 %v2011
        %v2114 = vpop.f32.mrb[0].mxu0
        %v2115 = vadd.f32 0.0, %v2114
        %v2116 = vpop.f32.mrb[0].mxu0
        %2117 = vdwg.mxu0
        %s2118 = scalar_lea.vmem [#allocation5], 768
        %v2119 = vld [vmem:[%s2118] sm:$0xff]
        %v2120 = vld [vmem:[%s2118 + $0x8] sm:$0xff]
        %v2121 = vld [vmem:[%s2118 + $0x10] sm:$0xff]
        %v2122 = vld [vmem:[%s2118 + $0x18] sm:$0xff]
        %v2123 = vld [vmem:[%s2118 + $0x20] sm:$0xff]
        %v2124 = vld [vmem:[%s2118 + $0x28] sm:$0xff]
        %v2125 = vld [vmem:[%s2118 + $0x30] sm:$0xff]
        %v2126 = vld [vmem:[%s2118 + $0x38] sm:$0xff]
        %v2127 = vld [vmem:[%s2118 + $0x40] sm:$0xff]
        %v2128 = vld [vmem:[%s2118 + $0x48] sm:$0xff]
        %v2129 = vld [vmem:[%s2118 + $0x50] sm:$0xff]
        %v2130 = vld [vmem:[%s2118 + $0x58] sm:$0xff]
        %v2131 = vld [vmem:[%s2118 + $0x60] sm:$0xff]
        %v2132 = vld [vmem:[%s2118 + $0x68] sm:$0xff]
        %v2133 = vld [vmem:[%s2118 + $0x70] sm:$0xff]
        %v2134 = vld [vmem:[%s2118 + $0x78] sm:$0xff]
        %2135 = vmatprep.subr.mxu0 0.0
        %2136 = vmatpush1.msra.mxu0 %v2119
        %2137 = vmatprep.subr.mxu0 0.0
        %2138 = vmatpush1.msra.mxu0 %v2120
        %2139 = vmatprep.subr.mxu0 0.0
        %2140 = vmatpush1.msra.mxu0 %v2121
        %2141 = vmatprep.subr.mxu0 0.0
        %2142 = vmatpush1.msra.mxu0 %v2122
        %2143 = vmatprep.subr.mxu0 0.0
        %2144 = vmatpush1.msra.mxu0 %v2123
        %2145 = vmatprep.subr.mxu0 0.0
        %2146 = vmatpush1.msra.mxu0 %v2124
        %2147 = vmatprep.subr.mxu0 0.0
        %2148 = vmatpush1.msra.mxu0 %v2125
        %2149 = vmatprep.subr.mxu0 0.0
        %2150 = vmatpush1.msra.mxu0 %v2126
        %2151 = vmatprep.subr.mxu0 0.0
        %2152 = vmatpush1.msra.mxu0 %v2127
        %2153 = vmatprep.subr.mxu0 0.0
        %2154 = vmatpush1.msra.mxu0 %v2128
        %2155 = vmatprep.subr.mxu0 0.0
        %2156 = vmatpush1.msra.mxu0 %v2129
        %2157 = vmatprep.subr.mxu0 0.0
        %2158 = vmatpush1.msra.mxu0 %v2130
        %2159 = vmatprep.subr.mxu0 0.0
        %2160 = vmatpush1.msra.mxu0 %v2131
        %2161 = vmatprep.subr.mxu0 0.0
        %2162 = vmatpush1.msra.mxu0 %v2132
        %2163 = vmatprep.subr.mxu0 0.0
        %2164 = vmatpush1.msra.mxu0 %v2133
        %2165 = vmatprep.subr.mxu0 0.0
        %2166 = vmatpush1.msra.mxu0 %v2134
        %2167 = vmatprep.subr.mxu0 0.0
        %2168 = vmatpush1.msra.mxu0 0.0
        %2169 = vmatprep.subr.mxu0 0.0
        %2170 = vmatpush1.msra.mxu0 0.0
        %2171 = vmatprep.subr.mxu0 0.0
        %2172 = vmatpush1.msra.mxu0 0.0
        %2173 = vmatprep.subr.mxu0 0.0
        %2174 = vmatpush1.msra.mxu0 0.0
        %2175 = vmatprep.subr.mxu0 0.0
        %2176 = vmatpush1.msra.mxu0 0.0
        %2177 = vmatprep.subr.mxu0 0.0
        %2178 = vmatpush1.msra.mxu0 0.0
        %2179 = vmatprep.subr.mxu0 0.0
        %2180 = vmatpush1.msra.mxu0 0.0
        %2181 = vmatprep.subr.mxu0 0.0
        %2182 = vmatpush1.msra.mxu0 0.0
        %2183 = vmatprep.subr.mxu0 0.0
        %2184 = vmatpush1.msra.mxu0 0.0
        %2185 = vmatprep.subr.mxu0 0.0
        %2186 = vmatpush1.msra.mxu0 0.0
        %2187 = vmatprep.subr.mxu0 0.0
        %2188 = vmatpush1.msra.mxu0 0.0
        %2189 = vmatprep.subr.mxu0 0.0
        %2190 = vmatpush1.msra.mxu0 0.0
        %2191 = vmatprep.subr.mxu0 0.0
        %2192 = vmatpush1.msra.mxu0 0.0
        %2193 = vmatprep.subr.mxu0 0.0
        %2194 = vmatpush1.msra.mxu0 0.0
        %2195 = vmatprep.subr.mxu0 0.0
        %2196 = vmatpush1.msra.mxu0 0.0
        %2197 = vmatprep.subr.mxu0 0.0
        %2198 = vmatpush1.msra.mxu0 0.0
        %2199 = vmatprep.mubr.f32.mxu0 0.0
        %2200 = vmatmul.mubr.f32.gmra.mrb[0].mxu0 %v2080
        %v2201 = vpop.f32.mrb[0].mxu0
        %v2202 = vadd.f32 0.0, %v2201
        %v2203 = vpop.f32.mrb[0].mxu0
        %2204 = vmatprep.mubr.f32.mxu0 0.0
        %2205 = vmatmul.mubr.f32.gmra.mrb[0].mxu0 %v2085
        %v2206 = vpop.f32.mrb[0].mxu0
        %v2207 = vadd.f32 0.0, %v2206
        %v2208 = vpop.f32.mrb[0].mxu0
        %2209 = vmatprep.mubr.f32.mxu0 0.0
        %2210 = vmatmul.mubr.f32.gmra.mrb[0].mxu0 %v2090
        %v2211 = vpop.f32.mrb[0].mxu0
        %v2212 = vadd.f32 0.0, %v2211
        %v2213 = vpop.f32.mrb[0].mxu0
        %2214 = vmatprep.mubr.f32.mxu0 0.0
        %2215 = vmatmul.mubr.f32.gmra.mrb[0].mxu0 %v2095
        %v2216 = vpop.f32.mrb[0].mxu0
        %v2217 = vadd.f32 0.0, %v2216
        %v2218 = vpop.f32.mrb[0].mxu0
        %2219 = vmatprep.mubr.f32.mxu0 0.0
        %2220 = vmatmul.mubr.f32.gmra.mrb[0].mxu0 %v2100
        %v2221 = vpop.f32.mrb[0].mxu0
        %v2222 = vadd.f32 0.0, %v2221
        %v2223 = vpop.f32.mrb[0].mxu0
        %2224 = vmatprep.mubr.f32.mxu0 0.0
        %2225 = vmatmul.mubr.f32.gmra.mrb[0].mxu0 %v2105
        %v2226 = vpop.f32.mrb[0].mxu0
        %v2227 = vadd.f32 0.0, %v2226
        %v2228 = vpop.f32.mrb[0].mxu0
        %2229 = vmatprep.mubr.f32.mxu0 0.0
        %2230 = vmatmul.mubr.f32.gmra.mrb[0].mxu0 %v2110
        %v2231 = vpop.f32.mrb[0].mxu0
        %v2232 = vadd.f32 0.0, %v2231
        %v2233 = vpop.f32.mrb[0].mxu0
        %2234 = vmatprep.mubr.f32.mxu0 0.0
        %2235 = vmatmul.mubr.f32.gmra.mrb[0].mxu0 %v2115
        %v2236 = vpop.f32.mrb[0].mxu0
        %v2237 = vadd.f32 0.0, %v2236
        %v2238 = vpop.f32.mrb[0].mxu0
        %2239 = vdwg.mxu0
        %v2240 = vadd.f32 %v1972, %v2202
        %v2241 = vadd.f32 %v1973, %v2207
        %v2242 = vadd.f32 %v1974, %v2212
        %v2243 = vadd.f32 %v1975, %v2217
        %v2244 = vadd.f32 %v1976, %v2222
        %v2245 = vadd.f32 %v1977, %v2227
        %v2246 = vadd.f32 %v1978, %v2232
        %v2247 = vadd.f32 %v1979, %v2237
        %s2248 = scalar_lea.vmem [#allocation2], 448
        %v2249 = vld [vmem:[%s2248] sm:$0xff]
        %v2250 = vld [vmem:[%s2248 + $0x8] sm:$0xff]
        %v2251 = vld [vmem:[%s2248 + $0x10] sm:$0xff]
        %v2252 = vld [vmem:[%s2248 + $0x18] sm:$0xff]
        %v2253 = vld [vmem:[%s2248 + $0x20] sm:$0xff]
        %v2254 = vld [vmem:[%s2248 + $0x28] sm:$0xff]
        %v2255 = vld [vmem:[%s2248 + $0x30] sm:$0xff]
        %v2256 = vld [vmem:[%s2248 + $0x38] sm:$0xff]
        %v2258 = vsel %vm535, %v2249, 0
        %v2261 = vsel %vm535, %v2250, 0
        %v2264 = vsel %vm535, %v2251, 0
        %v2267 = vsel %vm535, %v2252, 0
        %v2270 = vsel %vm535, %v2253, 0
        %v2273 = vsel %vm535, %v2254, 0
        %v2276 = vsel %vm535, %v2255, 0
        %v2279 = vsel %vm535, %v2256, 0
        %2281 = vmatprep.subr.mxu0 0.0
        %2282 = vmatpush1.msra.mxu0 %v519
        %2283 = vmatprep.subr.mxu0 0.0
        %2284 = vmatpush1.msra.mxu0 %v520
        %2285 = vmatprep.subr.mxu0 0.0
        %2286 = vmatpush1.msra.mxu0 %v521
        %2287 = vmatprep.subr.mxu0 0.0
        %2288 = vmatpush1.msra.mxu0 %v522
        %2289 = vmatprep.subr.mxu0 0.0
        %2290 = vmatpush1.msra.mxu0 %v523
        %2291 = vmatprep.subr.mxu0 0.0
        %2292 = vmatpush1.msra.mxu0 %v524
        %2293 = vmatprep.subr.mxu0 0.0
        %2294 = vmatpush1.msra.mxu0 %v525
        %2295 = vmatprep.subr.mxu0 0.0
        %2296 = vmatpush1.msra.mxu0 %v526
        %2297 = vmatprep.subr.mxu0 0.0
        %2298 = vmatpush1.msra.mxu0 0.0
        %2299 = vmatprep.subr.mxu0 0.0
        %2300 = vmatpush1.msra.mxu0 0.0
        %2301 = vmatprep.subr.mxu0 0.0
        %2302 = vmatpush1.msra.mxu0 0.0
        %2303 = vmatprep.subr.mxu0 0.0
        %2304 = vmatpush1.msra.mxu0 0.0
        %2305 = vmatprep.subr.mxu0 0.0
        %2306 = vmatpush1.msra.mxu0 0.0
        %2307 = vmatprep.subr.mxu0 0.0
        %2308 = vmatpush1.msra.mxu0 0.0
        %2309 = vmatprep.subr.mxu0 0.0
        %2310 = vmatpush1.msra.mxu0 0.0
        %2311 = vmatprep.subr.mxu0 0.0
        %2312 = vmatpush1.msra.mxu0 0.0
        %2313 = vmatprep.subr.mxu0 0.0
        %2314 = vmatpush1.msra.mxu0 0.0
        %2315 = vmatprep.subr.mxu0 0.0
        %2316 = vmatpush1.msra.mxu0 0.0
        %2317 = vmatprep.subr.mxu0 0.0
        %2318 = vmatpush1.msra.mxu0 0.0
        %2319 = vmatprep.subr.mxu0 0.0
        %2320 = vmatpush1.msra.mxu0 0.0
        %2321 = vmatprep.subr.mxu0 0.0
        %2322 = vmatpush1.msra.mxu0 0.0
        %2323 = vmatprep.subr.mxu0 0.0
        %2324 = vmatpush1.msra.mxu0 0.0
        %2325 = vmatprep.subr.mxu0 0.0
        %2326 = vmatpush1.msra.mxu0 0.0
        %2327 = vmatprep.subr.mxu0 0.0
        %2328 = vmatpush1.msra.mxu0 0.0
        %2329 = vmatprep.subr.mxu0 0.0
        %2330 = vmatpush1.msra.mxu0 0.0
        %2331 = vmatprep.subr.mxu0 0.0
        %2332 = vmatpush1.msra.mxu0 0.0
        %2333 = vmatprep.subr.mxu0 0.0
        %2334 = vmatpush1.msra.mxu0 0.0
        %2335 = vmatprep.subr.mxu0 0.0
        %2336 = vmatpush1.msra.mxu0 0.0
        %2337 = vmatprep.subr.mxu0 0.0
        %2338 = vmatpush1.msra.mxu0 0.0
        %2339 = vmatprep.subr.mxu0 0.0
        %2340 = vmatpush1.msra.mxu0 0.0
        %2341 = vmatprep.subr.mxu0 0.0
        %2342 = vmatpush1.msra.mxu0 0.0
        %2343 = vmatprep.subr.mxu0 0.0
        %2344 = vmatpush1.msra.mxu0 0.0
        %2345 = vmatprep.mubr.f32.mxu0 0.0
        %2346 = vmatmul.mubr.f32.gmra.mrb[0].mxu0 %v2258
        %v2347 = vpop.f32.mrb[0].mxu0
        %v2348 = vadd.f32 0.0, %v2347
        %v2349 = vpop.f32.mrb[0].mxu0
        %2350 = vmatprep.mubr.f32.mxu0 0.0
        %2351 = vmatmul.mubr.f32.gmra.mrb[0].mxu0 %v2261
        %v2352 = vpop.f32.mrb[0].mxu0
        %v2353 = vadd.f32 0.0, %v2352
        %v2354 = vpop.f32.mrb[0].mxu0
        %2355 = vmatprep.mubr.f32.mxu0 0.0
        %2356 = vmatmul.mubr.f32.gmra.mrb[0].mxu0 %v2264
        %v2357 = vpop.f32.mrb[0].mxu0
        %v2358 = vadd.f32 0.0, %v2357
        %v2359 = vpop.f32.mrb[0].mxu0
        %2360 = vmatprep.mubr.f32.mxu0 0.0
        %2361 = vmatmul.mubr.f32.gmra.mrb[0].mxu0 %v2267
        %v2362 = vpop.f32.mrb[0].mxu0
        %v2363 = vadd.f32 0.0, %v2362
        %v2364 = vpop.f32.mrb[0].mxu0
        %2365 = vmatprep.mubr.f32.mxu0 0.0
        %2366 = vmatmul.mubr.f32.gmra.mrb[0].mxu0 %v2270
        %v2367 = vpop.f32.mrb[0].mxu0
        %v2368 = vadd.f32 0.0, %v2367
        %v2369 = vpop.f32.mrb[0].mxu0
        %2370 = vmatprep.mubr.f32.mxu0 0.0
        %2371 = vmatmul.mubr.f32.gmra.mrb[0].mxu0 %v2273
        %v2372 = vpop.f32.mrb[0].mxu0
        %v2373 = vadd.f32 0.0, %v2372
        %v2374 = vpop.f32.mrb[0].mxu0
        %2375 = vmatprep.mubr.f32.mxu0 0.0
        %2376 = vmatmul.mubr.f32.gmra.mrb[0].mxu0 %v2276
        %v2377 = vpop.f32.mrb[0].mxu0
        %v2378 = vadd.f32 0.0, %v2377
        %v2379 = vpop.f32.mrb[0].mxu0
        %2380 = vmatprep.mubr.f32.mxu0 0.0
        %2381 = vmatmul.mubr.f32.gmra.mrb[0].mxu0 %v2279
        %v2382 = vpop.f32.mrb[0].mxu0
        %v2383 = vadd.f32 0.0, %v2382
        %v2384 = vpop.f32.mrb[0].mxu0
        %2385 = vdwg.mxu0
        %s2386 = scalar_lea.vmem [#allocation5], 896
        %v2387 = vld [vmem:[%s2386] sm:$0xff]
        %v2388 = vld [vmem:[%s2386 + $0x8] sm:$0xff]
        %v2389 = vld [vmem:[%s2386 + $0x10] sm:$0xff]
        %v2390 = vld [vmem:[%s2386 + $0x18] sm:$0xff]
        %v2391 = vld [vmem:[%s2386 + $0x20] sm:$0xff]
        %v2392 = vld [vmem:[%s2386 + $0x28] sm:$0xff]
        %v2393 = vld [vmem:[%s2386 + $0x30] sm:$0xff]
        %v2394 = vld [vmem:[%s2386 + $0x38] sm:$0xff]
        %v2395 = vld [vmem:[%s2386 + $0x40] sm:$0xff]
        %v2396 = vld [vmem:[%s2386 + $0x48] sm:$0xff]
        %v2397 = vld [vmem:[%s2386 + $0x50] sm:$0xff]
        %v2398 = vld [vmem:[%s2386 + $0x58] sm:$0xff]
        %v2399 = vld [vmem:[%s2386 + $0x60] sm:$0xff]
        %v2400 = vld [vmem:[%s2386 + $0x68] sm:$0xff]
        %v2401 = vld [vmem:[%s2386 + $0x70] sm:$0xff]
        %v2402 = vld [vmem:[%s2386 + $0x78] sm:$0xff]
        %2403 = vmatprep.subr.mxu0 0.0
        %2404 = vmatpush1.msra.mxu0 %v2387
        %2405 = vmatprep.subr.mxu0 0.0
        %2406 = vmatpush1.msra.mxu0 %v2388
        %2407 = vmatprep.subr.mxu0 0.0
        %2408 = vmatpush1.msra.mxu0 %v2389
        %2409 = vmatprep.subr.mxu0 0.0
        %2410 = vmatpush1.msra.mxu0 %v2390
        %2411 = vmatprep.subr.mxu0 0.0
        %2412 = vmatpush1.msra.mxu0 %v2391
        %2413 = vmatprep.subr.mxu0 0.0
        %2414 = vmatpush1.msra.mxu0 %v2392
        %2415 = vmatprep.subr.mxu0 0.0
        %2416 = vmatpush1.msra.mxu0 %v2393
        %2417 = vmatprep.subr.mxu0 0.0
        %2418 = vmatpush1.msra.mxu0 %v2394
        %2419 = vmatprep.subr.mxu0 0.0
        %2420 = vmatpush1.msra.mxu0 %v2395
        %2421 = vmatprep.subr.mxu0 0.0
        %2422 = vmatpush1.msra.mxu0 %v2396
        %2423 = vmatprep.subr.mxu0 0.0
        %2424 = vmatpush1.msra.mxu0 %v2397
        %2425 = vmatprep.subr.mxu0 0.0
        %2426 = vmatpush1.msra.mxu0 %v2398
        %2427 = vmatprep.subr.mxu0 0.0
        %2428 = vmatpush1.msra.mxu0 %v2399
        %2429 = vmatprep.subr.mxu0 0.0
        %2430 = vmatpush1.msra.mxu0 %v2400
        %2431 = vmatprep.subr.mxu0 0.0
        %2432 = vmatpush1.msra.mxu0 %v2401
        %2433 = vmatprep.subr.mxu0 0.0
        %2434 = vmatpush1.msra.mxu0 %v2402
        %2435 = vmatprep.subr.mxu0 0.0
        %2436 = vmatpush1.msra.mxu0 0.0
        %2437 = vmatprep.subr.mxu0 0.0
        %2438 = vmatpush1.msra.mxu0 0.0
        %2439 = vmatprep.subr.mxu0 0.0
        %2440 = vmatpush1.msra.mxu0 0.0
        %2441 = vmatprep.subr.mxu0 0.0
        %2442 = vmatpush1.msra.mxu0 0.0
        %2443 = vmatprep.subr.mxu0 0.0
        %2444 = vmatpush1.msra.mxu0 0.0
        %2445 = vmatprep.subr.mxu0 0.0
        %2446 = vmatpush1.msra.mxu0 0.0
        %2447 = vmatprep.subr.mxu0 0.0
        %2448 = vmatpush1.msra.mxu0 0.0
        %2449 = vmatprep.subr.mxu0 0.0
        %2450 = vmatpush1.msra.mxu0 0.0
        %2451 = vmatprep.subr.mxu0 0.0
        %2452 = vmatpush1.msra.mxu0 0.0
        %2453 = vmatprep.subr.mxu0 0.0
        %2454 = vmatpush1.msra.mxu0 0.0
        %2455 = vmatprep.subr.mxu0 0.0
        %2456 = vmatpush1.msra.mxu0 0.0
        %2457 = vmatprep.subr.mxu0 0.0
        %2458 = vmatpush1.msra.mxu0 0.0
        %2459 = vmatprep.subr.mxu0 0.0
        %2460 = vmatpush1.msra.mxu0 0.0
        %2461 = vmatprep.subr.mxu0 0.0
        %2462 = vmatpush1.msra.mxu0 0.0
        %2463 = vmatprep.subr.mxu0 0.0
        %2464 = vmatpush1.msra.mxu0 0.0
        %2465 = vmatprep.subr.mxu0 0.0
        %2466 = vmatpush1.msra.mxu0 0.0
        %2467 = vmatprep.mubr.f32.mxu0 0.0
        %2468 = vmatmul.mubr.f32.gmra.mrb[0].mxu0 %v2348
        %v2469 = vpop.f32.mrb[0].mxu0
        %v2470 = vadd.f32 0.0, %v2469
        %v2471 = vpop.f32.mrb[0].mxu0
        %2472 = vmatprep.mubr.f32.mxu0 0.0
        %2473 = vmatmul.mubr.f32.gmra.mrb[0].mxu0 %v2353
        %v2474 = vpop.f32.mrb[0].mxu0
        %v2475 = vadd.f32 0.0, %v2474
        %v2476 = vpop.f32.mrb[0].mxu0
        %2477 = vmatprep.mubr.f32.mxu0 0.0
        %2478 = vmatmul.mubr.f32.gmra.mrb[0].mxu0 %v2358
        %v2479 = vpop.f32.mrb[0].mxu0
        %v2480 = vadd.f32 0.0, %v2479
        %v2481 = vpop.f32.mrb[0].mxu0
        %2482 = vmatprep.mubr.f32.mxu0 0.0
        %2483 = vmatmul.mubr.f32.gmra.mrb[0].mxu0 %v2363
        %v2484 = vpop.f32.mrb[0].mxu0
        %v2485 = vadd.f32 0.0, %v2484
        %v2486 = vpop.f32.mrb[0].mxu0
        %2487 = vmatprep.mubr.f32.mxu0 0.0
        %2488 = vmatmul.mubr.f32.gmra.mrb[0].mxu0 %v2368
        %v2489 = vpop.f32.mrb[0].mxu0
        %v2490 = vadd.f32 0.0, %v2489
        %v2491 = vpop.f32.mrb[0].mxu0
        %2492 = vmatprep.mubr.f32.mxu0 0.0
        %2493 = vmatmul.mubr.f32.gmra.mrb[0].mxu0 %v2373
        %v2494 = vpop.f32.mrb[0].mxu0
        %v2495 = vadd.f32 0.0, %v2494
        %v2496 = vpop.f32.mrb[0].mxu0
        %2497 = vmatprep.mubr.f32.mxu0 0.0
        %2498 = vmatmul.mubr.f32.gmra.mrb[0].mxu0 %v2378
        %v2499 = vpop.f32.mrb[0].mxu0
        %v2500 = vadd.f32 0.0, %v2499
        %v2501 = vpop.f32.mrb[0].mxu0
        %2502 = vmatprep.mubr.f32.mxu0 0.0
        %2503 = vmatmul.mubr.f32.gmra.mrb[0].mxu0 %v2383
        %v2504 = vpop.f32.mrb[0].mxu0
        %v2505 = vadd.f32 0.0, %v2504
        %v2506 = vpop.f32.mrb[0].mxu0
        %2507 = vdwg.mxu0
        %v2508 = vadd.f32 %v2240, %v2470
        %v2509 = vadd.f32 %v2241, %v2475
        %v2510 = vadd.f32 %v2242, %v2480
        %v2511 = vadd.f32 %v2243, %v2485
        %v2512 = vadd.f32 %v2244, %v2490
        %v2513 = vadd.f32 %v2245, %v2495
        %v2514 = vadd.f32 %v2246, %v2500
        %v2515 = vadd.f32 %v2247, %v2505
        %s2516 = scalar_lea.vmem [#allocation2], 512
        %v2517 = vld [vmem:[%s2516] sm:$0xff]
        %v2518 = vld [vmem:[%s2516 + $0x8] sm:$0xff]
        %v2519 = vld [vmem:[%s2516 + $0x10] sm:$0xff]
        %v2520 = vld [vmem:[%s2516 + $0x18] sm:$0xff]
        %v2521 = vld [vmem:[%s2516 + $0x20] sm:$0xff]
        %v2522 = vld [vmem:[%s2516 + $0x28] sm:$0xff]
        %v2523 = vld [vmem:[%s2516 + $0x30] sm:$0xff]
        %v2524 = vld [vmem:[%s2516 + $0x38] sm:$0xff]
        %v2526 = vsel %vm535, %v2517, 0
        %v2529 = vsel %vm535, %v2518, 0
        %v2532 = vsel %vm535, %v2519, 0
        %v2535 = vsel %vm535, %v2520, 0
        %v2538 = vsel %vm535, %v2521, 0
        %v2541 = vsel %vm535, %v2522, 0
        %v2544 = vsel %vm535, %v2523, 0
        %v2547 = vsel %vm535, %v2524, 0
        %2549 = vmatprep.subr.mxu0 0.0
        %2550 = vmatpush1.msra.mxu0 %v519
        %2551 = vmatprep.subr.mxu0 0.0
        %2552 = vmatpush1.msra.mxu0 %v520
        %2553 = vmatprep.subr.mxu0 0.0
        %2554 = vmatpush1.msra.mxu0 %v521
        %2555 = vmatprep.subr.mxu0 0.0
        %2556 = vmatpush1.msra.mxu0 %v522
        %2557 = vmatprep.subr.mxu0 0.0
        %2558 = vmatpush1.msra.mxu0 %v523
        %2559 = vmatprep.subr.mxu0 0.0
        %2560 = vmatpush1.msra.mxu0 %v524
        %2561 = vmatprep.subr.mxu0 0.0
        %2562 = vmatpush1.msra.mxu0 %v525
        %2563 = vmatprep.subr.mxu0 0.0
        %2564 = vmatpush1.msra.mxu0 %v526
        %2565 = vmatprep.subr.mxu0 0.0
        %2566 = vmatpush1.msra.mxu0 0.0
        %2567 = vmatprep.subr.mxu0 0.0
        %2568 = vmatpush1.msra.mxu0 0.0
        %2569 = vmatprep.subr.mxu0 0.0
        %2570 = vmatpush1.msra.mxu0 0.0
        %2571 = vmatprep.subr.mxu0 0.0
        %2572 = vmatpush1.msra.mxu0 0.0
        %2573 = vmatprep.subr.mxu0 0.0
        %2574 = vmatpush1.msra.mxu0 0.0
        %2575 = vmatprep.subr.mxu0 0.0
        %2576 = vmatpush1.msra.mxu0 0.0
        %2577 = vmatprep.subr.mxu0 0.0
        %2578 = vmatpush1.msra.mxu0 0.0
        %2579 = vmatprep.subr.mxu0 0.0
        %2580 = vmatpush1.msra.mxu0 0.0
        %2581 = vmatprep.subr.mxu0 0.0
        %2582 = vmatpush1.msra.mxu0 0.0
        %2583 = vmatprep.subr.mxu0 0.0
        %2584 = vmatpush1.msra.mxu0 0.0
        %2585 = vmatprep.subr.mxu0 0.0
        %2586 = vmatpush1.msra.mxu0 0.0
        %2587 = vmatprep.subr.mxu0 0.0
        %2588 = vmatpush1.msra.mxu0 0.0
        %2589 = vmatprep.subr.mxu0 0.0
        %2590 = vmatpush1.msra.mxu0 0.0
        %2591 = vmatprep.subr.mxu0 0.0
        %2592 = vmatpush1.msra.mxu0 0.0
        %2593 = vmatprep.subr.mxu0 0.0
        %2594 = vmatpush1.msra.mxu0 0.0
        %2595 = vmatprep.subr.mxu0 0.0
        %2596 = vmatpush1.msra.mxu0 0.0
        %2597 = vmatprep.subr.mxu0 0.0
        %2598 = vmatpush1.msra.mxu0 0.0
        %2599 = vmatprep.subr.mxu0 0.0
        %2600 = vmatpush1.msra.mxu0 0.0
        %2601 = vmatprep.subr.mxu0 0.0
        %2602 = vmatpush1.msra.mxu0 0.0
        %2603 = vmatprep.subr.mxu0 0.0
        %2604 = vmatpush1.msra.mxu0 0.0
        %2605 = vmatprep.subr.mxu0 0.0
        %2606 = vmatpush1.msra.mxu0 0.0
        %2607 = vmatprep.subr.mxu0 0.0
        %2608 = vmatpush1.msra.mxu0 0.0
        %2609 = vmatprep.subr.mxu0 0.0
        %2610 = vmatpush1.msra.mxu0 0.0
        %2611 = vmatprep.subr.mxu0 0.0
        %2612 = vmatpush1.msra.mxu0 0.0
        %2613 = vmatprep.mubr.f32.mxu0 0.0
        %2614 = vmatmul.mubr.f32.gmra.mrb[0].mxu0 %v2526
        %v2615 = vpop.f32.mrb[0].mxu0
        %v2616 = vadd.f32 0.0, %v2615
        %v2617 = vpop.f32.mrb[0].mxu0
        %2618 = vmatprep.mubr.f32.mxu0 0.0
        %2619 = vmatmul.mubr.f32.gmra.mrb[0].mxu0 %v2529
        %v2620 = vpop.f32.mrb[0].mxu0
        %v2621 = vadd.f32 0.0, %v2620
        %v2622 = vpop.f32.mrb[0].mxu0
        %2623 = vmatprep.mubr.f32.mxu0 0.0
        %2624 = vmatmul.mubr.f32.gmra.mrb[0].mxu0 %v2532
        %v2625 = vpop.f32.mrb[0].mxu0
        %v2626 = vadd.f32 0.0, %v2625
        %v2627 = vpop.f32.mrb[0].mxu0
        %2628 = vmatprep.mubr.f32.mxu0 0.0
        %2629 = vmatmul.mubr.f32.gmra.mrb[0].mxu0 %v2535
        %v2630 = vpop.f32.mrb[0].mxu0
        %v2631 = vadd.f32 0.0, %v2630
        %v2632 = vpop.f32.mrb[0].mxu0
        %2633 = vmatprep.mubr.f32.mxu0 0.0
        %2634 = vmatmul.mubr.f32.gmra.mrb[0].mxu0 %v2538
        %v2635 = vpop.f32.mrb[0].mxu0
        %v2636 = vadd.f32 0.0, %v2635
        %v2637 = vpop.f32.mrb[0].mxu0
        %2638 = vmatprep.mubr.f32.mxu0 0.0
        %2639 = vmatmul.mubr.f32.gmra.mrb[0].mxu0 %v2541
        %v2640 = vpop.f32.mrb[0].mxu0
        %v2641 = vadd.f32 0.0, %v2640
        %v2642 = vpop.f32.mrb[0].mxu0
        %2643 = vmatprep.mubr.f32.mxu0 0.0
        %2644 = vmatmul.mubr.f32.gmra.mrb[0].mxu0 %v2544
        %v2645 = vpop.f32.mrb[0].mxu0
        %v2646 = vadd.f32 0.0, %v2645
        %v2647 = vpop.f32.mrb[0].mxu0
        %2648 = vmatprep.mubr.f32.mxu0 0.0
        %2649 = vmatmul.mubr.f32.gmra.mrb[0].mxu0 %v2547
        %v2650 = vpop.f32.mrb[0].mxu0
        %v2651 = vadd.f32 0.0, %v2650
        %v2652 = vpop.f32.mrb[0].mxu0
        %2653 = vdwg.mxu0
        %s2654 = scalar_lea.vmem [#allocation5], 1024
        %v2655 = vld [vmem:[%s2654] sm:$0xff]
        %v2656 = vld [vmem:[%s2654 + $0x8] sm:$0xff]
        %v2657 = vld [vmem:[%s2654 + $0x10] sm:$0xff]
        %v2658 = vld [vmem:[%s2654 + $0x18] sm:$0xff]
        %v2659 = vld [vmem:[%s2654 + $0x20] sm:$0xff]
        %v2660 = vld [vmem:[%s2654 + $0x28] sm:$0xff]
        %v2661 = vld [vmem:[%s2654 + $0x30] sm:$0xff]
        %v2662 = vld [vmem:[%s2654 + $0x38] sm:$0xff]
        %v2663 = vld [vmem:[%s2654 + $0x40] sm:$0xff]
        %v2664 = vld [vmem:[%s2654 + $0x48] sm:$0xff]
        %v2665 = vld [vmem:[%s2654 + $0x50] sm:$0xff]
        %v2666 = vld [vmem:[%s2654 + $0x58] sm:$0xff]
        %v2667 = vld [vmem:[%s2654 + $0x60] sm:$0xff]
        %v2668 = vld [vmem:[%s2654 + $0x68] sm:$0xff]
        %v2669 = vld [vmem:[%s2654 + $0x70] sm:$0xff]
        %v2670 = vld [vmem:[%s2654 + $0x78] sm:$0xff]
        %2671 = vmatprep.subr.mxu0 0.0
        %2672 = vmatpush1.msra.mxu0 %v2655
        %2673 = vmatprep.subr.mxu0 0.0
        %2674 = vmatpush1.msra.mxu0 %v2656
        %2675 = vmatprep.subr.mxu0 0.0
        %2676 = vmatpush1.msra.mxu0 %v2657
        %2677 = vmatprep.subr.mxu0 0.0
        %2678 = vmatpush1.msra.mxu0 %v2658
        %2679 = vmatprep.subr.mxu0 0.0
        %2680 = vmatpush1.msra.mxu0 %v2659
        %2681 = vmatprep.subr.mxu0 0.0
        %2682 = vmatpush1.msra.mxu0 %v2660
        %2683 = vmatprep.subr.mxu0 0.0
        %2684 = vmatpush1.msra.mxu0 %v2661
        %2685 = vmatprep.subr.mxu0 0.0
        %2686 = vmatpush1.msra.mxu0 %v2662
        %2687 = vmatprep.subr.mxu0 0.0
        %2688 = vmatpush1.msra.mxu0 %v2663
        %2689 = vmatprep.subr.mxu0 0.0
        %2690 = vmatpush1.msra.mxu0 %v2664
        %2691 = vmatprep.subr.mxu0 0.0
        %2692 = vmatpush1.msra.mxu0 %v2665
        %2693 = vmatprep.subr.mxu0 0.0
        %2694 = vmatpush1.msra.mxu0 %v2666
        %2695 = vmatprep.subr.mxu0 0.0
        %2696 = vmatpush1.msra.mxu0 %v2667
        %2697 = vmatprep.subr.mxu0 0.0
        %2698 = vmatpush1.msra.mxu0 %v2668
        %2699 = vmatprep.subr.mxu0 0.0
        %2700 = vmatpush1.msra.mxu0 %v2669
        %2701 = vmatprep.subr.mxu0 0.0
        %2702 = vmatpush1.msra.mxu0 %v2670
        %2703 = vmatprep.subr.mxu0 0.0
        %2704 = vmatpush1.msra.mxu0 0.0
        %2705 = vmatprep.subr.mxu0 0.0
        %2706 = vmatpush1.msra.mxu0 0.0
        %2707 = vmatprep.subr.mxu0 0.0
        %2708 = vmatpush1.msra.mxu0 0.0
        %2709 = vmatprep.subr.mxu0 0.0
        %2710 = vmatpush1.msra.mxu0 0.0
        %2711 = vmatprep.subr.mxu0 0.0
        %2712 = vmatpush1.msra.mxu0 0.0
        %2713 = vmatprep.subr.mxu0 0.0
        %2714 = vmatpush1.msra.mxu0 0.0
        %2715 = vmatprep.subr.mxu0 0.0
        %2716 = vmatpush1.msra.mxu0 0.0
        %2717 = vmatprep.subr.mxu0 0.0
        %2718 = vmatpush1.msra.mxu0 0.0
        %2719 = vmatprep.subr.mxu0 0.0
        %2720 = vmatpush1.msra.mxu0 0.0
        %2721 = vmatprep.subr.mxu0 0.0
        %2722 = vmatpush1.msra.mxu0 0.0
        %2723 = vmatprep.subr.mxu0 0.0
        %2724 = vmatpush1.msra.mxu0 0.0
        %2725 = vmatprep.subr.mxu0 0.0
        %2726 = vmatpush1.msra.mxu0 0.0
        %2727 = vmatprep.subr.mxu0 0.0
        %2728 = vmatpush1.msra.mxu0 0.0
        %2729 = vmatprep.subr.mxu0 0.0
        %2730 = vmatpush1.msra.mxu0 0.0
        %2731 = vmatprep.subr.mxu0 0.0
        %2732 = vmatpush1.msra.mxu0 0.0
        %2733 = vmatprep.subr.mxu0 0.0
        %2734 = vmatpush1.msra.mxu0 0.0
        %2735 = vmatprep.mubr.f32.mxu0 0.0
        %2736 = vmatmul.mubr.f32.gmra.mrb[0].mxu0 %v2616
        %v2737 = vpop.f32.mrb[0].mxu0
        %v2738 = vadd.f32 0.0, %v2737
        %v2739 = vpop.f32.mrb[0].mxu0
        %2740 = vmatprep.mubr.f32.mxu0 0.0
        %2741 = vmatmul.mubr.f32.gmra.mrb[0].mxu0 %v2621
        %v2742 = vpop.f32.mrb[0].mxu0
        %v2743 = vadd.f32 0.0, %v2742
        %v2744 = vpop.f32.mrb[0].mxu0
        %2745 = vmatprep.mubr.f32.mxu0 0.0
        %2746 = vmatmul.mubr.f32.gmra.mrb[0].mxu0 %v2626
        %v2747 = vpop.f32.mrb[0].mxu0
        %v2748 = vadd.f32 0.0, %v2747
        %v2749 = vpop.f32.mrb[0].mxu0
        %2750 = vmatprep.mubr.f32.mxu0 0.0
        %2751 = vmatmul.mubr.f32.gmra.mrb[0].mxu0 %v2631
        %v2752 = vpop.f32.mrb[0].mxu0
        %v2753 = vadd.f32 0.0, %v2752
        %v2754 = vpop.f32.mrb[0].mxu0
        %2755 = vmatprep.mubr.f32.mxu0 0.0
        %2756 = vmatmul.mubr.f32.gmra.mrb[0].mxu0 %v2636
        %v2757 = vpop.f32.mrb[0].mxu0
        %v2758 = vadd.f32 0.0, %v2757
        %v2759 = vpop.f32.mrb[0].mxu0
        %2760 = vmatprep.mubr.f32.mxu0 0.0
        %2761 = vmatmul.mubr.f32.gmra.mrb[0].mxu0 %v2641
        %v2762 = vpop.f32.mrb[0].mxu0
        %v2763 = vadd.f32 0.0, %v2762
        %v2764 = vpop.f32.mrb[0].mxu0
        %2765 = vmatprep.mubr.f32.mxu0 0.0
        %2766 = vmatmul.mubr.f32.gmra.mrb[0].mxu0 %v2646
        %v2767 = vpop.f32.mrb[0].mxu0
        %v2768 = vadd.f32 0.0, %v2767
        %v2769 = vpop.f32.mrb[0].mxu0
        %2770 = vmatprep.mubr.f32.mxu0 0.0
        %2771 = vmatmul.mubr.f32.gmra.mrb[0].mxu0 %v2651
        %v2772 = vpop.f32.mrb[0].mxu0
        %v2773 = vadd.f32 0.0, %v2772
        %v2774 = vpop.f32.mrb[0].mxu0
        %2775 = vdwg.mxu0
        %v2776 = vadd.f32 %v2508, %v2738
        %v2777 = vadd.f32 %v2509, %v2743
        %v2778 = vadd.f32 %v2510, %v2748
        %v2779 = vadd.f32 %v2511, %v2753
        %v2780 = vadd.f32 %v2512, %v2758
        %v2781 = vadd.f32 %v2513, %v2763
        %v2782 = vadd.f32 %v2514, %v2768
        %v2783 = vadd.f32 %v2515, %v2773
        %v2784 = vld [vmem:[#allocation7] sm:$0x1]
        %v2786 = vlaneseq
        %v2787 = vshrl.u32 %v2786, 7
        %v2788 = vsub.s32 0, %v2787
        %v2789 = vrot.slane %v2784, %v2788
        %v2791 = vsub.f32 %v2776, %v2789
        %v2792 = vsub.f32 %v2777, %v2789
        %v2793 = vsub.f32 %v2778, %v2789
        %v2794 = vsub.f32 %v2779, %v2789
        %v2795 = vsub.f32 %v2780, %v2789
        %v2796 = vsub.f32 %v2781, %v2789
        %v2797 = vsub.f32 %v2782, %v2789
        %v2798 = vsub.f32 %v2783, %v2789
        %v2799 = vld [vmem:[#allocation8] sm:$0x1]
        %v2800 = vadd.f32 %v2799, 1e-05
        %v2801 = vrsqrt.pop %v2800
        %v2803 = vlaneseq
        %v2804 = vshrl.u32 %v2803, 7
        %v2805 = vsub.s32 0, %v2804
        %v2806 = vrot.slane %v2801, %v2805
        %v2808 = vmul.f32 %v2791, %v2806
        %v2809 = vmul.f32 %v2792, %v2806
        %v2810 = vmul.f32 %v2793, %v2806
        %v2811 = vmul.f32 %v2794, %v2806
        %v2812 = vmul.f32 %v2795, %v2806
        %v2813 = vmul.f32 %v2796, %v2806
        %v2814 = vmul.f32 %v2797, %v2806
        %v2815 = vmul.f32 %v2798, %v2806
        %v2816 = vmax.f32 %v2808, 0.0
        %v2817 = vmax.f32 %v2809, 0.0
        %v2818 = vmax.f32 %v2810, 0.0
        %v2819 = vmax.f32 %v2811, 0.0
        %v2820 = vmax.f32 %v2812, 0.0
        %v2821 = vmax.f32 %v2813, 0.0
        %v2822 = vmax.f32 %v2814, 0.0
        %v2823 = vmax.f32 %v2815, 0.0
        %2824 = vmatprep.subr.mxu0 0.0
        %2825 = vmatpush1.msra.mxu0 %v2816
        %2826 = vmatprep.subr.mxu0 0.0
        %2827 = vmatpush1.msra.mxu0 %v2817
        %2828 = vmatprep.subr.mxu0 0.0
        %2829 = vmatpush1.msra.mxu0 %v2818
        %2830 = vmatprep.subr.mxu0 0.0
        %2831 = vmatpush1.msra.mxu0 %v2819
        %2832 = vmatprep.subr.mxu0 0.0
        %2833 = vmatpush1.msra.mxu0 %v2820
        %2834 = vmatprep.subr.mxu0 0.0
        %2835 = vmatpush1.msra.mxu0 %v2821
        %2836 = vmatprep.subr.mxu0 0.0
        %2837 = vmatpush1.msra.mxu0 %v2822
        %2838 = vmatprep.subr.mxu0 0.0
        %2839 = vmatpush1.msra.mxu0 %v2823
        %2840 = vmatprep.subr.mxu0 0.0
        %2841 = vmatpush1.msra.mxu0 0.0
        %2842 = vmatprep.subr.mxu0 0.0
        %2843 = vmatpush1.msra.mxu0 0.0
        %2844 = vmatprep.subr.mxu0 0.0
        %2845 = vmatpush1.msra.mxu0 0.0
        %2846 = vmatprep.subr.mxu0 0.0
        %2847 = vmatpush1.msra.mxu0 0.0
        %2848 = vmatprep.subr.mxu0 0.0
        %2849 = vmatpush1.msra.mxu0 0.0
        %2850 = vmatprep.subr.mxu0 0.0
        %2851 = vmatpush1.msra.mxu0 0.0
        %2852 = vmatprep.subr.mxu0 0.0
        %2853 = vmatpush1.msra.mxu0 0.0
        %2854 = vmatprep.subr.mxu0 0.0
        %2855 = vmatpush1.msra.mxu0 0.0
        %2856 = vmatprep.subr.mxu0 0.0
        %2857 = vmatpush1.msra.mxu0 0.0
        %2858 = vmatprep.subr.mxu0 0.0
        %2859 = vmatpush1.msra.mxu0 0.0
        %2860 = vmatprep.subr.mxu0 0.0
        %2861 = vmatpush1.msra.mxu0 0.0
        %2862 = vmatprep.subr.mxu0 0.0
        %2863 = vmatpush1.msra.mxu0 0.0
        %2864 = vmatprep.subr.mxu0 0.0
        %2865 = vmatpush1.msra.mxu0 0.0
        %2866 = vmatprep.subr.mxu0 0.0
        %2867 = vmatpush1.msra.mxu0 0.0
        %2868 = vmatprep.subr.mxu0 0.0
        %2869 = vmatpush1.msra.mxu0 0.0
        %2870 = vmatprep.subr.mxu0 0.0
        %2871 = vmatpush1.msra.mxu0 0.0
        %2872 = vmatprep.subr.mxu0 0.0
        %2873 = vmatpush1.msra.mxu0 0.0
        %2874 = vmatprep.subr.mxu0 0.0
        %2875 = vmatpush1.msra.mxu0 0.0
        %2876 = vmatprep.subr.mxu0 0.0
        %2877 = vmatpush1.msra.mxu0 0.0
        %2878 = vmatprep.subr.mxu0 0.0
        %2879 = vmatpush1.msra.mxu0 0.0
        %2880 = vmatprep.subr.mxu0 0.0
        %2881 = vmatpush1.msra.mxu0 0.0
        %2882 = vmatprep.subr.mxu0 0.0
        %2883 = vmatpush1.msra.mxu0 0.0
        %2884 = vmatprep.subr.mxu0 0.0
        %2885 = vmatpush1.msra.mxu0 0.0
        %2886 = vmatprep.subr.mxu0 0.0
        %2887 = vmatpush1.msra.mxu0 0.0
        %2888 = vmatprep.mubr.f32.mxu0 0.0
        %2889 = vmatmul.mubr.f32.gmra.mrb[0].mxu0 %v537
        %v2890 = vpop.f32.mrb[0].mxu0
        %v2891 = vadd.f32 0.0, %v2890
        %v2892 = vpop.f32.mrb[0].mxu0
        %2893 = vmatprep.mubr.f32.mxu0 0.0
        %2894 = vmatmul.mubr.f32.gmra.mrb[0].mxu0 %v540
        %v2895 = vpop.f32.mrb[0].mxu0
        %v2896 = vadd.f32 0.0, %v2895
        %v2897 = vpop.f32.mrb[0].mxu0
        %2898 = vmatprep.mubr.f32.mxu0 0.0
        %2899 = vmatmul.mubr.f32.gmra.mrb[0].mxu0 %v543
        %v2900 = vpop.f32.mrb[0].mxu0
        %v2901 = vadd.f32 0.0, %v2900
        %v2902 = vpop.f32.mrb[0].mxu0
        %2903 = vmatprep.mubr.f32.mxu0 0.0
        %2904 = vmatmul.mubr.f32.gmra.mrb[0].mxu0 %v546
        %v2905 = vpop.f32.mrb[0].mxu0
        %v2906 = vadd.f32 0.0, %v2905
        %v2907 = vpop.f32.mrb[0].mxu0
        %2908 = vmatprep.mubr.f32.mxu0 0.0
        %2909 = vmatmul.mubr.f32.gmra.mrb[0].mxu0 %v549
        %v2910 = vpop.f32.mrb[0].mxu0
        %v2911 = vadd.f32 0.0, %v2910
        %v2912 = vpop.f32.mrb[0].mxu0
        %2913 = vmatprep.mubr.f32.mxu0 0.0
        %2914 = vmatmul.mubr.f32.gmra.mrb[0].mxu0 %v552
        %v2915 = vpop.f32.mrb[0].mxu0
        %v2916 = vadd.f32 0.0, %v2915
        %v2917 = vpop.f32.mrb[0].mxu0
        %2918 = vmatprep.mubr.f32.mxu0 0.0
        %2919 = vmatmul.mubr.f32.gmra.mrb[0].mxu0 %v555
        %v2920 = vpop.f32.mrb[0].mxu0
        %v2921 = vadd.f32 0.0, %v2920
        %v2922 = vpop.f32.mrb[0].mxu0
        %2923 = vmatprep.mubr.f32.mxu0 0.0
        %2924 = vmatmul.mubr.f32.gmra.mrb[0].mxu0 %v558
        %v2925 = vpop.f32.mrb[0].mxu0
        %v2926 = vadd.f32 0.0, %v2925
        %v2927 = vpop.f32.mrb[0].mxu0
        %2928 = vdwg.mxu0
        %v2929 = vld [vmem:[#allocation10] sm:$0xff]
        %v2930 = vld [vmem:[#allocation10 + $0x8] sm:$0xff]
        %v2931 = vld [vmem:[#allocation10 + $0x10] sm:$0xff]
        %v2932 = vld [vmem:[#allocation10 + $0x18] sm:$0xff]
        %v2933 = vld [vmem:[#allocation10 + $0x20] sm:$0xff]
        %v2934 = vld [vmem:[#allocation10 + $0x28] sm:$0xff]
        %v2935 = vld [vmem:[#allocation10 + $0x30] sm:$0xff]
        %v2936 = vld [vmem:[#allocation10 + $0x38] sm:$0xff]
        %v2937 = vld [vmem:[#allocation10 + $0x40] sm:$0xff]
        %v2938 = vld [vmem:[#allocation10 + $0x48] sm:$0xff]
        %v2939 = vld [vmem:[#allocation10 + $0x50] sm:$0xff]
        %v2940 = vld [vmem:[#allocation10 + $0x58] sm:$0xff]
        %v2941 = vld [vmem:[#allocation10 + $0x60] sm:$0xff]
        %v2942 = vld [vmem:[#allocation10 + $0x68] sm:$0xff]
        %v2943 = vld [vmem:[#allocation10 + $0x70] sm:$0xff]
        %v2944 = vld [vmem:[#allocation10 + $0x78] sm:$0xff]
        %2945 = vmatprep.subr.mxu0 0.0
        %2946 = vmatpush1.msra.mxu0 %v2816
        %2947 = vmatprep.subr.mxu0 0.0
        %2948 = vmatpush1.msra.mxu0 %v2817
        %2949 = vmatprep.subr.mxu0 0.0
        %2950 = vmatpush1.msra.mxu0 %v2818
        %2951 = vmatprep.subr.mxu0 0.0
        %2952 = vmatpush1.msra.mxu0 %v2819
        %2953 = vmatprep.subr.mxu0 0.0
        %2954 = vmatpush1.msra.mxu0 %v2820
        %2955 = vmatprep.subr.mxu0 0.0
        %2956 = vmatpush1.msra.mxu0 %v2821
        %2957 = vmatprep.subr.mxu0 0.0
        %2958 = vmatpush1.msra.mxu0 %v2822
        %2959 = vmatprep.subr.mxu0 0.0
        %2960 = vmatpush1.msra.mxu0 %v2823
        %2961 = vmatprep.subr.mxu0 0.0
        %2962 = vmatpush1.msra.mxu0 0.0
        %2963 = vmatprep.subr.mxu0 0.0
        %2964 = vmatpush1.msra.mxu0 0.0
        %2965 = vmatprep.subr.mxu0 0.0
        %2966 = vmatpush1.msra.mxu0 0.0
        %2967 = vmatprep.subr.mxu0 0.0
        %2968 = vmatpush1.msra.mxu0 0.0
        %2969 = vmatprep.subr.mxu0 0.0
        %2970 = vmatpush1.msra.mxu0 0.0
        %2971 = vmatprep.subr.mxu0 0.0
        %2972 = vmatpush1.msra.mxu0 0.0
        %2973 = vmatprep.subr.mxu0 0.0
        %2974 = vmatpush1.msra.mxu0 0.0
        %2975 = vmatprep.subr.mxu0 0.0
        %2976 = vmatpush1.msra.mxu0 0.0
        %2977 = vmatprep.subr.mxu0 0.0
        %2978 = vmatpush1.msra.mxu0 0.0
        %2979 = vmatprep.subr.mxu0 0.0
        %2980 = vmatpush1.msra.mxu0 0.0
        %2981 = vmatprep.subr.mxu0 0.0
        %2982 = vmatpush1.msra.mxu0 0.0
        %2983 = vmatprep.subr.mxu0 0.0
        %2984 = vmatpush1.msra.mxu0 0.0
        %2985 = vmatprep.subr.mxu0 0.0
        %2986 = vmatpush1.msra.mxu0 0.0
        %2987 = vmatprep.subr.mxu0 0.0
        %2988 = vmatpush1.msra.mxu0 0.0
        %2989 = vmatprep.subr.mxu0 0.0
        %2990 = vmatpush1.msra.mxu0 0.0
        %2991 = vmatprep.subr.mxu0 0.0
        %2992 = vmatpush1.msra.mxu0 0.0
        %2993 = vmatprep.subr.mxu0 0.0
        %2994 = vmatpush1.msra.mxu0 0.0
        %2995 = vmatprep.subr.mxu0 0.0
        %2996 = vmatpush1.msra.mxu0 0.0
        %2997 = vmatprep.subr.mxu0 0.0
        %2998 = vmatpush1.msra.mxu0 0.0
        %2999 = vmatprep.subr.mxu0 0.0
        %3000 = vmatpush1.msra.mxu0 0.0
        %3001 = vmatprep.subr.mxu0 0.0
        %3002 = vmatpush1.msra.mxu0 0.0
        %3003 = vmatprep.subr.mxu0 0.0
        %3004 = vmatpush1.msra.mxu0 0.0
        %3005 = vmatprep.subr.mxu0 0.0
        %3006 = vmatpush1.msra.mxu0 0.0
        %3007 = vmatprep.subr.mxu0 0.0
        %3008 = vmatpush1.msra.mxu0 0.0
        %3009 = vmatprep.mubr.f32.mxu0 0.0
        %3010 = vmatmul.mubr.f32.gmra.mrb[0].mxu0 %v691
        %v3011 = vpop.f32.mrb[0].mxu0
        %v3012 = vadd.f32 0.0, %v3011
        %v3013 = vpop.f32.mrb[0].mxu0
        %3014 = vmatprep.mubr.f32.mxu0 0.0
        %3015 = vmatmul.mubr.f32.gmra.mrb[0].mxu0 %v694
        %v3016 = vpop.f32.mrb[0].mxu0
        %v3017 = vadd.f32 0.0, %v3016
        %v3018 = vpop.f32.mrb[0].mxu0
        %3019 = vmatprep.mubr.f32.mxu0 0.0
        %3020 = vmatmul.mubr.f32.gmra.mrb[0].mxu0 %v697
        %v3021 = vpop.f32.mrb[0].mxu0
        %v3022 = vadd.f32 0.0, %v3021
        %v3023 = vpop.f32.mrb[0].mxu0
        %3024 = vmatprep.mubr.f32.mxu0 0.0
        %3025 = vmatmul.mubr.f32.gmra.mrb[0].mxu0 %v700
        %v3026 = vpop.f32.mrb[0].mxu0
        %v3027 = vadd.f32 0.0, %v3026
        %v3028 = vpop.f32.mrb[0].mxu0
        %3029 = vmatprep.mubr.f32.mxu0 0.0
        %3030 = vmatmul.mubr.f32.gmra.mrb[0].mxu0 %v703
        %v3031 = vpop.f32.mrb[0].mxu0
        %v3032 = vadd.f32 0.0, %v3031
        %v3033 = vpop.f32.mrb[0].mxu0
        %3034 = vmatprep.mubr.f32.mxu0 0.0
        %3035 = vmatmul.mubr.f32.gmra.mrb[0].mxu0 %v706
        %v3036 = vpop.f32.mrb[0].mxu0
        %v3037 = vadd.f32 0.0, %v3036
        %v3038 = vpop.f32.mrb[0].mxu0
        %3039 = vmatprep.mubr.f32.mxu0 0.0
        %3040 = vmatmul.mubr.f32.gmra.mrb[0].mxu0 %v709
        %v3041 = vpop.f32.mrb[0].mxu0
        %v3042 = vadd.f32 0.0, %v3041
        %v3043 = vpop.f32.mrb[0].mxu0
        %3044 = vmatprep.mubr.f32.mxu0 0.0
        %3045 = vmatmul.mubr.f32.gmra.mrb[0].mxu0 %v712
        %v3046 = vpop.f32.mrb[0].mxu0
        %v3047 = vadd.f32 0.0, %v3046
        %v3048 = vpop.f32.mrb[0].mxu0
        %3049 = vdwg.mxu0
        %s3050 = scalar_lea.vmem [#allocation10], 128
        %v3051 = vld [vmem:[%s3050] sm:$0xff]
        %v3052 = vld [vmem:[%s3050 + $0x8] sm:$0xff]
        %v3053 = vld [vmem:[%s3050 + $0x10] sm:$0xff]
        %v3054 = vld [vmem:[%s3050 + $0x18] sm:$0xff]
        %v3055 = vld [vmem:[%s3050 + $0x20] sm:$0xff]
        %v3056 = vld [vmem:[%s3050 + $0x28] sm:$0xff]
        %v3057 = vld [vmem:[%s3050 + $0x30] sm:$0xff]
        %v3058 = vld [vmem:[%s3050 + $0x38] sm:$0xff]
        %v3059 = vld [vmem:[%s3050 + $0x40] sm:$0xff]
        %v3060 = vld [vmem:[%s3050 + $0x48] sm:$0xff]
        %v3061 = vld [vmem:[%s3050 + $0x50] sm:$0xff]
        %v3062 = vld [vmem:[%s3050 + $0x58] sm:$0xff]
        %v3063 = vld [vmem:[%s3050 + $0x60] sm:$0xff]
        %v3064 = vld [vmem:[%s3050 + $0x68] sm:$0xff]
        %v3065 = vld [vmem:[%s3050 + $0x70] sm:$0xff]
        %v3066 = vld [vmem:[%s3050 + $0x78] sm:$0xff]
        %3067 = vmatprep.subr.mxu0 0.0
        %3068 = vmatpush1.msra.mxu0 %v3051
        %3069 = vmatprep.subr.mxu0 0.0
        %3070 = vmatpush1.msra.mxu0 %v3052
        %3071 = vmatprep.subr.mxu0 0.0
        %3072 = vmatpush1.msra.mxu0 %v3053
        %3073 = vmatprep.subr.mxu0 0.0
        %3074 = vmatpush1.msra.mxu0 %v3054
        %3075 = vmatprep.subr.mxu0 0.0
        %3076 = vmatpush1.msra.mxu0 %v3055
        %3077 = vmatprep.subr.mxu0 0.0
        %3078 = vmatpush1.msra.mxu0 %v3056
        %3079 = vmatprep.subr.mxu0 0.0
        %3080 = vmatpush1.msra.mxu0 %v3057
        %3081 = vmatprep.subr.mxu0 0.0
        %3082 = vmatpush1.msra.mxu0 %v3058
        %3083 = vmatprep.subr.mxu0 0.0
        %3084 = vmatpush1.msra.mxu0 %v3059
        %3085 = vmatprep.subr.mxu0 0.0
        %3086 = vmatpush1.msra.mxu0 %v3060
        %3087 = vmatprep.subr.mxu0 0.0
        %3088 = vmatpush1.msra.mxu0 %v3061
        %3089 = vmatprep.subr.mxu0 0.0
        %3090 = vmatpush1.msra.mxu0 %v3062
        %3091 = vmatprep.subr.mxu0 0.0
        %3092 = vmatpush1.msra.mxu0 %v3063
        %3093 = vmatprep.subr.mxu0 0.0
        %3094 = vmatpush1.msra.mxu0 %v3064
        %3095 = vmatprep.subr.mxu0 0.0
        %3096 = vmatpush1.msra.mxu0 %v3065
        %3097 = vmatprep.subr.mxu0 0.0
        %3098 = vmatpush1.msra.mxu0 %v3066
        %3099 = vmatprep.subr.mxu0 0.0
        %3100 = vmatpush1.msra.mxu0 0.0
        %3101 = vmatprep.subr.mxu0 0.0
        %3102 = vmatpush1.msra.mxu0 0.0
        %3103 = vmatprep.subr.mxu0 0.0
        %3104 = vmatpush1.msra.mxu0 0.0
        %3105 = vmatprep.subr.mxu0 0.0
        %3106 = vmatpush1.msra.mxu0 0.0
        %3107 = vmatprep.subr.mxu0 0.0
        %3108 = vmatpush1.msra.mxu0 0.0
        %3109 = vmatprep.subr.mxu0 0.0
        %3110 = vmatpush1.msra.mxu0 0.0
        %3111 = vmatprep.subr.mxu0 0.0
        %3112 = vmatpush1.msra.mxu0 0.0
        %3113 = vmatprep.subr.mxu0 0.0
        %3114 = vmatpush1.msra.mxu0 0.0
        %3115 = vmatprep.subr.mxu0 0.0
        %3116 = vmatpush1.msra.mxu0 0.0
        %3117 = vmatprep.subr.mxu0 0.0
        %3118 = vmatpush1.msra.mxu0 0.0
        %3119 = vmatprep.subr.mxu0 0.0
        %3120 = vmatpush1.msra.mxu0 0.0
        %3121 = vmatprep.subr.mxu0 0.0
        %3122 = vmatpush1.msra.mxu0 0.0
        %3123 = vmatprep.subr.mxu0 0.0
        %3124 = vmatpush1.msra.mxu0 0.0
        %3125 = vmatprep.subr.mxu0 0.0
        %3126 = vmatpush1.msra.mxu0 0.0
        %3127 = vmatprep.subr.mxu0 0.0
        %3128 = vmatpush1.msra.mxu0 0.0
        %3129 = vmatprep.subr.mxu0 0.0
        %3130 = vmatpush1.msra.mxu0 0.0
        %3131 = vmatprep.mubr.f32.mxu0 0.0
        %3132 = vmatmul.mubr.f32.gmra.mrb[0].mxu0 %v3012
        %v3133 = vpop.f32.mrb[0].mxu0
        %v3134 = vadd.f32 0.0, %v3133
        %v3135 = vpop.f32.mrb[0].mxu0
        %3136 = vmatprep.mubr.f32.mxu0 0.0
        %3137 = vmatmul.mubr.f32.gmra.mrb[0].mxu0 %v3017
        %v3138 = vpop.f32.mrb[0].mxu0
        %v3139 = vadd.f32 0.0, %v3138
        %v3140 = vpop.f32.mrb[0].mxu0
        %3141 = vmatprep.mubr.f32.mxu0 0.0
        %3142 = vmatmul.mubr.f32.gmra.mrb[0].mxu0 %v3022
        %v3143 = vpop.f32.mrb[0].mxu0
        %v3144 = vadd.f32 0.0, %v3143
        %v3145 = vpop.f32.mrb[0].mxu0
        %3146 = vmatprep.mubr.f32.mxu0 0.0
        %3147 = vmatmul.mubr.f32.gmra.mrb[0].mxu0 %v3027
        %v3148 = vpop.f32.mrb[0].mxu0
        %v3149 = vadd.f32 0.0, %v3148
        %v3150 = vpop.f32.mrb[0].mxu0
        %3151 = vmatprep.mubr.f32.mxu0 0.0
        %3152 = vmatmul.mubr.f32.gmra.mrb[0].mxu0 %v3032
        %v3153 = vpop.f32.mrb[0].mxu0
        %v3154 = vadd.f32 0.0, %v3153
        %v3155 = vpop.f32.mrb[0].mxu0
        %3156 = vmatprep.mubr.f32.mxu0 0.0
        %3157 = vmatmul.mubr.f32.gmra.mrb[0].mxu0 %v3037
        %v3158 = vpop.f32.mrb[0].mxu0
        %v3159 = vadd.f32 0.0, %v3158
        %v3160 = vpop.f32.mrb[0].mxu0
        %3161 = vmatprep.mubr.f32.mxu0 0.0
        %3162 = vmatmul.mubr.f32.gmra.mrb[0].mxu0 %v3042
        %v3163 = vpop.f32.mrb[0].mxu0
        %v3164 = vadd.f32 0.0, %v3163
        %v3165 = vpop.f32.mrb[0].mxu0
        %3166 = vmatprep.mubr.f32.mxu0 0.0
        %3167 = vmatmul.mubr.f32.gmra.mrb[0].mxu0 %v3047
        %v3168 = vpop.f32.mrb[0].mxu0
        %v3169 = vadd.f32 0.0, %v3168
        %v3170 = vpop.f32.mrb[0].mxu0
        %3171 = vdwg.mxu0
        %3172 = vmatprep.subr.mxu0 0.0
        %3173 = vmatpush1.msra.mxu0 %v2929
        %3174 = vmatprep.subr.mxu0 0.0
        %3175 = vmatpush1.msra.mxu0 %v2930
        %3176 = vmatprep.subr.mxu0 0.0
        %3177 = vmatpush1.msra.mxu0 %v2931
        %3178 = vmatprep.subr.mxu0 0.0
        %3179 = vmatpush1.msra.mxu0 %v2932
        %3180 = vmatprep.subr.mxu0 0.0
        %3181 = vmatpush1.msra.mxu0 %v2933
        %3182 = vmatprep.subr.mxu0 0.0
        %3183 = vmatpush1.msra.mxu0 %v2934
        %3184 = vmatprep.subr.mxu0 0.0
        %3185 = vmatpush1.msra.mxu0 %v2935
        %3186 = vmatprep.subr.mxu0 0.0
        %3187 = vmatpush1.msra.mxu0 %v2936
        %3188 = vmatprep.subr.mxu0 0.0
        %3189 = vmatpush1.msra.mxu0 %v2937
        %3190 = vmatprep.subr.mxu0 0.0
        %3191 = vmatpush1.msra.mxu0 %v2938
        %3192 = vmatprep.subr.mxu0 0.0
        %3193 = vmatpush1.msra.mxu0 %v2939
        %3194 = vmatprep.subr.mxu0 0.0
        %3195 = vmatpush1.msra.mxu0 %v2940
        %3196 = vmatprep.subr.mxu0 0.0
        %3197 = vmatpush1.msra.mxu0 %v2941
        %3198 = vmatprep.subr.mxu0 0.0
        %3199 = vmatpush1.msra.mxu0 %v2942
        %3200 = vmatprep.subr.mxu0 0.0
        %3201 = vmatpush1.msra.mxu0 %v2943
        %3202 = vmatprep.subr.mxu0 0.0
        %3203 = vmatpush1.msra.mxu0 %v2944
        %3204 = vmatprep.subr.mxu0 0.0
        %3205 = vmatpush1.msra.mxu0 0.0
        %3206 = vmatprep.subr.mxu0 0.0
        %3207 = vmatpush1.msra.mxu0 0.0
        %3208 = vmatprep.subr.mxu0 0.0
        %3209 = vmatpush1.msra.mxu0 0.0
        %3210 = vmatprep.subr.mxu0 0.0
        %3211 = vmatpush1.msra.mxu0 0.0
        %3212 = vmatprep.subr.mxu0 0.0
        %3213 = vmatpush1.msra.mxu0 0.0
        %3214 = vmatprep.subr.mxu0 0.0
        %3215 = vmatpush1.msra.mxu0 0.0
        %3216 = vmatprep.subr.mxu0 0.0
        %3217 = vmatpush1.msra.mxu0 0.0
        %3218 = vmatprep.subr.mxu0 0.0
        %3219 = vmatpush1.msra.mxu0 0.0
        %3220 = vmatprep.subr.mxu0 0.0
        %3221 = vmatpush1.msra.mxu0 0.0
        %3222 = vmatprep.subr.mxu0 0.0
        %3223 = vmatpush1.msra.mxu0 0.0
        %3224 = vmatprep.subr.mxu0 0.0
        %3225 = vmatpush1.msra.mxu0 0.0
        %3226 = vmatprep.subr.mxu0 0.0
        %3227 = vmatpush1.msra.mxu0 0.0
        %3228 = vmatprep.subr.mxu0 0.0
        %3229 = vmatpush1.msra.mxu0 0.0
        %3230 = vmatprep.subr.mxu0 0.0
        %3231 = vmatpush1.msra.mxu0 0.0
        %3232 = vmatprep.subr.mxu0 0.0
        %3233 = vmatpush1.msra.mxu0 0.0
        %3234 = vmatprep.subr.mxu0 0.0
        %3235 = vmatpush1.msra.mxu0 0.0
        %3236 = vmatprep.mubr.f32.mxu0 0.0
        %3237 = vmatmul.mubr.f32.gmra.mrb[0].mxu0 %v2891
        %v3238 = vpop.f32.mrb[0].mxu0
        %v3239 = vadd.f32 %v3134, %v3238
        %v3240 = vpop.f32.mrb[0].mxu0
        %3241 = vmatprep.mubr.f32.mxu0 0.0
        %3242 = vmatmul.mubr.f32.gmra.mrb[0].mxu0 %v2896
        %v3243 = vpop.f32.mrb[0].mxu0
        %v3244 = vadd.f32 %v3139, %v3243
        %v3245 = vpop.f32.mrb[0].mxu0
        %3246 = vmatprep.mubr.f32.mxu0 0.0
        %3247 = vmatmul.mubr.f32.gmra.mrb[0].mxu0 %v2901
        %v3248 = vpop.f32.mrb[0].mxu0
        %v3249 = vadd.f32 %v3144, %v3248
        %v3250 = vpop.f32.mrb[0].mxu0
        %3251 = vmatprep.mubr.f32.mxu0 0.0
        %3252 = vmatmul.mubr.f32.gmra.mrb[0].mxu0 %v2906
        %v3253 = vpop.f32.mrb[0].mxu0
        %v3254 = vadd.f32 %v3149, %v3253
        %v3255 = vpop.f32.mrb[0].mxu0
        %3256 = vmatprep.mubr.f32.mxu0 0.0
        %3257 = vmatmul.mubr.f32.gmra.mrb[0].mxu0 %v2911
        %v3258 = vpop.f32.mrb[0].mxu0
        %v3259 = vadd.f32 %v3154, %v3258
        %v3260 = vpop.f32.mrb[0].mxu0
        %3261 = vmatprep.mubr.f32.mxu0 0.0
        %3262 = vmatmul.mubr.f32.gmra.mrb[0].mxu0 %v2916
        %v3263 = vpop.f32.mrb[0].mxu0
        %v3264 = vadd.f32 %v3159, %v3263
        %v3265 = vpop.f32.mrb[0].mxu0
        %3266 = vmatprep.mubr.f32.mxu0 0.0
        %3267 = vmatmul.mubr.f32.gmra.mrb[0].mxu0 %v2921
        %v3268 = vpop.f32.mrb[0].mxu0
        %v3269 = vadd.f32 %v3164, %v3268
        %v3270 = vpop.f32.mrb[0].mxu0
        %3271 = vmatprep.mubr.f32.mxu0 0.0
        %3272 = vmatmul.mubr.f32.gmra.mrb[0].mxu0 %v2926
        %v3273 = vpop.f32.mrb[0].mxu0
        %v3274 = vadd.f32 %v3169, %v3273
        %v3275 = vpop.f32.mrb[0].mxu0
        %3276 = vdwg.mxu0
        %3277 = vmatprep.subr.mxu0 0.0
        %3278 = vmatpush1.msra.mxu0 %v2816
        %3279 = vmatprep.subr.mxu0 0.0
        %3280 = vmatpush1.msra.mxu0 %v2817
        %3281 = vmatprep.subr.mxu0 0.0
        %3282 = vmatpush1.msra.mxu0 %v2818
        %3283 = vmatprep.subr.mxu0 0.0
        %3284 = vmatpush1.msra.mxu0 %v2819
        %3285 = vmatprep.subr.mxu0 0.0
        %3286 = vmatpush1.msra.mxu0 %v2820
        %3287 = vmatprep.subr.mxu0 0.0
        %3288 = vmatpush1.msra.mxu0 %v2821
        %3289 = vmatprep.subr.mxu0 0.0
        %3290 = vmatpush1.msra.mxu0 %v2822
        %3291 = vmatprep.subr.mxu0 0.0
        %3292 = vmatpush1.msra.mxu0 %v2823
        %3293 = vmatprep.subr.mxu0 0.0
        %3294 = vmatpush1.msra.mxu0 0.0
        %3295 = vmatprep.subr.mxu0 0.0
        %3296 = vmatpush1.msra.mxu0 0.0
        %3297 = vmatprep.subr.mxu0 0.0
        %3298 = vmatpush1.msra.mxu0 0.0
        %3299 = vmatprep.subr.mxu0 0.0
        %3300 = vmatpush1.msra.mxu0 0.0
        %3301 = vmatprep.subr.mxu0 0.0
        %3302 = vmatpush1.msra.mxu0 0.0
        %3303 = vmatprep.subr.mxu0 0.0
        %3304 = vmatpush1.msra.mxu0 0.0
        %3305 = vmatprep.subr.mxu0 0.0
        %3306 = vmatpush1.msra.mxu0 0.0
        %3307 = vmatprep.subr.mxu0 0.0
        %3308 = vmatpush1.msra.mxu0 0.0
        %3309 = vmatprep.subr.mxu0 0.0
        %3310 = vmatpush1.msra.mxu0 0.0
        %3311 = vmatprep.subr.mxu0 0.0
        %3312 = vmatpush1.msra.mxu0 0.0
        %3313 = vmatprep.subr.mxu0 0.0
        %3314 = vmatpush1.msra.mxu0 0.0
        %3315 = vmatprep.subr.mxu0 0.0
        %3316 = vmatpush1.msra.mxu0 0.0
        %3317 = vmatprep.subr.mxu0 0.0
        %3318 = vmatpush1.msra.mxu0 0.0
        %3319 = vmatprep.subr.mxu0 0.0
        %3320 = vmatpush1.msra.mxu0 0.0
        %3321 = vmatprep.subr.mxu0 0.0
        %3322 = vmatpush1.msra.mxu0 0.0
        %3323 = vmatprep.subr.mxu0 0.0
        %3324 = vmatpush1.msra.mxu0 0.0
        %3325 = vmatprep.subr.mxu0 0.0
        %3326 = vmatpush1.msra.mxu0 0.0
        %3327 = vmatprep.subr.mxu0 0.0
        %3328 = vmatpush1.msra.mxu0 0.0
        %3329 = vmatprep.subr.mxu0 0.0
        %3330 = vmatpush1.msra.mxu0 0.0
        %3331 = vmatprep.subr.mxu0 0.0
        %3332 = vmatpush1.msra.mxu0 0.0
        %3333 = vmatprep.subr.mxu0 0.0
        %3334 = vmatpush1.msra.mxu0 0.0
        %3335 = vmatprep.subr.mxu0 0.0
        %3336 = vmatpush1.msra.mxu0 0.0
        %3337 = vmatprep.subr.mxu0 0.0
        %3338 = vmatpush1.msra.mxu0 0.0
        %3339 = vmatprep.subr.mxu0 0.0
        %3340 = vmatpush1.msra.mxu0 0.0
        %3341 = vmatprep.mubr.f32.mxu0 0.0
        %3342 = vmatmul.mubr.f32.gmra.mrb[0].mxu0 %v1056
        %v3343 = vpop.f32.mrb[0].mxu0
        %v3344 = vadd.f32 0.0, %v3343
        %v3345 = vpop.f32.mrb[0].mxu0
        %3346 = vmatprep.mubr.f32.mxu0 0.0
        %3347 = vmatmul.mubr.f32.gmra.mrb[0].mxu0 %v1059
        %v3348 = vpop.f32.mrb[0].mxu0
        %v3349 = vadd.f32 0.0, %v3348
        %v3350 = vpop.f32.mrb[0].mxu0
        %3351 = vmatprep.mubr.f32.mxu0 0.0
        %3352 = vmatmul.mubr.f32.gmra.mrb[0].mxu0 %v1062
        %v3353 = vpop.f32.mrb[0].mxu0
        %v3354 = vadd.f32 0.0, %v3353
        %v3355 = vpop.f32.mrb[0].mxu0
        %3356 = vmatprep.mubr.f32.mxu0 0.0
        %3357 = vmatmul.mubr.f32.gmra.mrb[0].mxu0 %v1065
        %v3358 = vpop.f32.mrb[0].mxu0
        %v3359 = vadd.f32 0.0, %v3358
        %v3360 = vpop.f32.mrb[0].mxu0
        %3361 = vmatprep.mubr.f32.mxu0 0.0
        %3362 = vmatmul.mubr.f32.gmra.mrb[0].mxu0 %v1068
        %v3363 = vpop.f32.mrb[0].mxu0
        %v3364 = vadd.f32 0.0, %v3363
        %v3365 = vpop.f32.mrb[0].mxu0
        %3366 = vmatprep.mubr.f32.mxu0 0.0
        %3367 = vmatmul.mubr.f32.gmra.mrb[0].mxu0 %v1071
        %v3368 = vpop.f32.mrb[0].mxu0
        %v3369 = vadd.f32 0.0, %v3368
        %v3370 = vpop.f32.mrb[0].mxu0
        %3371 = vmatprep.mubr.f32.mxu0 0.0
        %3372 = vmatmul.mubr.f32.gmra.mrb[0].mxu0 %v1074
        %v3373 = vpop.f32.mrb[0].mxu0
        %v3374 = vadd.f32 0.0, %v3373
        %v3375 = vpop.f32.mrb[0].mxu0
        %3376 = vmatprep.mubr.f32.mxu0 0.0
        %3377 = vmatmul.mubr.f32.gmra.mrb[0].mxu0 %v1077
        %v3378 = vpop.f32.mrb[0].mxu0
        %v3379 = vadd.f32 0.0, %v3378
        %v3380 = vpop.f32.mrb[0].mxu0
        %3381 = vdwg.mxu0
        %s3382 = scalar_lea.vmem [#allocation10], 256
        %v3383 = vld [vmem:[%s3382] sm:$0xff]
        %v3384 = vld [vmem:[%s3382 + $0x8] sm:$0xff]
        %v3385 = vld [vmem:[%s3382 + $0x10] sm:$0xff]
        %v3386 = vld [vmem:[%s3382 + $0x18] sm:$0xff]
        %v3387 = vld [vmem:[%s3382 + $0x20] sm:$0xff]
        %v3388 = vld [vmem:[%s3382 + $0x28] sm:$0xff]
        %v3389 = vld [vmem:[%s3382 + $0x30] sm:$0xff]
        %v3390 = vld [vmem:[%s3382 + $0x38] sm:$0xff]
        %v3391 = vld [vmem:[%s3382 + $0x40] sm:$0xff]
        %v3392 = vld [vmem:[%s3382 + $0x48] sm:$0xff]
        %v3393 = vld [vmem:[%s3382 + $0x50] sm:$0xff]
        %v3394 = vld [vmem:[%s3382 + $0x58] sm:$0xff]
        %v3395 = vld [vmem:[%s3382 + $0x60] sm:$0xff]
        %v3396 = vld [vmem:[%s3382 + $0x68] sm:$0xff]
        %v3397 = vld [vmem:[%s3382 + $0x70] sm:$0xff]
        %v3398 = vld [vmem:[%s3382 + $0x78] sm:$0xff]
        %3399 = vmatprep.subr.mxu0 0.0
        %3400 = vmatpush1.msra.mxu0 %v3383
        %3401 = vmatprep.subr.mxu0 0.0
        %3402 = vmatpush1.msra.mxu0 %v3384
        %3403 = vmatprep.subr.mxu0 0.0
        %3404 = vmatpush1.msra.mxu0 %v3385
        %3405 = vmatprep.subr.mxu0 0.0
        %3406 = vmatpush1.msra.mxu0 %v3386
        %3407 = vmatprep.subr.mxu0 0.0
        %3408 = vmatpush1.msra.mxu0 %v3387
        %3409 = vmatprep.subr.mxu0 0.0
        %3410 = vmatpush1.msra.mxu0 %v3388
        %3411 = vmatprep.subr.mxu0 0.0
        %3412 = vmatpush1.msra.mxu0 %v3389
        %3413 = vmatprep.subr.mxu0 0.0
        %3414 = vmatpush1.msra.mxu0 %v3390
        %3415 = vmatprep.subr.mxu0 0.0
        %3416 = vmatpush1.msra.mxu0 %v3391
        %3417 = vmatprep.subr.mxu0 0.0
        %3418 = vmatpush1.msra.mxu0 %v3392
        %3419 = vmatprep.subr.mxu0 0.0
        %3420 = vmatpush1.msra.mxu0 %v3393
        %3421 = vmatprep.subr.mxu0 0.0
        %3422 = vmatpush1.msra.mxu0 %v3394
        %3423 = vmatprep.subr.mxu0 0.0
        %3424 = vmatpush1.msra.mxu0 %v3395
        %3425 = vmatprep.subr.mxu0 0.0
        %3426 = vmatpush1.msra.mxu0 %v3396
        %3427 = vmatprep.subr.mxu0 0.0
        %3428 = vmatpush1.msra.mxu0 %v3397
        %3429 = vmatprep.subr.mxu0 0.0
        %3430 = vmatpush1.msra.mxu0 %v3398
        %3431 = vmatprep.subr.mxu0 0.0
        %3432 = vmatpush1.msra.mxu0 0.0
        %3433 = vmatprep.subr.mxu0 0.0
        %3434 = vmatpush1.msra.mxu0 0.0
        %3435 = vmatprep.subr.mxu0 0.0
        %3436 = vmatpush1.msra.mxu0 0.0
        %3437 = vmatprep.subr.mxu0 0.0
        %3438 = vmatpush1.msra.mxu0 0.0
        %3439 = vmatprep.subr.mxu0 0.0
        %3440 = vmatpush1.msra.mxu0 0.0
        %3441 = vmatprep.subr.mxu0 0.0
        %3442 = vmatpush1.msra.mxu0 0.0
        %3443 = vmatprep.subr.mxu0 0.0
        %3444 = vmatpush1.msra.mxu0 0.0
        %3445 = vmatprep.subr.mxu0 0.0
        %3446 = vmatpush1.msra.mxu0 0.0
        %3447 = vmatprep.subr.mxu0 0.0
        %3448 = vmatpush1.msra.mxu0 0.0
        %3449 = vmatprep.subr.mxu0 0.0
        %3450 = vmatpush1.msra.mxu0 0.0
        %3451 = vmatprep.subr.mxu0 0.0
        %3452 = vmatpush1.msra.mxu0 0.0
        %3453 = vmatprep.subr.mxu0 0.0
        %3454 = vmatpush1.msra.mxu0 0.0
        %3455 = vmatprep.subr.mxu0 0.0
        %3456 = vmatpush1.msra.mxu0 0.0
        %3457 = vmatprep.subr.mxu0 0.0
        %3458 = vmatpush1.msra.mxu0 0.0
        %3459 = vmatprep.subr.mxu0 0.0
        %3460 = vmatpush1.msra.mxu0 0.0
        %3461 = vmatprep.subr.mxu0 0.0
        %3462 = vmatpush1.msra.mxu0 0.0
        %3463 = vmatprep.mubr.f32.mxu0 0.0
        %3464 = vmatmul.mubr.f32.gmra.mrb[0].mxu0 %v3344
        %v3465 = vpop.f32.mrb[0].mxu0
        %v3466 = vadd.f32 0.0, %v3465
        %v3467 = vpop.f32.mrb[0].mxu0
        %3468 = vmatprep.mubr.f32.mxu0 0.0
        %3469 = vmatmul.mubr.f32.gmra.mrb[0].mxu0 %v3349
        %v3470 = vpop.f32.mrb[0].mxu0
        %v3471 = vadd.f32 0.0, %v3470
        %v3472 = vpop.f32.mrb[0].mxu0
        %3473 = vmatprep.mubr.f32.mxu0 0.0
        %3474 = vmatmul.mubr.f32.gmra.mrb[0].mxu0 %v3354
        %v3475 = vpop.f32.mrb[0].mxu0
        %v3476 = vadd.f32 0.0, %v3475
        %v3477 = vpop.f32.mrb[0].mxu0
        %3478 = vmatprep.mubr.f32.mxu0 0.0
        %3479 = vmatmul.mubr.f32.gmra.mrb[0].mxu0 %v3359
        %v3480 = vpop.f32.mrb[0].mxu0
        %v3481 = vadd.f32 0.0, %v3480
        %v3482 = vpop.f32.mrb[0].mxu0
        %3483 = vmatprep.mubr.f32.mxu0 0.0
        %3484 = vmatmul.mubr.f32.gmra.mrb[0].mxu0 %v3364
        %v3485 = vpop.f32.mrb[0].mxu0
        %v3486 = vadd.f32 0.0, %v3485
        %v3487 = vpop.f32.mrb[0].mxu0
        %3488 = vmatprep.mubr.f32.mxu0 0.0
        %3489 = vmatmul.mubr.f32.gmra.mrb[0].mxu0 %v3369
        %v3490 = vpop.f32.mrb[0].mxu0
        %v3491 = vadd.f32 0.0, %v3490
        %v3492 = vpop.f32.mrb[0].mxu0
        %3493 = vmatprep.mubr.f32.mxu0 0.0
        %3494 = vmatmul.mubr.f32.gmra.mrb[0].mxu0 %v3374
        %v3495 = vpop.f32.mrb[0].mxu0
        %v3496 = vadd.f32 0.0, %v3495
        %v3497 = vpop.f32.mrb[0].mxu0
        %3498 = vmatprep.mubr.f32.mxu0 0.0
        %3499 = vmatmul.mubr.f32.gmra.mrb[0].mxu0 %v3379
        %v3500 = vpop.f32.mrb[0].mxu0
        %v3501 = vadd.f32 0.0, %v3500
        %v3502 = vpop.f32.mrb[0].mxu0
        %3503 = vdwg.mxu0
        %v3504 = vadd.f32 %v3239, %v3466
        %v3505 = vadd.f32 %v3244, %v3471
        %v3506 = vadd.f32 %v3249, %v3476
        %v3507 = vadd.f32 %v3254, %v3481
        %v3508 = vadd.f32 %v3259, %v3486
        %v3509 = vadd.f32 %v3264, %v3491
        %v3510 = vadd.f32 %v3269, %v3496
        %v3511 = vadd.f32 %v3274, %v3501
        %3512 = vmatprep.subr.mxu0 0.0
        %3513 = vmatpush1.msra.mxu0 %v2816
        %3514 = vmatprep.subr.mxu0 0.0
        %3515 = vmatpush1.msra.mxu0 %v2817
        %3516 = vmatprep.subr.mxu0 0.0
        %3517 = vmatpush1.msra.mxu0 %v2818
        %3518 = vmatprep.subr.mxu0 0.0
        %3519 = vmatpush1.msra.mxu0 %v2819
        %3520 = vmatprep.subr.mxu0 0.0
        %3521 = vmatpush1.msra.mxu0 %v2820
        %3522 = vmatprep.subr.mxu0 0.0
        %3523 = vmatpush1.msra.mxu0 %v2821
        %3524 = vmatprep.subr.mxu0 0.0
        %3525 = vmatpush1.msra.mxu0 %v2822
        %3526 = vmatprep.subr.mxu0 0.0
        %3527 = vmatpush1.msra.mxu0 %v2823
        %3528 = vmatprep.subr.mxu0 0.0
        %3529 = vmatpush1.msra.mxu0 0.0
        %3530 = vmatprep.subr.mxu0 0.0
        %3531 = vmatpush1.msra.mxu0 0.0
        %3532 = vmatprep.subr.mxu0 0.0
        %3533 = vmatpush1.msra.mxu0 0.0
        %3534 = vmatprep.subr.mxu0 0.0
        %3535 = vmatpush1.msra.mxu0 0.0
        %3536 = vmatprep.subr.mxu0 0.0
        %3537 = vmatpush1.msra.mxu0 0.0
        %3538 = vmatprep.subr.mxu0 0.0
        %3539 = vmatpush1.msra.mxu0 0.0
        %3540 = vmatprep.subr.mxu0 0.0
        %3541 = vmatpush1.msra.mxu0 0.0
        %3542 = vmatprep.subr.mxu0 0.0
        %3543 = vmatpush1.msra.mxu0 0.0
        %3544 = vmatprep.subr.mxu0 0.0
        %3545 = vmatpush1.msra.mxu0 0.0
        %3546 = vmatprep.subr.mxu0 0.0
        %3547 = vmatpush1.msra.mxu0 0.0
        %3548 = vmatprep.subr.mxu0 0.0
        %3549 = vmatpush1.msra.mxu0 0.0
        %3550 = vmatprep.subr.mxu0 0.0
        %3551 = vmatpush1.msra.mxu0 0.0
        %3552 = vmatprep.subr.mxu0 0.0
        %3553 = vmatpush1.msra.mxu0 0.0
        %3554 = vmatprep.subr.mxu0 0.0
        %3555 = vmatpush1.msra.mxu0 0.0
        %3556 = vmatprep.subr.mxu0 0.0
        %3557 = vmatpush1.msra.mxu0 0.0
        %3558 = vmatprep.subr.mxu0 0.0
        %3559 = vmatpush1.msra.mxu0 0.0
        %3560 = vmatprep.subr.mxu0 0.0
        %3561 = vmatpush1.msra.mxu0 0.0
        %3562 = vmatprep.subr.mxu0 0.0
        %3563 = vmatpush1.msra.mxu0 0.0
        %3564 = vmatprep.subr.mxu0 0.0
        %3565 = vmatpush1.msra.mxu0 0.0
        %3566 = vmatprep.subr.mxu0 0.0
        %3567 = vmatpush1.msra.mxu0 0.0
        %3568 = vmatprep.subr.mxu0 0.0
        %3569 = vmatpush1.msra.mxu0 0.0
        %3570 = vmatprep.subr.mxu0 0.0
        %3571 = vmatpush1.msra.mxu0 0.0
        %3572 = vmatprep.subr.mxu0 0.0
        %3573 = vmatpush1.msra.mxu0 0.0
        %3574 = vmatprep.subr.mxu0 0.0
        %3575 = vmatpush1.msra.mxu0 0.0
        %3576 = vmatprep.mubr.f32.mxu0 0.0
        %3577 = vmatmul.mubr.f32.gmra.mrb[0].mxu0 %v1324
        %v3578 = vpop.f32.mrb[0].mxu0
        %v3579 = vadd.f32 0.0, %v3578
        %v3580 = vpop.f32.mrb[0].mxu0
        %3581 = vmatprep.mubr.f32.mxu0 0.0
        %3582 = vmatmul.mubr.f32.gmra.mrb[0].mxu0 %v1327
        %v3583 = vpop.f32.mrb[0].mxu0
        %v3584 = vadd.f32 0.0, %v3583
        %v3585 = vpop.f32.mrb[0].mxu0
        %3586 = vmatprep.mubr.f32.mxu0 0.0
        %3587 = vmatmul.mubr.f32.gmra.mrb[0].mxu0 %v1330
        %v3588 = vpop.f32.mrb[0].mxu0
        %v3589 = vadd.f32 0.0, %v3588
        %v3590 = vpop.f32.mrb[0].mxu0
        %3591 = vmatprep.mubr.f32.mxu0 0.0
        %3592 = vmatmul.mubr.f32.gmra.mrb[0].mxu0 %v1333
        %v3593 = vpop.f32.mrb[0].mxu0
        %v3594 = vadd.f32 0.0, %v3593
        %v3595 = vpop.f32.mrb[0].mxu0
        %3596 = vmatprep.mubr.f32.mxu0 0.0
        %3597 = vmatmul.mubr.f32.gmra.mrb[0].mxu0 %v1336
        %v3598 = vpop.f32.mrb[0].mxu0
        %v3599 = vadd.f32 0.0, %v3598
        %v3600 = vpop.f32.mrb[0].mxu0
        %3601 = vmatprep.mubr.f32.mxu0 0.0
        %3602 = vmatmul.mubr.f32.gmra.mrb[0].mxu0 %v1339
        %v3603 = vpop.f32.mrb[0].mxu0
        %v3604 = vadd.f32 0.0, %v3603
        %v3605 = vpop.f32.mrb[0].mxu0
        %3606 = vmatprep.mubr.f32.mxu0 0.0
        %3607 = vmatmul.mubr.f32.gmra.mrb[0].mxu0 %v1342
        %v3608 = vpop.f32.mrb[0].mxu0
        %v3609 = vadd.f32 0.0, %v3608
        %v3610 = vpop.f32.mrb[0].mxu0
        %3611 = vmatprep.mubr.f32.mxu0 0.0
        %3612 = vmatmul.mubr.f32.gmra.mrb[0].mxu0 %v1345
        %v3613 = vpop.f32.mrb[0].mxu0
        %v3614 = vadd.f32 0.0, %v3613
        %v3615 = vpop.f32.mrb[0].mxu0
        %3616 = vdwg.mxu0
        %s3617 = scalar_lea.vmem [#allocation10], 384
        %v3618 = vld [vmem:[%s3617] sm:$0xff]
        %v3619 = vld [vmem:[%s3617 + $0x8] sm:$0xff]
        %v3620 = vld [vmem:[%s3617 + $0x10] sm:$0xff]
        %v3621 = vld [vmem:[%s3617 + $0x18] sm:$0xff]
        %v3622 = vld [vmem:[%s3617 + $0x20] sm:$0xff]
        %v3623 = vld [vmem:[%s3617 + $0x28] sm:$0xff]
        %v3624 = vld [vmem:[%s3617 + $0x30] sm:$0xff]
        %v3625 = vld [vmem:[%s3617 + $0x38] sm:$0xff]
        %v3626 = vld [vmem:[%s3617 + $0x40] sm:$0xff]
        %v3627 = vld [vmem:[%s3617 + $0x48] sm:$0xff]
        %v3628 = vld [vmem:[%s3617 + $0x50] sm:$0xff]
        %v3629 = vld [vmem:[%s3617 + $0x58] sm:$0xff]
        %v3630 = vld [vmem:[%s3617 + $0x60] sm:$0xff]
        %v3631 = vld [vmem:[%s3617 + $0x68] sm:$0xff]
        %v3632 = vld [vmem:[%s3617 + $0x70] sm:$0xff]
        %v3633 = vld [vmem:[%s3617 + $0x78] sm:$0xff]
        %3634 = vmatprep.subr.mxu0 0.0
        %3635 = vmatpush1.msra.mxu0 %v3618
        %3636 = vmatprep.subr.mxu0 0.0
        %3637 = vmatpush1.msra.mxu0 %v3619
        %3638 = vmatprep.subr.mxu0 0.0
        %3639 = vmatpush1.msra.mxu0 %v3620
        %3640 = vmatprep.subr.mxu0 0.0
        %3641 = vmatpush1.msra.mxu0 %v3621
        %3642 = vmatprep.subr.mxu0 0.0
        %3643 = vmatpush1.msra.mxu0 %v3622
        %3644 = vmatprep.subr.mxu0 0.0
        %3645 = vmatpush1.msra.mxu0 %v3623
        %3646 = vmatprep.subr.mxu0 0.0
        %3647 = vmatpush1.msra.mxu0 %v3624
        %3648 = vmatprep.subr.mxu0 0.0
        %3649 = vmatpush1.msra.mxu0 %v3625
        %3650 = vmatprep.subr.mxu0 0.0
        %3651 = vmatpush1.msra.mxu0 %v3626
        %3652 = vmatprep.subr.mxu0 0.0
        %3653 = vmatpush1.msra.mxu0 %v3627
        %3654 = vmatprep.subr.mxu0 0.0
        %3655 = vmatpush1.msra.mxu0 %v3628
        %3656 = vmatprep.subr.mxu0 0.0
        %3657 = vmatpush1.msra.mxu0 %v3629
        %3658 = vmatprep.subr.mxu0 0.0
        %3659 = vmatpush1.msra.mxu0 %v3630
        %3660 = vmatprep.subr.mxu0 0.0
        %3661 = vmatpush1.msra.mxu0 %v3631
        %3662 = vmatprep.subr.mxu0 0.0
        %3663 = vmatpush1.msra.mxu0 %v3632
        %3664 = vmatprep.subr.mxu0 0.0
        %3665 = vmatpush1.msra.mxu0 %v3633
        %3666 = vmatprep.subr.mxu0 0.0
        %3667 = vmatpush1.msra.mxu0 0.0
        %3668 = vmatprep.subr.mxu0 0.0
        %3669 = vmatpush1.msra.mxu0 0.0
        %3670 = vmatprep.subr.mxu0 0.0
        %3671 = vmatpush1.msra.mxu0 0.0
        %3672 = vmatprep.subr.mxu0 0.0
        %3673 = vmatpush1.msra.mxu0 0.0
        %3674 = vmatprep.subr.mxu0 0.0
        %3675 = vmatpush1.msra.mxu0 0.0
        %3676 = vmatprep.subr.mxu0 0.0
        %3677 = vmatpush1.msra.mxu0 0.0
        %3678 = vmatprep.subr.mxu0 0.0
        %3679 = vmatpush1.msra.mxu0 0.0
        %3680 = vmatprep.subr.mxu0 0.0
        %3681 = vmatpush1.msra.mxu0 0.0
        %3682 = vmatprep.subr.mxu0 0.0
        %3683 = vmatpush1.msra.mxu0 0.0
        %3684 = vmatprep.subr.mxu0 0.0
        %3685 = vmatpush1.msra.mxu0 0.0
        %3686 = vmatprep.subr.mxu0 0.0
        %3687 = vmatpush1.msra.mxu0 0.0
        %3688 = vmatprep.subr.mxu0 0.0
        %3689 = vmatpush1.msra.mxu0 0.0
        %3690 = vmatprep.subr.mxu0 0.0
        %3691 = vmatpush1.msra.mxu0 0.0
        %3692 = vmatprep.subr.mxu0 0.0
        %3693 = vmatpush1.msra.mxu0 0.0
        %3694 = vmatprep.subr.mxu0 0.0
        %3695 = vmatpush1.msra.mxu0 0.0
        %3696 = vmatprep.subr.mxu0 0.0
        %3697 = vmatpush1.msra.mxu0 0.0
        %3698 = vmatprep.mubr.f32.mxu0 0.0
        %3699 = vmatmul.mubr.f32.gmra.mrb[0].mxu0 %v3579
        %v3700 = vpop.f32.mrb[0].mxu0
        %v3701 = vadd.f32 0.0, %v3700
        %v3702 = vpop.f32.mrb[0].mxu0
        %3703 = vmatprep.mubr.f32.mxu0 0.0
        %3704 = vmatmul.mubr.f32.gmra.mrb[0].mxu0 %v3584
        %v3705 = vpop.f32.mrb[0].mxu0
        %v3706 = vadd.f32 0.0, %v3705
        %v3707 = vpop.f32.mrb[0].mxu0
        %3708 = vmatprep.mubr.f32.mxu0 0.0
        %3709 = vmatmul.mubr.f32.gmra.mrb[0].mxu0 %v3589
        %v3710 = vpop.f32.mrb[0].mxu0
        %v3711 = vadd.f32 0.0, %v3710
        %v3712 = vpop.f32.mrb[0].mxu0
        %3713 = vmatprep.mubr.f32.mxu0 0.0
        %3714 = vmatmul.mubr.f32.gmra.mrb[0].mxu0 %v3594
        %v3715 = vpop.f32.mrb[0].mxu0
        %v3716 = vadd.f32 0.0, %v3715
        %v3717 = vpop.f32.mrb[0].mxu0
        %3718 = vmatprep.mubr.f32.mxu0 0.0
        %3719 = vmatmul.mubr.f32.gmra.mrb[0].mxu0 %v3599
        %v3720 = vpop.f32.mrb[0].mxu0
        %v3721 = vadd.f32 0.0, %v3720
        %v3722 = vpop.f32.mrb[0].mxu0
        %3723 = vmatprep.mubr.f32.mxu0 0.0
        %3724 = vmatmul.mubr.f32.gmra.mrb[0].mxu0 %v3604
        %v3725 = vpop.f32.mrb[0].mxu0
        %v3726 = vadd.f32 0.0, %v3725
        %v3727 = vpop.f32.mrb[0].mxu0
        %3728 = vmatprep.mubr.f32.mxu0 0.0
        %3729 = vmatmul.mubr.f32.gmra.mrb[0].mxu0 %v3609
        %v3730 = vpop.f32.mrb[0].mxu0
        %v3731 = vadd.f32 0.0, %v3730
        %v3732 = vpop.f32.mrb[0].mxu0
        %3733 = vmatprep.mubr.f32.mxu0 0.0
        %3734 = vmatmul.mubr.f32.gmra.mrb[0].mxu0 %v3614
        %v3735 = vpop.f32.mrb[0].mxu0
        %v3736 = vadd.f32 0.0, %v3735
        %v3737 = vpop.f32.mrb[0].mxu0
        %3738 = vdwg.mxu0
        %v3739 = vadd.f32 %v3504, %v3701
        %v3740 = vadd.f32 %v3505, %v3706
        %v3741 = vadd.f32 %v3506, %v3711
        %v3742 = vadd.f32 %v3507, %v3716
        %v3743 = vadd.f32 %v3508, %v3721
        %v3744 = vadd.f32 %v3509, %v3726
        %v3745 = vadd.f32 %v3510, %v3731
        %v3746 = vadd.f32 %v3511, %v3736
        %s3747 = scalar_lea.vmem [#allocation10], 512
        %v3748 = vld [vmem:[%s3747] sm:$0xff]
        %v3749 = vld [vmem:[%s3747 + $0x8] sm:$0xff]
        %v3750 = vld [vmem:[%s3747 + $0x10] sm:$0xff]
        %v3751 = vld [vmem:[%s3747 + $0x18] sm:$0xff]
        %v3752 = vld [vmem:[%s3747 + $0x20] sm:$0xff]
        %v3753 = vld [vmem:[%s3747 + $0x28] sm:$0xff]
        %v3754 = vld [vmem:[%s3747 + $0x30] sm:$0xff]
        %v3755 = vld [vmem:[%s3747 + $0x38] sm:$0xff]
        %v3756 = vld [vmem:[%s3747 + $0x40] sm:$0xff]
        %v3757 = vld [vmem:[%s3747 + $0x48] sm:$0xff]
        %v3758 = vld [vmem:[%s3747 + $0x50] sm:$0xff]
        %v3759 = vld [vmem:[%s3747 + $0x58] sm:$0xff]
        %v3760 = vld [vmem:[%s3747 + $0x60] sm:$0xff]
        %v3761 = vld [vmem:[%s3747 + $0x68] sm:$0xff]
        %v3762 = vld [vmem:[%s3747 + $0x70] sm:$0xff]
        %v3763 = vld [vmem:[%s3747 + $0x78] sm:$0xff]
        %3764 = vmatprep.subr.mxu0 0.0
        %3765 = vmatpush1.msra.mxu0 %v3748
        %3766 = vmatprep.subr.mxu0 0.0
        %3767 = vmatpush1.msra.mxu0 %v3749
        %3768 = vmatprep.subr.mxu0 0.0
        %3769 = vmatpush1.msra.mxu0 %v3750
        %3770 = vmatprep.subr.mxu0 0.0
        %3771 = vmatpush1.msra.mxu0 %v3751
        %3772 = vmatprep.subr.mxu0 0.0
        %3773 = vmatpush1.msra.mxu0 %v3752
        %3774 = vmatprep.subr.mxu0 0.0
        %3775 = vmatpush1.msra.mxu0 %v3753
        %3776 = vmatprep.subr.mxu0 0.0
        %3777 = vmatpush1.msra.mxu0 %v3754
        %3778 = vmatprep.subr.mxu0 0.0
        %3779 = vmatpush1.msra.mxu0 %v3755
        %3780 = vmatprep.subr.mxu0 0.0
        %3781 = vmatpush1.msra.mxu0 %v3756
        %3782 = vmatprep.subr.mxu0 0.0
        %3783 = vmatpush1.msra.mxu0 %v3757
        %3784 = vmatprep.subr.mxu0 0.0
        %3785 = vmatpush1.msra.mxu0 %v3758
        %3786 = vmatprep.subr.mxu0 0.0
        %3787 = vmatpush1.msra.mxu0 %v3759
        %3788 = vmatprep.subr.mxu0 0.0
        %3789 = vmatpush1.msra.mxu0 %v3760
        %3790 = vmatprep.subr.mxu0 0.0
        %3791 = vmatpush1.msra.mxu0 %v3761
        %3792 = vmatprep.subr.mxu0 0.0
        %3793 = vmatpush1.msra.mxu0 %v3762
        %3794 = vmatprep.subr.mxu0 0.0
        %3795 = vmatpush1.msra.mxu0 %v3763
        %3796 = vmatprep.subr.mxu0 0.0
        %3797 = vmatpush1.msra.mxu0 0.0
        %3798 = vmatprep.subr.mxu0 0.0
        %3799 = vmatpush1.msra.mxu0 0.0
        %3800 = vmatprep.subr.mxu0 0.0
        %3801 = vmatpush1.msra.mxu0 0.0
        %3802 = vmatprep.subr.mxu0 0.0
        %3803 = vmatpush1.msra.mxu0 0.0
        %3804 = vmatprep.subr.mxu0 0.0
        %3805 = vmatpush1.msra.mxu0 0.0
        %3806 = vmatprep.subr.mxu0 0.0
        %3807 = vmatpush1.msra.mxu0 0.0
        %3808 = vmatprep.subr.mxu0 0.0
        %3809 = vmatpush1.msra.mxu0 0.0
        %3810 = vmatprep.subr.mxu0 0.0
        %3811 = vmatpush1.msra.mxu0 0.0
        %3812 = vmatprep.subr.mxu0 0.0
        %3813 = vmatpush1.msra.mxu0 0.0
        %3814 = vmatprep.subr.mxu0 0.0
        %3815 = vmatpush1.msra.mxu0 0.0
        %3816 = vmatprep.subr.mxu0 0.0
        %3817 = vmatpush1.msra.mxu0 0.0
        %3818 = vmatprep.subr.mxu0 0.0
        %3819 = vmatpush1.msra.mxu0 0.0
        %3820 = vmatprep.subr.mxu0 0.0
        %3821 = vmatpush1.msra.mxu0 0.0
        %3822 = vmatprep.subr.mxu0 0.0
        %3823 = vmatpush1.msra.mxu0 0.0
        %3824 = vmatprep.subr.mxu0 0.0
        %3825 = vmatpush1.msra.mxu0 0.0
        %3826 = vmatprep.subr.mxu0 0.0
        %3827 = vmatpush1.msra.mxu0 0.0
        %3828 = vmatprep.mubr.f32.mxu0 0.0
        %3829 = vmatmul.mubr.f32.gmra.mrb[0].mxu0 %v2816
        %v3830 = vpop.f32.mrb[0].mxu0
        %v3831 = vadd.f32 0.0, %v3830
        %v3832 = vpop.f32.mrb[0].mxu0
        %3833 = vmatprep.mubr.f32.mxu0 0.0
        %3834 = vmatmul.mubr.f32.gmra.mrb[0].mxu0 %v2817
        %v3835 = vpop.f32.mrb[0].mxu0
        %v3836 = vadd.f32 0.0, %v3835
        %v3837 = vpop.f32.mrb[0].mxu0
        %3838 = vmatprep.mubr.f32.mxu0 0.0
        %3839 = vmatmul.mubr.f32.gmra.mrb[0].mxu0 %v2818
        %v3840 = vpop.f32.mrb[0].mxu0
        %v3841 = vadd.f32 0.0, %v3840
        %v3842 = vpop.f32.mrb[0].mxu0
        %3843 = vmatprep.mubr.f32.mxu0 0.0
        %3844 = vmatmul.mubr.f32.gmra.mrb[0].mxu0 %v2819
        %v3845 = vpop.f32.mrb[0].mxu0
        %v3846 = vadd.f32 0.0, %v3845
        %v3847 = vpop.f32.mrb[0].mxu0
        %3848 = vmatprep.mubr.f32.mxu0 0.0
        %3849 = vmatmul.mubr.f32.gmra.mrb[0].mxu0 %v2820
        %v3850 = vpop.f32.mrb[0].mxu0
        %v3851 = vadd.f32 0.0, %v3850
        %v3852 = vpop.f32.mrb[0].mxu0
        %3853 = vmatprep.mubr.f32.mxu0 0.0
        %3854 = vmatmul.mubr.f32.gmra.mrb[0].mxu0 %v2821
        %v3855 = vpop.f32.mrb[0].mxu0
        %v3856 = vadd.f32 0.0, %v3855
        %v3857 = vpop.f32.mrb[0].mxu0
        %3858 = vmatprep.mubr.f32.mxu0 0.0
        %3859 = vmatmul.mubr.f32.gmra.mrb[0].mxu0 %v2822
        %v3860 = vpop.f32.mrb[0].mxu0
        %v3861 = vadd.f32 0.0, %v3860
        %v3862 = vpop.f32.mrb[0].mxu0
        %3863 = vmatprep.mubr.f32.mxu0 0.0
        %3864 = vmatmul.mubr.f32.gmra.mrb[0].mxu0 %v2823
        %v3865 = vpop.f32.mrb[0].mxu0
        %v3866 = vadd.f32 0.0, %v3865
        %v3867 = vpop.f32.mrb[0].mxu0
        %3868 = vdwg.mxu0
        %v3869 = vadd.f32 %v3739, %v3831
        %v3870 = vadd.f32 %v3740, %v3836
        %v3871 = vadd.f32 %v3741, %v3841
        %v3872 = vadd.f32 %v3742, %v3846
        %v3873 = vadd.f32 %v3743, %v3851
        %v3874 = vadd.f32 %v3744, %v3856
        %v3875 = vadd.f32 %v3745, %v3861
        %v3876 = vadd.f32 %v3746, %v3866
        %3877 = vmatprep.subr.mxu0 0.0
        %3878 = vmatpush1.msra.mxu0 %v2816
        %3879 = vmatprep.subr.mxu0 0.0
        %3880 = vmatpush1.msra.mxu0 %v2817
        %3881 = vmatprep.subr.mxu0 0.0
        %3882 = vmatpush1.msra.mxu0 %v2818
        %3883 = vmatprep.subr.mxu0 0.0
        %3884 = vmatpush1.msra.mxu0 %v2819
        %3885 = vmatprep.subr.mxu0 0.0
        %3886 = vmatpush1.msra.mxu0 %v2820
        %3887 = vmatprep.subr.mxu0 0.0
        %3888 = vmatpush1.msra.mxu0 %v2821
        %3889 = vmatprep.subr.mxu0 0.0
        %3890 = vmatpush1.msra.mxu0 %v2822
        %3891 = vmatprep.subr.mxu0 0.0
        %3892 = vmatpush1.msra.mxu0 %v2823
        %3893 = vmatprep.subr.mxu0 0.0
        %3894 = vmatpush1.msra.mxu0 0.0
        %3895 = vmatprep.subr.mxu0 0.0
        %3896 = vmatpush1.msra.mxu0 0.0
        %3897 = vmatprep.subr.mxu0 0.0
        %3898 = vmatpush1.msra.mxu0 0.0
        %3899 = vmatprep.subr.mxu0 0.0
        %3900 = vmatpush1.msra.mxu0 0.0
        %3901 = vmatprep.subr.mxu0 0.0
        %3902 = vmatpush1.msra.mxu0 0.0
        %3903 = vmatprep.subr.mxu0 0.0
        %3904 = vmatpush1.msra.mxu0 0.0
        %3905 = vmatprep.subr.mxu0 0.0
        %3906 = vmatpush1.msra.mxu0 0.0
        %3907 = vmatprep.subr.mxu0 0.0
        %3908 = vmatpush1.msra.mxu0 0.0
        %3909 = vmatprep.subr.mxu0 0.0
        %3910 = vmatpush1.msra.mxu0 0.0
        %3911 = vmatprep.subr.mxu0 0.0
        %3912 = vmatpush1.msra.mxu0 0.0
        %3913 = vmatprep.subr.mxu0 0.0
        %3914 = vmatpush1.msra.mxu0 0.0
        %3915 = vmatprep.subr.mxu0 0.0
        %3916 = vmatpush1.msra.mxu0 0.0
        %3917 = vmatprep.subr.mxu0 0.0
        %3918 = vmatpush1.msra.mxu0 0.0
        %3919 = vmatprep.subr.mxu0 0.0
        %3920 = vmatpush1.msra.mxu0 0.0
        %3921 = vmatprep.subr.mxu0 0.0
        %3922 = vmatpush1.msra.mxu0 0.0
        %3923 = vmatprep.subr.mxu0 0.0
        %3924 = vmatpush1.msra.mxu0 0.0
        %3925 = vmatprep.subr.mxu0 0.0
        %3926 = vmatpush1.msra.mxu0 0.0
        %3927 = vmatprep.subr.mxu0 0.0
        %3928 = vmatpush1.msra.mxu0 0.0
        %3929 = vmatprep.subr.mxu0 0.0
        %3930 = vmatpush1.msra.mxu0 0.0
        %3931 = vmatprep.subr.mxu0 0.0
        %3932 = vmatpush1.msra.mxu0 0.0
        %3933 = vmatprep.subr.mxu0 0.0
        %3934 = vmatpush1.msra.mxu0 0.0
        %3935 = vmatprep.subr.mxu0 0.0
        %3936 = vmatpush1.msra.mxu0 0.0
        %3937 = vmatprep.subr.mxu0 0.0
        %3938 = vmatpush1.msra.mxu0 0.0
        %3939 = vmatprep.subr.mxu0 0.0
        %3940 = vmatpush1.msra.mxu0 0.0
        %3941 = vmatprep.mubr.f32.mxu0 0.0
        %3942 = vmatmul.mubr.f32.gmra.mrb[0].mxu0 %v1722
        %v3943 = vpop.f32.mrb[0].mxu0
        %v3944 = vadd.f32 0.0, %v3943
        %v3945 = vpop.f32.mrb[0].mxu0
        %3946 = vmatprep.mubr.f32.mxu0 0.0
        %3947 = vmatmul.mubr.f32.gmra.mrb[0].mxu0 %v1725
        %v3948 = vpop.f32.mrb[0].mxu0
        %v3949 = vadd.f32 0.0, %v3948
        %v3950 = vpop.f32.mrb[0].mxu0
        %3951 = vmatprep.mubr.f32.mxu0 0.0
        %3952 = vmatmul.mubr.f32.gmra.mrb[0].mxu0 %v1728
        %v3953 = vpop.f32.mrb[0].mxu0
        %v3954 = vadd.f32 0.0, %v3953
        %v3955 = vpop.f32.mrb[0].mxu0
        %3956 = vmatprep.mubr.f32.mxu0 0.0
        %3957 = vmatmul.mubr.f32.gmra.mrb[0].mxu0 %v1731
        %v3958 = vpop.f32.mrb[0].mxu0
        %v3959 = vadd.f32 0.0, %v3958
        %v3960 = vpop.f32.mrb[0].mxu0
        %3961 = vmatprep.mubr.f32.mxu0 0.0
        %3962 = vmatmul.mubr.f32.gmra.mrb[0].mxu0 %v1734
        %v3963 = vpop.f32.mrb[0].mxu0
        %v3964 = vadd.f32 0.0, %v3963
        %v3965 = vpop.f32.mrb[0].mxu0
        %3966 = vmatprep.mubr.f32.mxu0 0.0
        %3967 = vmatmul.mubr.f32.gmra.mrb[0].mxu0 %v1737
        %v3968 = vpop.f32.mrb[0].mxu0
        %v3969 = vadd.f32 0.0, %v3968
        %v3970 = vpop.f32.mrb[0].mxu0
        %3971 = vmatprep.mubr.f32.mxu0 0.0
        %3972 = vmatmul.mubr.f32.gmra.mrb[0].mxu0 %v1740
        %v3973 = vpop.f32.mrb[0].mxu0
        %v3974 = vadd.f32 0.0, %v3973
        %v3975 = vpop.f32.mrb[0].mxu0
        %3976 = vmatprep.mubr.f32.mxu0 0.0
        %3977 = vmatmul.mubr.f32.gmra.mrb[0].mxu0 %v1743
        %v3978 = vpop.f32.mrb[0].mxu0
        %v3979 = vadd.f32 0.0, %v3978
        %v3980 = vpop.f32.mrb[0].mxu0
        %3981 = vdwg.mxu0
        %s3982 = scalar_lea.vmem [#allocation10], 640
        %v3983 = vld [vmem:[%s3982] sm:$0xff]
        %v3984 = vld [vmem:[%s3982 + $0x8] sm:$0xff]
        %v3985 = vld [vmem:[%s3982 + $0x10] sm:$0xff]
        %v3986 = vld [vmem:[%s3982 + $0x18] sm:$0xff]
        %v3987 = vld [vmem:[%s3982 + $0x20] sm:$0xff]
        %v3988 = vld [vmem:[%s3982 + $0x28] sm:$0xff]
        %v3989 = vld [vmem:[%s3982 + $0x30] sm:$0xff]
        %v3990 = vld [vmem:[%s3982 + $0x38] sm:$0xff]
        %v3991 = vld [vmem:[%s3982 + $0x40] sm:$0xff]
        %v3992 = vld [vmem:[%s3982 + $0x48] sm:$0xff]
        %v3993 = vld [vmem:[%s3982 + $0x50] sm:$0xff]
        %v3994 = vld [vmem:[%s3982 + $0x58] sm:$0xff]
        %v3995 = vld [vmem:[%s3982 + $0x60] sm:$0xff]
        %v3996 = vld [vmem:[%s3982 + $0x68] sm:$0xff]
        %v3997 = vld [vmem:[%s3982 + $0x70] sm:$0xff]
        %v3998 = vld [vmem:[%s3982 + $0x78] sm:$0xff]
        %3999 = vmatprep.subr.mxu0 0.0
        %4000 = vmatpush1.msra.mxu0 %v3983
        %4001 = vmatprep.subr.mxu0 0.0
        %4002 = vmatpush1.msra.mxu0 %v3984
        %4003 = vmatprep.subr.mxu0 0.0
        %4004 = vmatpush1.msra.mxu0 %v3985
        %4005 = vmatprep.subr.mxu0 0.0
        %4006 = vmatpush1.msra.mxu0 %v3986
        %4007 = vmatprep.subr.mxu0 0.0
        %4008 = vmatpush1.msra.mxu0 %v3987
        %4009 = vmatprep.subr.mxu0 0.0
        %4010 = vmatpush1.msra.mxu0 %v3988
        %4011 = vmatprep.subr.mxu0 0.0
        %4012 = vmatpush1.msra.mxu0 %v3989
        %4013 = vmatprep.subr.mxu0 0.0
        %4014 = vmatpush1.msra.mxu0 %v3990
        %4015 = vmatprep.subr.mxu0 0.0
        %4016 = vmatpush1.msra.mxu0 %v3991
        %4017 = vmatprep.subr.mxu0 0.0
        %4018 = vmatpush1.msra.mxu0 %v3992
        %4019 = vmatprep.subr.mxu0 0.0
        %4020 = vmatpush1.msra.mxu0 %v3993
        %4021 = vmatprep.subr.mxu0 0.0
        %4022 = vmatpush1.msra.mxu0 %v3994
        %4023 = vmatprep.subr.mxu0 0.0
        %4024 = vmatpush1.msra.mxu0 %v3995
        %4025 = vmatprep.subr.mxu0 0.0
        %4026 = vmatpush1.msra.mxu0 %v3996
        %4027 = vmatprep.subr.mxu0 0.0
        %4028 = vmatpush1.msra.mxu0 %v3997
        %4029 = vmatprep.subr.mxu0 0.0
        %4030 = vmatpush1.msra.mxu0 %v3998
        %4031 = vmatprep.subr.mxu0 0.0
        %4032 = vmatpush1.msra.mxu0 0.0
        %4033 = vmatprep.subr.mxu0 0.0
        %4034 = vmatpush1.msra.mxu0 0.0
        %4035 = vmatprep.subr.mxu0 0.0
        %4036 = vmatpush1.msra.mxu0 0.0
        %4037 = vmatprep.subr.mxu0 0.0
        %4038 = vmatpush1.msra.mxu0 0.0
        %4039 = vmatprep.subr.mxu0 0.0
        %4040 = vmatpush1.msra.mxu0 0.0
        %4041 = vmatprep.subr.mxu0 0.0
        %4042 = vmatpush1.msra.mxu0 0.0
        %4043 = vmatprep.subr.mxu0 0.0
        %4044 = vmatpush1.msra.mxu0 0.0
        %4045 = vmatprep.subr.mxu0 0.0
        %4046 = vmatpush1.msra.mxu0 0.0
        %4047 = vmatprep.subr.mxu0 0.0
        %4048 = vmatpush1.msra.mxu0 0.0
        %4049 = vmatprep.subr.mxu0 0.0
        %4050 = vmatpush1.msra.mxu0 0.0
        %4051 = vmatprep.subr.mxu0 0.0
        %4052 = vmatpush1.msra.mxu0 0.0
        %4053 = vmatprep.subr.mxu0 0.0
        %4054 = vmatpush1.msra.mxu0 0.0
        %4055 = vmatprep.subr.mxu0 0.0
        %4056 = vmatpush1.msra.mxu0 0.0
        %4057 = vmatprep.subr.mxu0 0.0
        %4058 = vmatpush1.msra.mxu0 0.0
        %4059 = vmatprep.subr.mxu0 0.0
        %4060 = vmatpush1.msra.mxu0 0.0
        %4061 = vmatprep.subr.mxu0 0.0
        %4062 = vmatpush1.msra.mxu0 0.0
        %4063 = vmatprep.mubr.f32.mxu0 0.0
        %4064 = vmatmul.mubr.f32.gmra.mrb[0].mxu0 %v3944
        %v4065 = vpop.f32.mrb[0].mxu0
        %v4066 = vadd.f32 0.0, %v4065
        %v4067 = vpop.f32.mrb[0].mxu0
        %4068 = vmatprep.mubr.f32.mxu0 0.0
        %4069 = vmatmul.mubr.f32.gmra.mrb[0].mxu0 %v3949
        %v4070 = vpop.f32.mrb[0].mxu0
        %v4071 = vadd.f32 0.0, %v4070
        %v4072 = vpop.f32.mrb[0].mxu0
        %4073 = vmatprep.mubr.f32.mxu0 0.0
        %4074 = vmatmul.mubr.f32.gmra.mrb[0].mxu0 %v3954
        %v4075 = vpop.f32.mrb[0].mxu0
        %v4076 = vadd.f32 0.0, %v4075
        %v4077 = vpop.f32.mrb[0].mxu0
        %4078 = vmatprep.mubr.f32.mxu0 0.0
        %4079 = vmatmul.mubr.f32.gmra.mrb[0].mxu0 %v3959
        %v4080 = vpop.f32.mrb[0].mxu0
        %v4081 = vadd.f32 0.0, %v4080
        %v4082 = vpop.f32.mrb[0].mxu0
        %4083 = vmatprep.mubr.f32.mxu0 0.0
        %4084 = vmatmul.mubr.f32.gmra.mrb[0].mxu0 %v3964
        %v4085 = vpop.f32.mrb[0].mxu0
        %v4086 = vadd.f32 0.0, %v4085
        %v4087 = vpop.f32.mrb[0].mxu0
        %4088 = vmatprep.mubr.f32.mxu0 0.0
        %4089 = vmatmul.mubr.f32.gmra.mrb[0].mxu0 %v3969
        %v4090 = vpop.f32.mrb[0].mxu0
        %v4091 = vadd.f32 0.0, %v4090
        %v4092 = vpop.f32.mrb[0].mxu0
        %4093 = vmatprep.mubr.f32.mxu0 0.0
        %4094 = vmatmul.mubr.f32.gmra.mrb[0].mxu0 %v3974
        %v4095 = vpop.f32.mrb[0].mxu0
        %v4096 = vadd.f32 0.0, %v4095
        %v4097 = vpop.f32.mrb[0].mxu0
        %4098 = vmatprep.mubr.f32.mxu0 0.0
        %4099 = vmatmul.mubr.f32.gmra.mrb[0].mxu0 %v3979
        %v4100 = vpop.f32.mrb[0].mxu0
        %v4101 = vadd.f32 0.0, %v4100
        %v4102 = vpop.f32.mrb[0].mxu0
        %4103 = vdwg.mxu0
        %v4104 = vadd.f32 %v3869, %v4066
        %v4105 = vadd.f32 %v3870, %v4071
        %v4106 = vadd.f32 %v3871, %v4076
        %v4107 = vadd.f32 %v3872, %v4081
        %v4108 = vadd.f32 %v3873, %v4086
        %v4109 = vadd.f32 %v3874, %v4091
        %v4110 = vadd.f32 %v3875, %v4096
        %v4111 = vadd.f32 %v3876, %v4101
        %4112 = vmatprep.subr.mxu0 0.0
        %4113 = vmatpush1.msra.mxu0 %v2816
        %4114 = vmatprep.subr.mxu0 0.0
        %4115 = vmatpush1.msra.mxu0 %v2817
        %4116 = vmatprep.subr.mxu0 0.0
        %4117 = vmatpush1.msra.mxu0 %v2818
        %4118 = vmatprep.subr.mxu0 0.0
        %4119 = vmatpush1.msra.mxu0 %v2819
        %4120 = vmatprep.subr.mxu0 0.0
        %4121 = vmatpush1.msra.mxu0 %v2820
        %4122 = vmatprep.subr.mxu0 0.0
        %4123 = vmatpush1.msra.mxu0 %v2821
        %4124 = vmatprep.subr.mxu0 0.0
        %4125 = vmatpush1.msra.mxu0 %v2822
        %4126 = vmatprep.subr.mxu0 0.0
        %4127 = vmatpush1.msra.mxu0 %v2823
        %4128 = vmatprep.subr.mxu0 0.0
        %4129 = vmatpush1.msra.mxu0 0.0
        %4130 = vmatprep.subr.mxu0 0.0
        %4131 = vmatpush1.msra.mxu0 0.0
        %4132 = vmatprep.subr.mxu0 0.0
        %4133 = vmatpush1.msra.mxu0 0.0
        %4134 = vmatprep.subr.mxu0 0.0
        %4135 = vmatpush1.msra.mxu0 0.0
        %4136 = vmatprep.subr.mxu0 0.0
        %4137 = vmatpush1.msra.mxu0 0.0
        %4138 = vmatprep.subr.mxu0 0.0
        %4139 = vmatpush1.msra.mxu0 0.0
        %4140 = vmatprep.subr.mxu0 0.0
        %4141 = vmatpush1.msra.mxu0 0.0
        %4142 = vmatprep.subr.mxu0 0.0
        %4143 = vmatpush1.msra.mxu0 0.0
        %4144 = vmatprep.subr.mxu0 0.0
        %4145 = vmatpush1.msra.mxu0 0.0
        %4146 = vmatprep.subr.mxu0 0.0
        %4147 = vmatpush1.msra.mxu0 0.0
        %4148 = vmatprep.subr.mxu0 0.0
        %4149 = vmatpush1.msra.mxu0 0.0
        %4150 = vmatprep.subr.mxu0 0.0
        %4151 = vmatpush1.msra.mxu0 0.0
        %4152 = vmatprep.subr.mxu0 0.0
        %4153 = vmatpush1.msra.mxu0 0.0
        %4154 = vmatprep.subr.mxu0 0.0
        %4155 = vmatpush1.msra.mxu0 0.0
        %4156 = vmatprep.subr.mxu0 0.0
        %4157 = vmatpush1.msra.mxu0 0.0
        %4158 = vmatprep.subr.mxu0 0.0
        %4159 = vmatpush1.msra.mxu0 0.0
        %4160 = vmatprep.subr.mxu0 0.0
        %4161 = vmatpush1.msra.mxu0 0.0
        %4162 = vmatprep.subr.mxu0 0.0
        %4163 = vmatpush1.msra.mxu0 0.0
        %4164 = vmatprep.subr.mxu0 0.0
        %4165 = vmatpush1.msra.mxu0 0.0
        %4166 = vmatprep.subr.mxu0 0.0
        %4167 = vmatpush1.msra.mxu0 0.0
        %4168 = vmatprep.subr.mxu0 0.0
        %4169 = vmatpush1.msra.mxu0 0.0
        %4170 = vmatprep.subr.mxu0 0.0
        %4171 = vmatpush1.msra.mxu0 0.0
        %4172 = vmatprep.subr.mxu0 0.0
        %4173 = vmatpush1.msra.mxu0 0.0
        %4174 = vmatprep.subr.mxu0 0.0
        %4175 = vmatpush1.msra.mxu0 0.0
        %4176 = vmatprep.mubr.f32.mxu0 0.0
        %4177 = vmatmul.mubr.f32.gmra.mrb[0].mxu0 %v1990
        %v4178 = vpop.f32.mrb[0].mxu0
        %v4179 = vadd.f32 0.0, %v4178
        %v4180 = vpop.f32.mrb[0].mxu0
        %4181 = vmatprep.mubr.f32.mxu0 0.0
        %4182 = vmatmul.mubr.f32.gmra.mrb[0].mxu0 %v1993
        %v4183 = vpop.f32.mrb[0].mxu0
        %v4184 = vadd.f32 0.0, %v4183
        %v4185 = vpop.f32.mrb[0].mxu0
        %4186 = vmatprep.mubr.f32.mxu0 0.0
        %4187 = vmatmul.mubr.f32.gmra.mrb[0].mxu0 %v1996
        %v4188 = vpop.f32.mrb[0].mxu0
        %v4189 = vadd.f32 0.0, %v4188
        %v4190 = vpop.f32.mrb[0].mxu0
        %4191 = vmatprep.mubr.f32.mxu0 0.0
        %4192 = vmatmul.mubr.f32.gmra.mrb[0].mxu0 %v1999
        %v4193 = vpop.f32.mrb[0].mxu0
        %v4194 = vadd.f32 0.0, %v4193
        %v4195 = vpop.f32.mrb[0].mxu0
        %4196 = vmatprep.mubr.f32.mxu0 0.0
        %4197 = vmatmul.mubr.f32.gmra.mrb[0].mxu0 %v2002
        %v4198 = vpop.f32.mrb[0].mxu0
        %v4199 = vadd.f32 0.0, %v4198
        %v4200 = vpop.f32.mrb[0].mxu0
        %4201 = vmatprep.mubr.f32.mxu0 0.0
        %4202 = vmatmul.mubr.f32.gmra.mrb[0].mxu0 %v2005
        %v4203 = vpop.f32.mrb[0].mxu0
        %v4204 = vadd.f32 0.0, %v4203
        %v4205 = vpop.f32.mrb[0].mxu0
        %4206 = vmatprep.mubr.f32.mxu0 0.0
        %4207 = vmatmul.mubr.f32.gmra.mrb[0].mxu0 %v2008
        %v4208 = vpop.f32.mrb[0].mxu0
        %v4209 = vadd.f32 0.0, %v4208
        %v4210 = vpop.f32.mrb[0].mxu0
        %4211 = vmatprep.mubr.f32.mxu0 0.0
        %4212 = vmatmul.mubr.f32.gmra.mrb[0].mxu0 %v2011
        %v4213 = vpop.f32.mrb[0].mxu0
        %v4214 = vadd.f32 0.0, %v4213
        %v4215 = vpop.f32.mrb[0].mxu0
        %4216 = vdwg.mxu0
        %s4217 = scalar_lea.vmem [#allocation10], 768
        %v4218 = vld [vmem:[%s4217] sm:$0xff]
        %v4219 = vld [vmem:[%s4217 + $0x8] sm:$0xff]
        %v4220 = vld [vmem:[%s4217 + $0x10] sm:$0xff]
        %v4221 = vld [vmem:[%s4217 + $0x18] sm:$0xff]
        %v4222 = vld [vmem:[%s4217 + $0x20] sm:$0xff]
        %v4223 = vld [vmem:[%s4217 + $0x28] sm:$0xff]
        %v4224 = vld [vmem:[%s4217 + $0x30] sm:$0xff]
        %v4225 = vld [vmem:[%s4217 + $0x38] sm:$0xff]
        %v4226 = vld [vmem:[%s4217 + $0x40] sm:$0xff]
        %v4227 = vld [vmem:[%s4217 + $0x48] sm:$0xff]
        %v4228 = vld [vmem:[%s4217 + $0x50] sm:$0xff]
        %v4229 = vld [vmem:[%s4217 + $0x58] sm:$0xff]
        %v4230 = vld [vmem:[%s4217 + $0x60] sm:$0xff]
        %v4231 = vld [vmem:[%s4217 + $0x68] sm:$0xff]
        %v4232 = vld [vmem:[%s4217 + $0x70] sm:$0xff]
        %v4233 = vld [vmem:[%s4217 + $0x78] sm:$0xff]
        %4234 = vmatprep.subr.mxu0 0.0
        %4235 = vmatpush1.msra.mxu0 %v4218
        %4236 = vmatprep.subr.mxu0 0.0
        %4237 = vmatpush1.msra.mxu0 %v4219
        %4238 = vmatprep.subr.mxu0 0.0
        %4239 = vmatpush1.msra.mxu0 %v4220
        %4240 = vmatprep.subr.mxu0 0.0
        %4241 = vmatpush1.msra.mxu0 %v4221
        %4242 = vmatprep.subr.mxu0 0.0
        %4243 = vmatpush1.msra.mxu0 %v4222
        %4244 = vmatprep.subr.mxu0 0.0
        %4245 = vmatpush1.msra.mxu0 %v4223
        %4246 = vmatprep.subr.mxu0 0.0
        %4247 = vmatpush1.msra.mxu0 %v4224
        %4248 = vmatprep.subr.mxu0 0.0
        %4249 = vmatpush1.msra.mxu0 %v4225
        %4250 = vmatprep.subr.mxu0 0.0
        %4251 = vmatpush1.msra.mxu0 %v4226
        %4252 = vmatprep.subr.mxu0 0.0
        %4253 = vmatpush1.msra.mxu0 %v4227
        %4254 = vmatprep.subr.mxu0 0.0
        %4255 = vmatpush1.msra.mxu0 %v4228
        %4256 = vmatprep.subr.mxu0 0.0
        %4257 = vmatpush1.msra.mxu0 %v4229
        %4258 = vmatprep.subr.mxu0 0.0
        %4259 = vmatpush1.msra.mxu0 %v4230
        %4260 = vmatprep.subr.mxu0 0.0
        %4261 = vmatpush1.msra.mxu0 %v4231
        %4262 = vmatprep.subr.mxu0 0.0
        %4263 = vmatpush1.msra.mxu0 %v4232
        %4264 = vmatprep.subr.mxu0 0.0
        %4265 = vmatpush1.msra.mxu0 %v4233
        %4266 = vmatprep.subr.mxu0 0.0
        %4267 = vmatpush1.msra.mxu0 0.0
        %4268 = vmatprep.subr.mxu0 0.0
        %4269 = vmatpush1.msra.mxu0 0.0
        %4270 = vmatprep.subr.mxu0 0.0
        %4271 = vmatpush1.msra.mxu0 0.0
        %4272 = vmatprep.subr.mxu0 0.0
        %4273 = vmatpush1.msra.mxu0 0.0
        %4274 = vmatprep.subr.mxu0 0.0
        %4275 = vmatpush1.msra.mxu0 0.0
        %4276 = vmatprep.subr.mxu0 0.0
        %4277 = vmatpush1.msra.mxu0 0.0
        %4278 = vmatprep.subr.mxu0 0.0
        %4279 = vmatpush1.msra.mxu0 0.0
        %4280 = vmatprep.subr.mxu0 0.0
        %4281 = vmatpush1.msra.mxu0 0.0
        %4282 = vmatprep.subr.mxu0 0.0
        %4283 = vmatpush1.msra.mxu0 0.0
        %4284 = vmatprep.subr.mxu0 0.0
        %4285 = vmatpush1.msra.mxu0 0.0
        %4286 = vmatprep.subr.mxu0 0.0
        %4287 = vmatpush1.msra.mxu0 0.0
        %4288 = vmatprep.subr.mxu0 0.0
        %4289 = vmatpush1.msra.mxu0 0.0
        %4290 = vmatprep.subr.mxu0 0.0
        %4291 = vmatpush1.msra.mxu0 0.0
        %4292 = vmatprep.subr.mxu0 0.0
        %4293 = vmatpush1.msra.mxu0 0.0
        %4294 = vmatprep.subr.mxu0 0.0
        %4295 = vmatpush1.msra.mxu0 0.0
        %4296 = vmatprep.subr.mxu0 0.0
        %4297 = vmatpush1.msra.mxu0 0.0
        %4298 = vmatprep.mubr.f32.mxu0 0.0
        %4299 = vmatmul.mubr.f32.gmra.mrb[0].mxu0 %v4179
        %v4300 = vpop.f32.mrb[0].mxu0
        %v4301 = vadd.f32 0.0, %v4300
        %v4302 = vpop.f32.mrb[0].mxu0
        %4303 = vmatprep.mubr.f32.mxu0 0.0
        %4304 = vmatmul.mubr.f32.gmra.mrb[0].mxu0 %v4184
        %v4305 = vpop.f32.mrb[0].mxu0
        %v4306 = vadd.f32 0.0, %v4305
        %v4307 = vpop.f32.mrb[0].mxu0
        %4308 = vmatprep.mubr.f32.mxu0 0.0
        %4309 = vmatmul.mubr.f32.gmra.mrb[0].mxu0 %v4189
        %v4310 = vpop.f32.mrb[0].mxu0
        %v4311 = vadd.f32 0.0, %v4310
        %v4312 = vpop.f32.mrb[0].mxu0
        %4313 = vmatprep.mubr.f32.mxu0 0.0
        %4314 = vmatmul.mubr.f32.gmra.mrb[0].mxu0 %v4194
        %v4315 = vpop.f32.mrb[0].mxu0
        %v4316 = vadd.f32 0.0, %v4315
        %v4317 = vpop.f32.mrb[0].mxu0
        %4318 = vmatprep.mubr.f32.mxu0 0.0
        %4319 = vmatmul.mubr.f32.gmra.mrb[0].mxu0 %v4199
        %v4320 = vpop.f32.mrb[0].mxu0
        %v4321 = vadd.f32 0.0, %v4320
        %v4322 = vpop.f32.mrb[0].mxu0
        %4323 = vmatprep.mubr.f32.mxu0 0.0
        %4324 = vmatmul.mubr.f32.gmra.mrb[0].mxu0 %v4204
        %v4325 = vpop.f32.mrb[0].mxu0
        %v4326 = vadd.f32 0.0, %v4325
        %v4327 = vpop.f32.mrb[0].mxu0
        %4328 = vmatprep.mubr.f32.mxu0 0.0
        %4329 = vmatmul.mubr.f32.gmra.mrb[0].mxu0 %v4209
        %v4330 = vpop.f32.mrb[0].mxu0
        %v4331 = vadd.f32 0.0, %v4330
        %v4332 = vpop.f32.mrb[0].mxu0
        %4333 = vmatprep.mubr.f32.mxu0 0.0
        %4334 = vmatmul.mubr.f32.gmra.mrb[0].mxu0 %v4214
        %v4335 = vpop.f32.mrb[0].mxu0
        %v4336 = vadd.f32 0.0, %v4335
        %v4337 = vpop.f32.mrb[0].mxu0
        %4338 = vdwg.mxu0
        %v4339 = vadd.f32 %v4104, %v4301
        %v4340 = vadd.f32 %v4105, %v4306
        %v4341 = vadd.f32 %v4106, %v4311
        %v4342 = vadd.f32 %v4107, %v4316
        %v4343 = vadd.f32 %v4108, %v4321
        %v4344 = vadd.f32 %v4109, %v4326
        %v4345 = vadd.f32 %v4110, %v4331
        %v4346 = vadd.f32 %v4111, %v4336
        %4347 = vmatprep.subr.mxu0 0.0
        %4348 = vmatpush1.msra.mxu0 %v2816
        %4349 = vmatprep.subr.mxu0 0.0
        %4350 = vmatpush1.msra.mxu0 %v2817
        %4351 = vmatprep.subr.mxu0 0.0
        %4352 = vmatpush1.msra.mxu0 %v2818
        %4353 = vmatprep.subr.mxu0 0.0
        %4354 = vmatpush1.msra.mxu0 %v2819
        %4355 = vmatprep.subr.mxu0 0.0
        %4356 = vmatpush1.msra.mxu0 %v2820
        %4357 = vmatprep.subr.mxu0 0.0
        %4358 = vmatpush1.msra.mxu0 %v2821
        %4359 = vmatprep.subr.mxu0 0.0
        %4360 = vmatpush1.msra.mxu0 %v2822
        %4361 = vmatprep.subr.mxu0 0.0
        %4362 = vmatpush1.msra.mxu0 %v2823
        %4363 = vmatprep.subr.mxu0 0.0
        %4364 = vmatpush1.msra.mxu0 0.0
        %4365 = vmatprep.subr.mxu0 0.0
        %4366 = vmatpush1.msra.mxu0 0.0
        %4367 = vmatprep.subr.mxu0 0.0
        %4368 = vmatpush1.msra.mxu0 0.0
        %4369 = vmatprep.subr.mxu0 0.0
        %4370 = vmatpush1.msra.mxu0 0.0
        %4371 = vmatprep.subr.mxu0 0.0
        %4372 = vmatpush1.msra.mxu0 0.0
        %4373 = vmatprep.subr.mxu0 0.0
        %4374 = vmatpush1.msra.mxu0 0.0
        %4375 = vmatprep.subr.mxu0 0.0
        %4376 = vmatpush1.msra.mxu0 0.0
        %4377 = vmatprep.subr.mxu0 0.0
        %4378 = vmatpush1.msra.mxu0 0.0
        %4379 = vmatprep.subr.mxu0 0.0
        %4380 = vmatpush1.msra.mxu0 0.0
        %4381 = vmatprep.subr.mxu0 0.0
        %4382 = vmatpush1.msra.mxu0 0.0
        %4383 = vmatprep.subr.mxu0 0.0
        %4384 = vmatpush1.msra.mxu0 0.0
        %4385 = vmatprep.subr.mxu0 0.0
        %4386 = vmatpush1.msra.mxu0 0.0
        %4387 = vmatprep.subr.mxu0 0.0
        %4388 = vmatpush1.msra.mxu0 0.0
        %4389 = vmatprep.subr.mxu0 0.0
        %4390 = vmatpush1.msra.mxu0 0.0
        %4391 = vmatprep.subr.mxu0 0.0
        %4392 = vmatpush1.msra.mxu0 0.0
        %4393 = vmatprep.subr.mxu0 0.0
        %4394 = vmatpush1.msra.mxu0 0.0
        %4395 = vmatprep.subr.mxu0 0.0
        %4396 = vmatpush1.msra.mxu0 0.0
        %4397 = vmatprep.subr.mxu0 0.0
        %4398 = vmatpush1.msra.mxu0 0.0
        %4399 = vmatprep.subr.mxu0 0.0
        %4400 = vmatpush1.msra.mxu0 0.0
        %4401 = vmatprep.subr.mxu0 0.0
        %4402 = vmatpush1.msra.mxu0 0.0
        %4403 = vmatprep.subr.mxu0 0.0
        %4404 = vmatpush1.msra.mxu0 0.0
        %4405 = vmatprep.subr.mxu0 0.0
        %4406 = vmatpush1.msra.mxu0 0.0
        %4407 = vmatprep.subr.mxu0 0.0
        %4408 = vmatpush1.msra.mxu0 0.0
        %4409 = vmatprep.subr.mxu0 0.0
        %4410 = vmatpush1.msra.mxu0 0.0
        %4411 = vmatprep.mubr.f32.mxu0 0.0
        %4412 = vmatmul.mubr.f32.gmra.mrb[0].mxu0 %v2258
        %v4413 = vpop.f32.mrb[0].mxu0
        %v4414 = vadd.f32 0.0, %v4413
        %v4415 = vpop.f32.mrb[0].mxu0
        %4416 = vmatprep.mubr.f32.mxu0 0.0
        %4417 = vmatmul.mubr.f32.gmra.mrb[0].mxu0 %v2261
        %v4418 = vpop.f32.mrb[0].mxu0
        %v4419 = vadd.f32 0.0, %v4418
        %v4420 = vpop.f32.mrb[0].mxu0
        %4421 = vmatprep.mubr.f32.mxu0 0.0
        %4422 = vmatmul.mubr.f32.gmra.mrb[0].mxu0 %v2264
        %v4423 = vpop.f32.mrb[0].mxu0
        %v4424 = vadd.f32 0.0, %v4423
        %v4425 = vpop.f32.mrb[0].mxu0
        %4426 = vmatprep.mubr.f32.mxu0 0.0
        %4427 = vmatmul.mubr.f32.gmra.mrb[0].mxu0 %v2267
        %v4428 = vpop.f32.mrb[0].mxu0
        %v4429 = vadd.f32 0.0, %v4428
        %v4430 = vpop.f32.mrb[0].mxu0
        %4431 = vmatprep.mubr.f32.mxu0 0.0
        %4432 = vmatmul.mubr.f32.gmra.mrb[0].mxu0 %v2270
        %v4433 = vpop.f32.mrb[0].mxu0
        %v4434 = vadd.f32 0.0, %v4433
        %v4435 = vpop.f32.mrb[0].mxu0
        %4436 = vmatprep.mubr.f32.mxu0 0.0
        %4437 = vmatmul.mubr.f32.gmra.mrb[0].mxu0 %v2273
        %v4438 = vpop.f32.mrb[0].mxu0
        %v4439 = vadd.f32 0.0, %v4438
        %v4440 = vpop.f32.mrb[0].mxu0
        %4441 = vmatprep.mubr.f32.mxu0 0.0
        %4442 = vmatmul.mubr.f32.gmra.mrb[0].mxu0 %v2276
        %v4443 = vpop.f32.mrb[0].mxu0
        %v4444 = vadd.f32 0.0, %v4443
        %v4445 = vpop.f32.mrb[0].mxu0
        %4446 = vmatprep.mubr.f32.mxu0 0.0
        %4447 = vmatmul.mubr.f32.gmra.mrb[0].mxu0 %v2279
        %v4448 = vpop.f32.mrb[0].mxu0
        %v4449 = vadd.f32 0.0, %v4448
        %v4450 = vpop.f32.mrb[0].mxu0
        %4451 = vdwg.mxu0
        %s4452 = scalar_lea.vmem [#allocation10], 896
        %v4453 = vld [vmem:[%s4452] sm:$0xff]
        %v4454 = vld [vmem:[%s4452 + $0x8] sm:$0xff]
        %v4455 = vld [vmem:[%s4452 + $0x10] sm:$0xff]
        %v4456 = vld [vmem:[%s4452 + $0x18] sm:$0xff]
        %v4457 = vld [vmem:[%s4452 + $0x20] sm:$0xff]
        %v4458 = vld [vmem:[%s4452 + $0x28] sm:$0xff]
        %v4459 = vld [vmem:[%s4452 + $0x30] sm:$0xff]
        %v4460 = vld [vmem:[%s4452 + $0x38] sm:$0xff]
        %v4461 = vld [vmem:[%s4452 + $0x40] sm:$0xff]
        %v4462 = vld [vmem:[%s4452 + $0x48] sm:$0xff]
        %v4463 = vld [vmem:[%s4452 + $0x50] sm:$0xff]
        %v4464 = vld [vmem:[%s4452 + $0x58] sm:$0xff]
        %v4465 = vld [vmem:[%s4452 + $0x60] sm:$0xff]
        %v4466 = vld [vmem:[%s4452 + $0x68] sm:$0xff]
        %v4467 = vld [vmem:[%s4452 + $0x70] sm:$0xff]
        %v4468 = vld [vmem:[%s4452 + $0x78] sm:$0xff]
        %4469 = vmatprep.subr.mxu0 0.0
        %4470 = vmatpush1.msra.mxu0 %v4453
        %4471 = vmatprep.subr.mxu0 0.0
        %4472 = vmatpush1.msra.mxu0 %v4454
        %4473 = vmatprep.subr.mxu0 0.0
        %4474 = vmatpush1.msra.mxu0 %v4455
        %4475 = vmatprep.subr.mxu0 0.0
        %4476 = vmatpush1.msra.mxu0 %v4456
        %4477 = vmatprep.subr.mxu0 0.0
        %4478 = vmatpush1.msra.mxu0 %v4457
        %4479 = vmatprep.subr.mxu0 0.0
        %4480 = vmatpush1.msra.mxu0 %v4458
        %4481 = vmatprep.subr.mxu0 0.0
        %4482 = vmatpush1.msra.mxu0 %v4459
        %4483 = vmatprep.subr.mxu0 0.0
        %4484 = vmatpush1.msra.mxu0 %v4460
        %4485 = vmatprep.subr.mxu0 0.0
        %4486 = vmatpush1.msra.mxu0 %v4461
        %4487 = vmatprep.subr.mxu0 0.0
        %4488 = vmatpush1.msra.mxu0 %v4462
        %4489 = vmatprep.subr.mxu0 0.0
        %4490 = vmatpush1.msra.mxu0 %v4463
        %4491 = vmatprep.subr.mxu0 0.0
        %4492 = vmatpush1.msra.mxu0 %v4464
        %4493 = vmatprep.subr.mxu0 0.0
        %4494 = vmatpush1.msra.mxu0 %v4465
        %4495 = vmatprep.subr.mxu0 0.0
        %4496 = vmatpush1.msra.mxu0 %v4466
        %4497 = vmatprep.subr.mxu0 0.0
        %4498 = vmatpush1.msra.mxu0 %v4467
        %4499 = vmatprep.subr.mxu0 0.0
        %4500 = vmatpush1.msra.mxu0 %v4468
        %4501 = vmatprep.subr.mxu0 0.0
        %4502 = vmatpush1.msra.mxu0 0.0
        %4503 = vmatprep.subr.mxu0 0.0
        %4504 = vmatpush1.msra.mxu0 0.0
        %4505 = vmatprep.subr.mxu0 0.0
        %4506 = vmatpush1.msra.mxu0 0.0
        %4507 = vmatprep.subr.mxu0 0.0
        %4508 = vmatpush1.msra.mxu0 0.0
        %4509 = vmatprep.subr.mxu0 0.0
        %4510 = vmatpush1.msra.mxu0 0.0
        %4511 = vmatprep.subr.mxu0 0.0
        %4512 = vmatpush1.msra.mxu0 0.0
        %4513 = vmatprep.subr.mxu0 0.0
        %4514 = vmatpush1.msra.mxu0 0.0
        %4515 = vmatprep.subr.mxu0 0.0
        %4516 = vmatpush1.msra.mxu0 0.0
        %4517 = vmatprep.subr.mxu0 0.0
        %4518 = vmatpush1.msra.mxu0 0.0
        %4519 = vmatprep.subr.mxu0 0.0
        %4520 = vmatpush1.msra.mxu0 0.0
        %4521 = vmatprep.subr.mxu0 0.0
        %4522 = vmatpush1.msra.mxu0 0.0
        %4523 = vmatprep.subr.mxu0 0.0
        %4524 = vmatpush1.msra.mxu0 0.0
        %4525 = vmatprep.subr.mxu0 0.0
        %4526 = vmatpush1.msra.mxu0 0.0
        %4527 = vmatprep.subr.mxu0 0.0
        %4528 = vmatpush1.msra.mxu0 0.0
        %4529 = vmatprep.subr.mxu0 0.0
        %4530 = vmatpush1.msra.mxu0 0.0
        %4531 = vmatprep.subr.mxu0 0.0
        %4532 = vmatpush1.msra.mxu0 0.0
        %4533 = vmatprep.mubr.f32.mxu0 0.0
        %4534 = vmatmul.mubr.f32.gmra.mrb[0].mxu0 %v4414
        %v4535 = vpop.f32.mrb[0].mxu0
        %v4536 = vadd.f32 0.0, %v4535
        %v4537 = vpop.f32.mrb[0].mxu0
        %4538 = vmatprep.mubr.f32.mxu0 0.0
        %4539 = vmatmul.mubr.f32.gmra.mrb[0].mxu0 %v4419
        %v4540 = vpop.f32.mrb[0].mxu0
        %v4541 = vadd.f32 0.0, %v4540
        %v4542 = vpop.f32.mrb[0].mxu0
        %4543 = vmatprep.mubr.f32.mxu0 0.0
        %4544 = vmatmul.mubr.f32.gmra.mrb[0].mxu0 %v4424
        %v4545 = vpop.f32.mrb[0].mxu0
        %v4546 = vadd.f32 0.0, %v4545
        %v4547 = vpop.f32.mrb[0].mxu0
        %4548 = vmatprep.mubr.f32.mxu0 0.0
        %4549 = vmatmul.mubr.f32.gmra.mrb[0].mxu0 %v4429
        %v4550 = vpop.f32.mrb[0].mxu0
        %v4551 = vadd.f32 0.0, %v4550
        %v4552 = vpop.f32.mrb[0].mxu0
        %4553 = vmatprep.mubr.f32.mxu0 0.0
        %4554 = vmatmul.mubr.f32.gmra.mrb[0].mxu0 %v4434
        %v4555 = vpop.f32.mrb[0].mxu0
        %v4556 = vadd.f32 0.0, %v4555
        %v4557 = vpop.f32.mrb[0].mxu0
        %4558 = vmatprep.mubr.f32.mxu0 0.0
        %4559 = vmatmul.mubr.f32.gmra.mrb[0].mxu0 %v4439
        %v4560 = vpop.f32.mrb[0].mxu0
        %v4561 = vadd.f32 0.0, %v4560
        %v4562 = vpop.f32.mrb[0].mxu0
        %4563 = vmatprep.mubr.f32.mxu0 0.0
        %4564 = vmatmul.mubr.f32.gmra.mrb[0].mxu0 %v4444
        %v4565 = vpop.f32.mrb[0].mxu0
        %v4566 = vadd.f32 0.0, %v4565
        %v4567 = vpop.f32.mrb[0].mxu0
        %4568 = vmatprep.mubr.f32.mxu0 0.0
        %4569 = vmatmul.mubr.f32.gmra.mrb[0].mxu0 %v4449
        %v4570 = vpop.f32.mrb[0].mxu0
        %v4571 = vadd.f32 0.0, %v4570
        %v4572 = vpop.f32.mrb[0].mxu0
        %4573 = vdwg.mxu0
        %v4574 = vadd.f32 %v4339, %v4536
        %v4575 = vadd.f32 %v4340, %v4541
        %v4576 = vadd.f32 %v4341, %v4546
        %v4577 = vadd.f32 %v4342, %v4551
        %v4578 = vadd.f32 %v4343, %v4556
        %v4579 = vadd.f32 %v4344, %v4561
        %v4580 = vadd.f32 %v4345, %v4566
        %v4581 = vadd.f32 %v4346, %v4571
        %4582 = vmatprep.subr.mxu0 0.0
        %4583 = vmatpush1.msra.mxu0 %v2816
        %4584 = vmatprep.subr.mxu0 0.0
        %4585 = vmatpush1.msra.mxu0 %v2817
        %4586 = vmatprep.subr.mxu0 0.0
        %4587 = vmatpush1.msra.mxu0 %v2818
        %4588 = vmatprep.subr.mxu0 0.0
        %4589 = vmatpush1.msra.mxu0 %v2819
        %4590 = vmatprep.subr.mxu0 0.0
        %4591 = vmatpush1.msra.mxu0 %v2820
        %4592 = vmatprep.subr.mxu0 0.0
        %4593 = vmatpush1.msra.mxu0 %v2821
        %4594 = vmatprep.subr.mxu0 0.0
        %4595 = vmatpush1.msra.mxu0 %v2822
        %4596 = vmatprep.subr.mxu0 0.0
        %4597 = vmatpush1.msra.mxu0 %v2823
        %4598 = vmatprep.subr.mxu0 0.0
        %4599 = vmatpush1.msra.mxu0 0.0
        %4600 = vmatprep.subr.mxu0 0.0
        %4601 = vmatpush1.msra.mxu0 0.0
        %4602 = vmatprep.subr.mxu0 0.0
        %4603 = vmatpush1.msra.mxu0 0.0
        %4604 = vmatprep.subr.mxu0 0.0
        %4605 = vmatpush1.msra.mxu0 0.0
        %4606 = vmatprep.subr.mxu0 0.0
        %4607 = vmatpush1.msra.mxu0 0.0
        %4608 = vmatprep.subr.mxu0 0.0
        %4609 = vmatpush1.msra.mxu0 0.0
        %4610 = vmatprep.subr.mxu0 0.0
        %4611 = vmatpush1.msra.mxu0 0.0
        %4612 = vmatprep.subr.mxu0 0.0
        %4613 = vmatpush1.msra.mxu0 0.0
        %4614 = vmatprep.subr.mxu0 0.0
        %4615 = vmatpush1.msra.mxu0 0.0
        %4616 = vmatprep.subr.mxu0 0.0
        %4617 = vmatpush1.msra.mxu0 0.0
        %4618 = vmatprep.subr.mxu0 0.0
        %4619 = vmatpush1.msra.mxu0 0.0
        %4620 = vmatprep.subr.mxu0 0.0
        %4621 = vmatpush1.msra.mxu0 0.0
        %4622 = vmatprep.subr.mxu0 0.0
        %4623 = vmatpush1.msra.mxu0 0.0
        %4624 = vmatprep.subr.mxu0 0.0
        %4625 = vmatpush1.msra.mxu0 0.0
        %4626 = vmatprep.subr.mxu0 0.0
        %4627 = vmatpush1.msra.mxu0 0.0
        %4628 = vmatprep.subr.mxu0 0.0
        %4629 = vmatpush1.msra.mxu0 0.0
        %4630 = vmatprep.subr.mxu0 0.0
        %4631 = vmatpush1.msra.mxu0 0.0
        %4632 = vmatprep.subr.mxu0 0.0
        %4633 = vmatpush1.msra.mxu0 0.0
        %4634 = vmatprep.subr.mxu0 0.0
        %4635 = vmatpush1.msra.mxu0 0.0
        %4636 = vmatprep.subr.mxu0 0.0
        %4637 = vmatpush1.msra.mxu0 0.0
        %4638 = vmatprep.subr.mxu0 0.0
        %4639 = vmatpush1.msra.mxu0 0.0
        %4640 = vmatprep.subr.mxu0 0.0
        %4641 = vmatpush1.msra.mxu0 0.0
        %4642 = vmatprep.subr.mxu0 0.0
        %4643 = vmatpush1.msra.mxu0 0.0
        %4644 = vmatprep.subr.mxu0 0.0
        %4645 = vmatpush1.msra.mxu0 0.0
        %4646 = vmatprep.mubr.f32.mxu0 0.0
        %4647 = vmatmul.mubr.f32.gmra.mrb[0].mxu0 %v2526
        %v4648 = vpop.f32.mrb[0].mxu0
        %v4649 = vadd.f32 0.0, %v4648
        %v4650 = vpop.f32.mrb[0].mxu0
        %4651 = vmatprep.mubr.f32.mxu0 0.0
        %4652 = vmatmul.mubr.f32.gmra.mrb[0].mxu0 %v2529
        %v4653 = vpop.f32.mrb[0].mxu0
        %v4654 = vadd.f32 0.0, %v4653
        %v4655 = vpop.f32.mrb[0].mxu0
        %4656 = vmatprep.mubr.f32.mxu0 0.0
        %4657 = vmatmul.mubr.f32.gmra.mrb[0].mxu0 %v2532
        %v4658 = vpop.f32.mrb[0].mxu0
        %v4659 = vadd.f32 0.0, %v4658
        %v4660 = vpop.f32.mrb[0].mxu0
        %4661 = vmatprep.mubr.f32.mxu0 0.0
        %4662 = vmatmul.mubr.f32.gmra.mrb[0].mxu0 %v2535
        %v4663 = vpop.f32.mrb[0].mxu0
        %v4664 = vadd.f32 0.0, %v4663
        %v4665 = vpop.f32.mrb[0].mxu0
        %4666 = vmatprep.mubr.f32.mxu0 0.0
        %4667 = vmatmul.mubr.f32.gmra.mrb[0].mxu0 %v2538
        %v4668 = vpop.f32.mrb[0].mxu0
        %v4669 = vadd.f32 0.0, %v4668
        %v4670 = vpop.f32.mrb[0].mxu0
        %4671 = vmatprep.mubr.f32.mxu0 0.0
        %4672 = vmatmul.mubr.f32.gmra.mrb[0].mxu0 %v2541
        %v4673 = vpop.f32.mrb[0].mxu0
        %v4674 = vadd.f32 0.0, %v4673
        %v4675 = vpop.f32.mrb[0].mxu0
        %4676 = vmatprep.mubr.f32.mxu0 0.0
        %4677 = vmatmul.mubr.f32.gmra.mrb[0].mxu0 %v2544
        %v4678 = vpop.f32.mrb[0].mxu0
        %v4679 = vadd.f32 0.0, %v4678
        %v4680 = vpop.f32.mrb[0].mxu0
        %4681 = vmatprep.mubr.f32.mxu0 0.0
        %4682 = vmatmul.mubr.f32.gmra.mrb[0].mxu0 %v2547
        %v4683 = vpop.f32.mrb[0].mxu0
        %v4684 = vadd.f32 0.0, %v4683
        %v4685 = vpop.f32.mrb[0].mxu0
        %4686 = vdwg.mxu0
        %s4687 = scalar_lea.vmem [#allocation10], 1024
        %v4688 = vld [vmem:[%s4687] sm:$0xff]
        %v4689 = vld [vmem:[%s4687 + $0x8] sm:$0xff]
        %v4690 = vld [vmem:[%s4687 + $0x10] sm:$0xff]
        %v4691 = vld [vmem:[%s4687 + $0x18] sm:$0xff]
        %v4692 = vld [vmem:[%s4687 + $0x20] sm:$0xff]
        %v4693 = vld [vmem:[%s4687 + $0x28] sm:$0xff]
        %v4694 = vld [vmem:[%s4687 + $0x30] sm:$0xff]
        %v4695 = vld [vmem:[%s4687 + $0x38] sm:$0xff]
        %v4696 = vld [vmem:[%s4687 + $0x40] sm:$0xff]
        %v4697 = vld [vmem:[%s4687 + $0x48] sm:$0xff]
        %v4698 = vld [vmem:[%s4687 + $0x50] sm:$0xff]
        %v4699 = vld [vmem:[%s4687 + $0x58] sm:$0xff]
        %v4700 = vld [vmem:[%s4687 + $0x60] sm:$0xff]
        %v4701 = vld [vmem:[%s4687 + $0x68] sm:$0xff]
        %v4702 = vld [vmem:[%s4687 + $0x70] sm:$0xff]
        %v4703 = vld [vmem:[%s4687 + $0x78] sm:$0xff]
        %4704 = vmatprep.subr.mxu0 0.0
        %4705 = vmatpush1.msra.mxu0 %v4688
        %4706 = vmatprep.subr.mxu0 0.0
        %4707 = vmatpush1.msra.mxu0 %v4689
        %4708 = vmatprep.subr.mxu0 0.0
        %4709 = vmatpush1.msra.mxu0 %v4690
        %4710 = vmatprep.subr.mxu0 0.0
        %4711 = vmatpush1.msra.mxu0 %v4691
        %4712 = vmatprep.subr.mxu0 0.0
        %4713 = vmatpush1.msra.mxu0 %v4692
        %4714 = vmatprep.subr.mxu0 0.0
        %4715 = vmatpush1.msra.mxu0 %v4693
        %4716 = vmatprep.subr.mxu0 0.0
        %4717 = vmatpush1.msra.mxu0 %v4694
        %4718 = vmatprep.subr.mxu0 0.0
        %4719 = vmatpush1.msra.mxu0 %v4695
        %4720 = vmatprep.subr.mxu0 0.0
        %4721 = vmatpush1.msra.mxu0 %v4696
        %4722 = vmatprep.subr.mxu0 0.0
        %4723 = vmatpush1.msra.mxu0 %v4697
        %4724 = vmatprep.subr.mxu0 0.0
        %4725 = vmatpush1.msra.mxu0 %v4698
        %4726 = vmatprep.subr.mxu0 0.0
        %4727 = vmatpush1.msra.mxu0 %v4699
        %4728 = vmatprep.subr.mxu0 0.0
        %4729 = vmatpush1.msra.mxu0 %v4700
        %4730 = vmatprep.subr.mxu0 0.0
        %4731 = vmatpush1.msra.mxu0 %v4701
        %4732 = vmatprep.subr.mxu0 0.0
        %4733 = vmatpush1.msra.mxu0 %v4702
        %4734 = vmatprep.subr.mxu0 0.0
        %4735 = vmatpush1.msra.mxu0 %v4703
        %4736 = vmatprep.subr.mxu0 0.0
        %4737 = vmatpush1.msra.mxu0 0.0
        %4738 = vmatprep.subr.mxu0 0.0
        %4739 = vmatpush1.msra.mxu0 0.0
        %4740 = vmatprep.subr.mxu0 0.0
        %4741 = vmatpush1.msra.mxu0 0.0
        %4742 = vmatprep.subr.mxu0 0.0
        %4743 = vmatpush1.msra.mxu0 0.0
        %4744 = vmatprep.subr.mxu0 0.0
        %4745 = vmatpush1.msra.mxu0 0.0
        %4746 = vmatprep.subr.mxu0 0.0
        %4747 = vmatpush1.msra.mxu0 0.0
        %4748 = vmatprep.subr.mxu0 0.0
        %4749 = vmatpush1.msra.mxu0 0.0
        %4750 = vmatprep.subr.mxu0 0.0
        %4751 = vmatpush1.msra.mxu0 0.0
        %4752 = vmatprep.subr.mxu0 0.0
        %4753 = vmatpush1.msra.mxu0 0.0
        %4754 = vmatprep.subr.mxu0 0.0
        %4755 = vmatpush1.msra.mxu0 0.0
        %4756 = vmatprep.subr.mxu0 0.0
        %4757 = vmatpush1.msra.mxu0 0.0
        %4758 = vmatprep.subr.mxu0 0.0
        %4759 = vmatpush1.msra.mxu0 0.0
        %4760 = vmatprep.subr.mxu0 0.0
        %4761 = vmatpush1.msra.mxu0 0.0
        %4762 = vmatprep.subr.mxu0 0.0
        %4763 = vmatpush1.msra.mxu0 0.0
        %4764 = vmatprep.subr.mxu0 0.0
        %4765 = vmatpush1.msra.mxu0 0.0
        %4766 = vmatprep.subr.mxu0 0.0
        %4767 = vmatpush1.msra.mxu0 0.0
        %4768 = vmatprep.mubr.f32.mxu0 0.0
        %4769 = vmatmul.mubr.f32.gmra.mrb[0].mxu0 %v4649
        %v4770 = vpop.f32.mrb[0].mxu0
        %v4771 = vadd.f32 0.0, %v4770
        %v4772 = vpop.f32.mrb[0].mxu0
        %4773 = vmatprep.mubr.f32.mxu0 0.0
        %4774 = vmatmul.mubr.f32.gmra.mrb[0].mxu0 %v4654
        %v4775 = vpop.f32.mrb[0].mxu0
        %v4776 = vadd.f32 0.0, %v4775
        %v4777 = vpop.f32.mrb[0].mxu0
        %4778 = vmatprep.mubr.f32.mxu0 0.0
        %4779 = vmatmul.mubr.f32.gmra.mrb[0].mxu0 %v4659
        %v4780 = vpop.f32.mrb[0].mxu0
        %v4781 = vadd.f32 0.0, %v4780
        %v4782 = vpop.f32.mrb[0].mxu0
        %4783 = vmatprep.mubr.f32.mxu0 0.0
        %4784 = vmatmul.mubr.f32.gmra.mrb[0].mxu0 %v4664
        %v4785 = vpop.f32.mrb[0].mxu0
        %v4786 = vadd.f32 0.0, %v4785
        %v4787 = vpop.f32.mrb[0].mxu0
        %4788 = vmatprep.mubr.f32.mxu0 0.0
        %4789 = vmatmul.mubr.f32.gmra.mrb[0].mxu0 %v4669
        %v4790 = vpop.f32.mrb[0].mxu0
        %v4791 = vadd.f32 0.0, %v4790
        %v4792 = vpop.f32.mrb[0].mxu0
        %4793 = vmatprep.mubr.f32.mxu0 0.0
        %4794 = vmatmul.mubr.f32.gmra.mrb[0].mxu0 %v4674
        %v4795 = vpop.f32.mrb[0].mxu0
        %v4796 = vadd.f32 0.0, %v4795
        %v4797 = vpop.f32.mrb[0].mxu0
        %4798 = vmatprep.mubr.f32.mxu0 0.0
        %4799 = vmatmul.mubr.f32.gmra.mrb[0].mxu0 %v4679
        %v4800 = vpop.f32.mrb[0].mxu0
        %v4801 = vadd.f32 0.0, %v4800
        %v4802 = vpop.f32.mrb[0].mxu0
        %4803 = vmatprep.mubr.f32.mxu0 0.0
        %4804 = vmatmul.mubr.f32.gmra.mrb[0].mxu0 %v4684
        %v4805 = vpop.f32.mrb[0].mxu0
        %v4806 = vadd.f32 0.0, %v4805
        %v4807 = vpop.f32.mrb[0].mxu0
        %4808 = vdwg.mxu0
        %v4809 = vadd.f32 %v4574, %v4771
        %v4810 = vadd.f32 %v4575, %v4776
        %v4811 = vadd.f32 %v4576, %v4781
        %v4812 = vadd.f32 %v4577, %v4786
        %v4813 = vadd.f32 %v4578, %v4791
        %v4814 = vadd.f32 %v4579, %v4796
        %v4815 = vadd.f32 %v4580, %v4801
        %v4816 = vadd.f32 %v4581, %v4806
        %v4817 = vld [vmem:[#allocation11] sm:$0x1]
        %v4819 = vlaneseq
        %v4820 = vshrl.u32 %v4819, 7
        %v4821 = vsub.s32 0, %v4820
        %v4822 = vrot.slane %v4817, %v4821
        %v4824 = vsub.f32 %v4809, %v4822
        %v4825 = vsub.f32 %v4810, %v4822
        %v4826 = vsub.f32 %v4811, %v4822
        %v4827 = vsub.f32 %v4812, %v4822
        %v4828 = vsub.f32 %v4813, %v4822
        %v4829 = vsub.f32 %v4814, %v4822
        %v4830 = vsub.f32 %v4815, %v4822
        %v4831 = vsub.f32 %v4816, %v4822
        %v4832 = vld [vmem:[#allocation13] sm:$0x1]
        %v4833 = vadd.f32 %v4832, 1e-05
        %v4834 = vrsqrt.pop %v4833
        %v4836 = vlaneseq
        %v4837 = vshrl.u32 %v4836, 7
        %v4838 = vsub.s32 0, %v4837
        %v4839 = vrot.slane %v4834, %v4838
        %v4841 = vmul.f32 %v4824, %v4839
        %v4842 = vmul.f32 %v4825, %v4839
        %v4843 = vmul.f32 %v4826, %v4839
        %v4844 = vmul.f32 %v4827, %v4839
        %v4845 = vmul.f32 %v4828, %v4839
        %v4846 = vmul.f32 %v4829, %v4839
        %v4847 = vmul.f32 %v4830, %v4839
        %v4848 = vmul.f32 %v4831, %v4839
        %v4849 = vadd.f32 %v4841, %v4842
        %v4850 = vadd.f32 %v4849, %v4843
        %v4851 = vadd.f32 %v4850, %v4844
        %v4852 = vadd.f32 %v4851, %v4845
        %v4853 = vadd.f32 %v4852, %v4846
        %v4854 = vadd.f32 %v4853, %v4847
        %v4855 = vadd.f32 %v4854, %v4848
        %v4856 = vrot.slane %v4855, 4
        %v4857 = vadd.f32 %v4855, %v4856
        %v4858 = vrot.slane %v4857, 2
        %v4859 = vadd.f32 %v4857, %v4858
        %v4860 = vrot.slane %v4859, 1
        %v4861 = vadd.f32 %v4859, %v4860
        %v4862 = vrcp.pop 64.0
        %v4863 = vmul.f32 %v4861, %v4862
        %v4864 = vld [vmem:[%s8] sm:$0xff]
        %v4865 = vld [vmem:[%s8 + $0x8] sm:$0xff]
        %v4866 = vld [vmem:[%s8 + $0x10] sm:$0xff]
        %v4867 = vld [vmem:[%s8 + $0x18] sm:$0xff]
        %v4868 = vld [vmem:[%s8 + $0x20] sm:$0xff]
        %v4869 = vld [vmem:[%s8 + $0x28] sm:$0xff]
        %v4870 = vld [vmem:[%s8 + $0x30] sm:$0xff]
        %v4871 = vld [vmem:[%s8 + $0x38] sm:$0xff]
        %v4872 = vld [vmem:[%s8 + $0x40] sm:$0xff]
        %v4873 = vld [vmem:[%s8 + $0x48] sm:$0xff]
        %v4874 = vld [vmem:[%s8 + $0x50] sm:$0xff]
        %v4875 = vld [vmem:[%s8 + $0x58] sm:$0xff]
        %v4876 = vld [vmem:[%s8 + $0x60] sm:$0xff]
        %v4877 = vld [vmem:[%s8 + $0x68] sm:$0xff]
        %v4878 = vld [vmem:[%s8 + $0x70] sm:$0xff]
        %v4879 = vld [vmem:[%s8 + $0x78] sm:$0xff]
        %v4880 = vld [vmem:[#allocation14] sm:$0x1]
        %4881 = vmatprep.subr.mxu0 0.0
        %4882 = vmatpush1.msra.mxu0 %v4864
        %4883 = vmatprep.subr.mxu0 0.0
        %4884 = vmatpush1.msra.mxu0 %v4865
        %4885 = vmatprep.subr.mxu0 0.0
        %4886 = vmatpush1.msra.mxu0 %v4866
        %4887 = vmatprep.subr.mxu0 0.0
        %4888 = vmatpush1.msra.mxu0 %v4867
        %4889 = vmatprep.subr.mxu0 0.0
        %4890 = vmatpush1.msra.mxu0 %v4868
        %4891 = vmatprep.subr.mxu0 0.0
        %4892 = vmatpush1.msra.mxu0 %v4869
        %4893 = vmatprep.subr.mxu0 0.0
        %4894 = vmatpush1.msra.mxu0 %v4870
        %4895 = vmatprep.subr.mxu0 0.0
        %4896 = vmatpush1.msra.mxu0 %v4871
        %4897 = vmatprep.subr.mxu0 0.0
        %4898 = vmatpush1.msra.mxu0 %v4872
        %4899 = vmatprep.subr.mxu0 0.0
        %4900 = vmatpush1.msra.mxu0 %v4873
        %4901 = vmatprep.subr.mxu0 0.0
        %4902 = vmatpush1.msra.mxu0 %v4874
        %4903 = vmatprep.subr.mxu0 0.0
        %4904 = vmatpush1.msra.mxu0 %v4875
        %4905 = vmatprep.subr.mxu0 0.0
        %4906 = vmatpush1.msra.mxu0 %v4876
        %4907 = vmatprep.subr.mxu0 0.0
        %4908 = vmatpush1.msra.mxu0 %v4877
        %4909 = vmatprep.subr.mxu0 0.0
        %4910 = vmatpush1.msra.mxu0 %v4878
        %4911 = vmatprep.subr.mxu0 0.0
        %4912 = vmatpush1.msra.mxu0 %v4879
        %4913 = vmatprep.subr.mxu0 0.0
        %4914 = vmatpush1.msra.mxu0 0.0
        %4915 = vmatprep.subr.mxu0 0.0
        %4916 = vmatpush1.msra.mxu0 0.0
        %4917 = vmatprep.subr.mxu0 0.0
        %4918 = vmatpush1.msra.mxu0 0.0
        %4919 = vmatprep.subr.mxu0 0.0
        %4920 = vmatpush1.msra.mxu0 0.0
        %4921 = vmatprep.subr.mxu0 0.0
        %4922 = vmatpush1.msra.mxu0 0.0
        %4923 = vmatprep.subr.mxu0 0.0
        %4924 = vmatpush1.msra.mxu0 0.0
        %4925 = vmatprep.subr.mxu0 0.0
        %4926 = vmatpush1.msra.mxu0 0.0
        %4927 = vmatprep.subr.mxu0 0.0
        %4928 = vmatpush1.msra.mxu0 0.0
        %4929 = vmatprep.subr.mxu0 0.0
        %4930 = vmatpush1.msra.mxu0 0.0
        %4931 = vmatprep.subr.mxu0 0.0
        %4932 = vmatpush1.msra.mxu0 0.0
        %4933 = vmatprep.subr.mxu0 0.0
        %4934 = vmatpush1.msra.mxu0 0.0
        %4935 = vmatprep.subr.mxu0 0.0
        %4936 = vmatpush1.msra.mxu0 0.0
        %4937 = vmatprep.subr.mxu0 0.0
        %4938 = vmatpush1.msra.mxu0 0.0
        %4939 = vmatprep.subr.mxu0 0.0
        %4940 = vmatpush1.msra.mxu0 0.0
        %4941 = vmatprep.subr.mxu0 0.0
        %4942 = vmatpush1.msra.mxu0 0.0
        %4943 = vmatprep.subr.mxu0 0.0
        %4944 = vmatpush1.msra.mxu0 0.0
        %4945 = vmatprep.mubr.f32.mxu0 0.0
        %4946 = vmatmul.mubr.f32.gmra.mrb[0].mxu0 %v4863
        %v4947 = vpop.f32.mrb[0].mxu0
        %v4948 = vadd.f32 %v4880, %v4947
        %v4949 = vpop.f32.mrb[0].mxu0
        %4950 = vdwg.mxu0
        %v4951 = vmax.f32 %v4948, 0.0
        %v4952 = vld [vmem:[%s10] sm:$0xff]
        %v4953 = vld [vmem:[%s10 + $0x8] sm:$0xff]
        %v4954 = vld [vmem:[%s10 + $0x10] sm:$0xff]
        %v4955 = vld [vmem:[%s10 + $0x18] sm:$0xff]
        %v4956 = vld [vmem:[%s10 + $0x20] sm:$0xff]
        %v4957 = vld [vmem:[%s10 + $0x28] sm:$0xff]
        %v4958 = vld [vmem:[%s10 + $0x30] sm:$0xff]
        %v4959 = vld [vmem:[%s10 + $0x38] sm:$0xff]
        %v4960 = vld [vmem:[%s11] sm:$0x3]
        %v4962 = vlaneseq
        %v4963 = vshrl.u32 %v4962, 7
        %v4964 = vsub.s32 0, %v4963
        %v4965 = vrot.slane %v4960, %v4964
        %v4966 = vlaneseq
        %v4967 = vshrl.u32 %v4966, 7
        %v4968 = vsub.s32 1, %v4967
        %v4969 = vrot.slane %v4960, %v4968
        %vm4972 = vcmask 261120
        %v4974 = vsel %vm4972, %v4951, 0
        %4976 = vmatprep.subr.mxu0 %v4953
        %4977 = vmatpush1.msra.mxu0 %v4952
        %4978 = vmatprep.subr.mxu0 %v4955
        %4979 = vmatpush1.msra.mxu0 %v4954
        %4980 = vmatprep.subr.mxu0 %v4957
        %4981 = vmatpush1.msra.mxu0 %v4956
        %4982 = vmatprep.subr.mxu0 %v4959
        %4983 = vmatpush1.msra.mxu0 %v4958
        %4984 = vmatprep.subr.mxu0 0.0
        %4985 = vmatpush1.msra.mxu0 0.0
        %4986 = vmatprep.subr.mxu0 0.0
        %4987 = vmatpush1.msra.mxu0 0.0
        %4988 = vmatprep.subr.mxu0 0.0
        %4989 = vmatpush1.msra.mxu0 0.0
        %4990 = vmatprep.subr.mxu0 0.0
        %4991 = vmatpush1.msra.mxu0 0.0
        %4992 = vmatprep.subr.mxu0 0.0
        %4993 = vmatpush1.msra.mxu0 0.0
        %4994 = vmatprep.subr.mxu0 0.0
        %4995 = vmatpush1.msra.mxu0 0.0
        %4996 = vmatprep.subr.mxu0 0.0
        %4997 = vmatpush1.msra.mxu0 0.0
        %4998 = vmatprep.subr.mxu0 0.0
        %4999 = vmatpush1.msra.mxu0 0.0
        %5000 = vmatprep.subr.mxu0 0.0
        %5001 = vmatpush1.msra.mxu0 0.0
        %5002 = vmatprep.subr.mxu0 0.0
        %5003 = vmatpush1.msra.mxu0 0.0
        %5004 = vmatprep.subr.mxu0 0.0
        %5005 = vmatpush1.msra.mxu0 0.0
        %5006 = vmatprep.subr.mxu0 0.0
        %5007 = vmatpush1.msra.mxu0 0.0
        %5008 = vmatprep.subr.mxu0 0.0
        %5009 = vmatpush1.msra.mxu0 0.0
        %5010 = vmatprep.subr.mxu0 0.0
        %5011 = vmatpush1.msra.mxu0 0.0
        %5012 = vmatprep.subr.mxu0 0.0
        %5013 = vmatpush1.msra.mxu0 0.0
        %5014 = vmatprep.subr.mxu0 0.0
        %5015 = vmatpush1.msra.mxu0 0.0
        %5016 = vmatprep.subr.mxu0 0.0
        %5017 = vmatpush1.msra.mxu0 0.0
        %5018 = vmatprep.subr.mxu0 0.0
        %5019 = vmatpush1.msra.mxu0 0.0
        %5020 = vmatprep.subr.mxu0 0.0
        %5021 = vmatpush1.msra.mxu0 0.0
        %5022 = vmatprep.subr.mxu0 0.0
        %5023 = vmatpush1.msra.mxu0 0.0
        %5024 = vmatprep.subr.mxu0 0.0
        %5025 = vmatpush1.msra.mxu0 0.0
        %5026 = vmatprep.subr.mxu0 0.0
        %5027 = vmatpush1.msra.mxu0 0.0
        %5028 = vmatprep.subr.mxu0 0.0
        %5029 = vmatpush1.msra.mxu0 0.0
        %5030 = vmatprep.subr.mxu0 0.0
        %5031 = vmatpush1.msra.mxu0 0.0
        %5032 = vmatprep.subr.mxu0 0.0
        %5033 = vmatpush1.msra.mxu0 0.0
        %5034 = vmatprep.subr.mxu0 0.0
        %5035 = vmatpush1.msra.mxu0 0.0
        %5036 = vmatprep.subr.mxu0 0.0
        %5037 = vmatpush1.msra.mxu0 0.0
        %5038 = vmatprep.subr.mxu0 0.0
        %5039 = vmatpush1.msra.mxu0 0.0
        %5040 = vmatprep.mubr.f32.mxu0 0.0
        %5041 = vmatmul.mubr.f32.gmra.mrb[0].mxu0 %v4974
        %v5042 = vpop.f32.mrb[0].mxu0
        %v5043 = vadd.f32 %v4965, %v5042
        %v5044 = vpop.f32.mrb[0].mxu0
        %v5045 = vadd.f32 %v4969, %v5044
        %5046 = vdwg.mxu0
        %v5047 = vsub.f32 0.0, %v5043
        %v5048 = vmul.f32 %v5047, 1.442695
        %v5049 = vpow.pop %v5048
        %v5050 = vadd.f32 %v5049, 1.0
        %v5051 = vrcp.pop %v5050
        %v5052 = vmul.f32 1.0, %v5051
        %v5053 = vlaneseq
        %v5054 = vshrl.u32 %v5053, 7
        %v5055 = vsub.s32 0, %v5054
        %v5056 = vrot.slane %v5052, %v5055
        %v5057 = vmul.f32 %v5056, %v4841
        %v5058 = vmul.f32 %v5056, %v4842
        %v5059 = vmul.f32 %v5056, %v4843
        %v5060 = vmul.f32 %v5056, %v4844
        %v5061 = vmul.f32 %v5056, %v4845
        %v5062 = vmul.f32 %v5056, %v4846
        %v5063 = vmul.f32 %v5056, %v4847
        %v5064 = vmul.f32 %v5056, %v4848
        %v5065 = vlaneseq
        %v5066 = vshrl.u32 %v5065, 7
        %v5067 = vsub.s32 0, %v5066
        %v5068 = vrot.slane %v5045, %v5067
        %v5069 = vadd.f32 %v5057, %v5068
        %v5070 = vadd.f32 %v5058, %v5068
        %v5071 = vadd.f32 %v5059, %v5068
        %v5072 = vadd.f32 %v5060, %v5068
        %v5073 = vadd.f32 %v5061, %v5068
        %v5074 = vadd.f32 %v5062, %v5068
        %v5075 = vadd.f32 %v5063, %v5068
        %v5076 = vadd.f32 %v5064, %v5068
        %v5077 = vadd.f32 %v5069, %v519
        %v5078 = vadd.f32 %v5070, %v520
        %v5079 = vadd.f32 %v5071, %v521
        %v5080 = vadd.f32 %v5072, %v522
        %v5081 = vadd.f32 %v5073, %v523
        %v5082 = vadd.f32 %v5074, %v524
        %v5083 = vadd.f32 %v5075, %v525
        %v5084 = vadd.f32 %v5076, %v526
        %v5085 = vmax.f32 %v5077, 0.0
        %v5086 = vmax.f32 %v5078, 0.0
        %v5087 = vmax.f32 %v5079, 0.0
        %v5088 = vmax.f32 %v5080, 0.0
        %v5089 = vmax.f32 %v5081, 0.0
        %v5090 = vmax.f32 %v5082, 0.0
        %v5091 = vmax.f32 %v5083, 0.0
        %v5092 = vmax.f32 %v5084, 0.0
        %5093 = vst [vmem:[%s513] sm:$0xff] %v5085
        %5094 = vst [vmem:[%s513 + $0x8] sm:$0xff] %v5086
        %5095 = vst [vmem:[%s513 + $0x10] sm:$0xff] %v5087
        %5096 = vst [vmem:[%s513 + $0x18] sm:$0xff] %v5088
        %5097 = vst [vmem:[%s513 + $0x20] sm:$0xff] %v5089
        %5098 = vst [vmem:[%s513 + $0x28] sm:$0xff] %v5090
        %5099 = vst [vmem:[%s513 + $0x30] sm:$0xff] %v5091
        %5100 = vst [vmem:[%s513 + $0x38] sm:$0xff] %v5092
        %s5101 = sand.u32 %s296, 1
        %s5102 = scalar_lea.sflag [#allocation4], %s5101
        %s5103 = sand.u32 %s296, 1
        %s5104 = smul.addr %s5103, 64
        %s5105 = scalar_lea.vmem [#allocation16], %s5104
        // Predicated region
        $region101: #{tpu_custom_call.1} parent=67 // pred_check
          %p5106 = pneg %p306
        $region102: #{tpu_custom_call.1} parent=67 // pred_check_branch
          %5108 = sbr.rel (%p5106) target = $region104
        $region103: #{tpu_custom_call.1} parent=67 // pred_region
          %s5110 = ssub.s32 1024, 1024
          %5111 = vsyncadd %s5102, %s5110
          %s5112 = smul.addr %s31, 8
          %s5113 = smul.addr %s5112, 128
          %s5114 = scalar_lea.hbm %s12, %s5113
          %s5115 = sshll.u32 %s5105, 4
          %s5116 = int_to_ptr.vmem [resolvable:$true] %s5115
          %5121 = dma.vmem_to_hbm [thread:$0]  %s5116, 1024, %s5114, %s5102, 128, 128, 8
        $region104: #{tpu_custom_call.1} parent=67 // pred_fallthru
          _
      $region68: #{tpu_custom_call.1} parent=5 // pred_fallthru
        _
      %p5122 = scmp.le.s32.totalorder 2, %s26
      // Predicated region
      $region105: #{tpu_custom_call.1} parent=5 // pred_check
        %p5123 = pneg %p5122
      $region106: #{tpu_custom_call.1} parent=5 // pred_check_branch
        %5125 = sbr.rel (%p5123) target = $region108
      $region107: #{tpu_custom_call.1} parent=5 // pred_region
        %s5126 = ssub.s32 %s26, 2
        // Predicated region
        $region109: #{tpu_custom_call.1} parent=107 // pred_check
          %p5127 = pneg %p312
        $region110: #{tpu_custom_call.1} parent=107 // pred_check_branch
          %5129 = sbr.rel (%p5127) target = $region112
        $region111: #{tpu_custom_call.1} parent=107 // pred_region
          %s5130 = sand.u32 %s297, 1
          %s5131 = scalar_lea.sflag [#allocation4], %s5130
          %s5132 = sand.u32 %s297, 1
          %s5133 = smul.addr %s5132, 64
          %s5134 = scalar_lea.vmem [#allocation16], %s5133
          %5135 = dma.done %s5131, 1024
        $region112: #{tpu_custom_call.1} parent=107 // pred_fallthru
          _
      $region108: #{tpu_custom_call.1} parent=5 // pred_fallthru
        _
    $region6: #{tpu_custom_call.1} parent=1 // loop_footer
      %s30 = sadd.s32 1, %s26
    $region7: #{tpu_custom_call.1} parent=1 // loop_footer_branch
      %25 = sbr.rel target = $region3
    $region8: #{tpu_custom_call.1} parent=1 // loop_exit
      _
    %5136 = vsyncpa [#allocation3], 1
    %s5137 = scalar_lea.sflag [#allocation3], 1
    %5138 = vsyncpa %s5137, 1
    %5139 = vsyncpa [#allocation6], 1
    %5140 = vsyncpa [#allocation9], 1
    %5141 = vsyncpa [#allocation12], 1
    %5142 = vsyncpa [#allocation15], 1
    %5143 = vsyncpa [#allocation4], 1
    %s5144 = scalar_lea.sflag [#allocation4], 1
    %5145 = vsyncpa %s5144, 1

</llo_original>
